<compile_context>
chip_gen: v7x
topology: tpu7x:2x2x1
jax: 0.10.0
libtpu: 0.0.40
codegen_flags: <defaults>
</compile_context>

<pallas_src>
import math
import functools

import jax
import jax.numpy as jnp
from jax import lax
from jax.experimental import pallas as pl
from jax.experimental.pallas import tpu as pltpu


# --------------------------------------------------------------------------------------
# Fused forward kernel
# --------------------------------------------------------------------------------------

def _layer_norm(z, g, b, eps=1e-6):
    mu = jnp.mean(z, axis=-1, keepdims=True)
    var = jnp.mean((z - mu) ** 2, axis=-1, keepdims=True)
    return (z - mu) * lax.rsqrt(var + eps) * g + b


def _fused_mca_kernel(x_ref, mask_ref,
                      ln1g_ref, ln1b_ref,
                      qcw_ref, qcb_ref, qpw_ref, qpb_ref,
                      kcw_ref, kcb_ref, kpw_ref, kpb_ref,
                      vcw_ref, vcb_ref, vpw_ref, vpb_ref,
                      ln2g_ref, ln2b_ref,
                      w1_ref, b1_ref, w2_ref, b2_ref,
                      o_ref, *, kernels, num_heads):
    B, T, D = x_ref.shape
    hs = D // num_heads

    x = x_ref[...].astype(jnp.float32)                       # (B, T, D)
    x2 = x.reshape(B * T, D)

    # ---- layer_norm1 ----
    h2 = _layer_norm(x2, ln1g_ref[...], ln1b_ref[...])       # (B*T, D)
    h3 = h2.reshape(B, T, D)

    # ---- shared shifted views of the normalized input (one per conv tap);
    #      built once and reused by the query / key / value encoders ----
    pmax = max(k // 2 for k in kernels)
    if pmax > 0:
        zp = jnp.zeros((B, pmax, D), jnp.float32)
        hp = jnp.concatenate([zp, h3, zp], axis=1)            # (B, T + 2*pmax, D)
    else:
        hp = h3
    taps = []                                                 # each (B*T, D)
    for ksz in kernels:
        p = ksz // 2
        for j in range(ksz):
            s0 = pmax - p + j
            taps.append(hp[:, s0:s0 + T, :].reshape(B * T, D))

    # ---- TemporalContextModule: parallel conv branches + concat + 1x1 fuse ----
    def tcm(cw_ref, cb_ref, pw_ref, pb_ref):
        cw = cw_ref[...]                                      # (sum(kernels), D, D)
        cb = cb_ref[...]                                      # (len(kernels), D)
        pw = pw_ref[...]                                      # (len(kernels)*D, D)
        out = pb_ref[...]                                     # (1, D), broadcasts
        tap = 0
        for bi, ksz in enumerate(kernels):
            br = cb[bi:bi + 1, :]                             # (1, D), broadcasts
            for _ in range(ksz):
                br = br + jnp.dot(taps[tap], cw[tap],
                                  preferred_element_type=jnp.float32)
                tap += 1
            # concat-then-1x1-conv == sum of per-branch slices of the fuse matrix
            out = out + jnp.dot(br, pw[bi * D:(bi + 1) * D, :],
                                preferred_element_type=jnp.float32)
        return out                                            # (B*T, D)

    q = tcm(qcw_ref, qcb_ref, qpw_ref, qpb_ref)
    k = tcm(kcw_ref, kcb_ref, kpw_ref, kpb_ref)
    v = tcm(vcw_ref, vcb_ref, vpw_ref, vpb_ref)

    # ---- multi-head attention (all heads in this single invocation) ----
    scale = 1.0 / math.sqrt(hs)
    q3 = (q * scale).reshape(B, T, D)                         # fold scale into q once
    k3 = k.reshape(B, T, D)
    v3 = v.reshape(B, T, D)
    neg = (1.0 - mask_ref[...].astype(jnp.float32)) * (-1e30)  # (B, 1, T), no repeat
    ctx_heads = []
    for h in range(num_heads):
        lo, hi = h * hs, (h + 1) * hs
        qh, kh, vh = q3[:, :, lo:hi], k3[:, :, lo:hi], v3[:, :, lo:hi]
        s = jnp.einsum('bqd,bkd->bqk', qh, kh,
                       preferred_element_type=jnp.float32)    # no explicit k transpose
        s = s + neg                                           # mask_logits
        s = s - jnp.max(s, axis=-1, keepdims=True)
        p = jnp.exp(s)
        p = p / jnp.sum(p, axis=-1, keepdims=True)
        ctx_heads.append(jnp.einsum('bqk,bkd->bqd', p, vh,
                                    preferred_element_type=jnp.float32))
    ctx = jnp.concatenate(ctx_heads, axis=-1).reshape(B * T, D)

    # ---- residual + layer_norm2 + FFN (1x1 convs) + residual ----
    resid = x2 + ctx
    y = _layer_norm(resid, ln2g_ref[...], ln2b_ref[...])
    hdn = jnp.dot(y, w1_ref[...], preferred_element_type=jnp.float32) + b1_ref[...]
    # TODO(synk): nn.GELU() default uses exact erf; tanh approximation used for
    # Mosaic-safe lowering (small numeric deviation vs the reference).
    hdn = 0.5 * hdn * (1.0 + jnp.tanh(0.7978845608028654
                                      * (hdn + 0.044715 * hdn * hdn * hdn)))
    out = jnp.dot(hdn, w2_ref[...], preferred_element_type=jnp.float32) + b2_ref[...]
    o_ref[...] = (out + resid).reshape(B, T, D).astype(o_ref.dtype)


def multi_conv_attention_forward(params, x, mask, *, kernels, num_heads):
    B, T, D = x.shape
    kern = functools.partial(_fused_mca_kernel,
                             kernels=tuple(kernels), num_heads=num_heads)
    mask3 = mask.astype(jnp.float32)[:, None, :]              # (B, 1, T)
    args = [x, mask3, params["ln1_g"], params["ln1_b"]]
    for name in ("query", "key", "value"):
        e = params[name]
        args += [e["conv_w"], e["conv_b"], e["proj_w"], e["proj_b"]]
    args += [params["ln2_g"], params["ln2_b"],
             params["w1"], params["b1"], params["w2"], params["b2"]]
    # Single fused pallas_call, single grid point: all weights + activations
    # (<1 MiB at these shapes) stay resident in VMEM for the entire forward.
    # At production sizes, add a "parallel" grid axis over batch/row tiles
    # (BlockSpec index_maps) so v7x's two TensorCores both get work.
    return pl.pallas_call(
        kern,
        out_shape=jax.ShapeDtypeStruct((B, T, D), x.dtype),
    )(*args)


# --------------------------------------------------------------------------------------
# Deterministic parameter initialization
# --------------------------------------------------------------------------------------

def _uniform(key, shape, fan_in):
    bound = 1.0 / math.sqrt(fan_in)
    return jax.random.uniform(key, shape, jnp.float32, -bound, bound)


def init_tcm_params(key, dim, kernels):
    nk = len(kernels)
    total_taps = sum(kernels)
    k1, k2, k3, k4 = jax.random.split(key, 4)
    return {
        "conv_w": _uniform(k1, (total_taps, dim, dim), dim),  # per-tap (Din, Dout)
        "conv_b": _uniform(k2, (nk, dim), dim),
        "proj_w": _uniform(k3, (nk * dim, dim), nk * dim),
        "proj_b": _uniform(k4, (1, dim), nk * dim),
    }


def init_params(key, dim, kernels):
    kq, kk, kv, k1, k2, k3, k4 = jax.random.split(key, 7)
    return {
        "ln1_g": jnp.ones((1, dim), jnp.float32),
        "ln1_b": jnp.zeros((1, dim), jnp.float32),
        "ln2_g": jnp.ones((1, dim), jnp.float32),
        "ln2_b": jnp.zeros((1, dim), jnp.float32),
        "query": init_tcm_params(kq, dim, kernels),
        "key": init_tcm_params(kk, dim, kernels),
        "value": init_tcm_params(kv, dim, kernels),
        "w1": _uniform(k1, (dim, dim), dim),
        "b1": _uniform(k2, (1, dim), dim),
        "w2": _uniform(k3, (dim, dim), dim),
        "b2": _uniform(k4, (1, dim), dim),
    }


# --------------------------------------------------------------------------------------

if __name__ == "__main__":
    # configs: dim=32, num_heads=4, drop_rate=0.1 (identity in eval), kernels=(1,3,5)
    B, T, DIM = 2, 8, 32
    NUM_HEADS = 4
    KERNELS = (1, 3, 5)   # odd kernel sizes -> "same"-length Conv1D with padding=k//2

    root = jax.random.PRNGKey(0)
    k_params, k_x = jax.random.split(root, 2)

    params = init_params(k_params, DIM, KERNELS)
    x = jax.random.normal(k_x, (B, T, DIM), jnp.float32)
    # mask: sample 0 has full length 8, sample 1 has length 6 (last 2 keys masked)
    lengths = jnp.array([8, 6])
    mask = (jnp.arange(T)[None, :] < lengths[:, None]).astype(jnp.float32)   # (B, T)

    fwd = jax.jit(functools.partial(multi_conv_attention_forward,
                                    kernels=KERNELS, num_heads=NUM_HEADS))
    out = jax.block_until_ready(fwd(params, x, mask))

    assert out.shape == (B, T, DIM)
    assert bool(jnp.all(jnp.isfinite(out)))
    print("KERNEL_OK")
</pallas_src>

<mosaic_0001>
module attributes {stable_mosaic.version = 11 : i64} {
  func.func @_fused_mca_kernel(%arg0: memref<2x8x32xf32, #tpu.memory_space<vmem>>, %arg1: memref<2x1x8xf32, #tpu.memory_space<vmem>>, %arg2: memref<1x32xf32, #tpu.memory_space<vmem>>, %arg3: memref<1x32xf32, #tpu.memory_space<vmem>>, %arg4: memref<9x32x32xf32, #tpu.memory_space<vmem>>, %arg5: memref<3x32xf32, #tpu.memory_space<vmem>>, %arg6: memref<96x32xf32, #tpu.memory_space<vmem>>, %arg7: memref<1x32xf32, #tpu.memory_space<vmem>>, %arg8: memref<9x32x32xf32, #tpu.memory_space<vmem>>, %arg9: memref<3x32xf32, #tpu.memory_space<vmem>>, %arg10: memref<96x32xf32, #tpu.memory_space<vmem>>, %arg11: memref<1x32xf32, #tpu.memory_space<vmem>>, %arg12: memref<9x32x32xf32, #tpu.memory_space<vmem>>, %arg13: memref<3x32xf32, #tpu.memory_space<vmem>>, %arg14: memref<96x32xf32, #tpu.memory_space<vmem>>, %arg15: memref<1x32xf32, #tpu.memory_space<vmem>>, %arg16: memref<1x32xf32, #tpu.memory_space<vmem>>, %arg17: memref<1x32xf32, #tpu.memory_space<vmem>>, %arg18: memref<32x32xf32, #tpu.memory_space<vmem>>, %arg19: memref<1x32xf32, #tpu.memory_space<vmem>>, %arg20: memref<32x32xf32, #tpu.memory_space<vmem>>, %arg21: memref<1x32xf32, #tpu.memory_space<vmem>>, %arg22: memref<2x8x32xf32, #tpu.memory_space<vmem>>) attributes {dimension_semantics = [], scalar_prefetch = 0 : i64, scratch_operands = 0 : i64, tpu.core_type = #tpu.core_type<tc>} {
    %c0 = arith.constant 0 : index
    %c0_0 = arith.constant 0 : index
    %c0_1 = arith.constant 0 : index
    %0 = vector.load %arg0[%c0, %c0_0, %c0_1] : memref<2x8x32xf32, #tpu.memory_space<vmem>>, vector<2x8x32xf32>
    %1 = vector.shape_cast %0 : vector<2x8x32xf32> to vector<16x32xf32>
    %c0_2 = arith.constant 0 : index
    %c0_3 = arith.constant 0 : index
    %2 = vector.load %arg2[%c0_2, %c0_3] : memref<1x32xf32, #tpu.memory_space<vmem>>, vector<1x32xf32>
    %c0_4 = arith.constant 0 : index
    %c0_5 = arith.constant 0 : index
    %3 = vector.load %arg3[%c0_4, %c0_5] : memref<1x32xf32, #tpu.memory_space<vmem>>, vector<1x32xf32>
    %cst = arith.constant dense<0.000000e+00> : vector<16xf32>
    %4 = vector.multi_reduction <add>, %1, %cst [1] : vector<16x32xf32> to vector<16xf32>
    %5 = vector.shape_cast %4 : vector<16xf32> to vector<16x1xf32>
    %cst_6 = arith.constant 3.200000e+01 : f32
    %6 = vector.broadcast %cst_6 : f32 to vector<16x1xf32>
    %7 = arith.divf %5, %6 : vector<16x1xf32>
    %8 = vector.broadcast %7 : vector<16x1xf32> to vector<16x32xf32>
    %9 = arith.subf %1, %8 : vector<16x32xf32>
    %10 = arith.mulf %9, %9 : vector<16x32xf32>
    %cst_7 = arith.constant dense<0.000000e+00> : vector<16xf32>
    %11 = vector.multi_reduction <add>, %10, %cst_7 [1] : vector<16x32xf32> to vector<16xf32>
    %12 = vector.shape_cast %11 : vector<16xf32> to vector<16x1xf32>
    %cst_8 = arith.constant 3.200000e+01 : f32
    %13 = vector.broadcast %cst_8 : f32 to vector<16x1xf32>
    %14 = arith.divf %12, %13 : vector<16x1xf32>
    %15 = vector.broadcast %7 : vector<16x1xf32> to vector<16x32xf32>
    %16 = arith.subf %1, %15 : vector<16x32xf32>
    %cst_9 = arith.constant 9.99999997E-7 : f32
    %17 = vector.broadcast %cst_9 : f32 to vector<16x1xf32>
    %18 = arith.addf %14, %17 : vector<16x1xf32>
    %19 = math.rsqrt %18 : vector<16x1xf32>
    %20 = vector.broadcast %19 : vector<16x1xf32> to vector<16x32xf32>
    %21 = arith.mulf %16, %20 : vector<16x32xf32>
    %22 = vector.broadcast %2 : vector<1x32xf32> to vector<16x32xf32>
    %23 = arith.mulf %21, %22 : vector<16x32xf32>
    %24 = vector.broadcast %3 : vector<1x32xf32> to vector<16x32xf32>
    %25 = arith.addf %23, %24 : vector<16x32xf32>
    %26 = vector.shape_cast %25 : vector<16x32xf32> to vector<2x8x32xf32>
    %cst_10 = arith.constant 0.000000e+00 : f32
    %27 = vector.broadcast %cst_10 : f32 to vector<2x2x32xf32>
    %28 = tpu.concatenate %27, %26, %27 in 1 : vector<2x2x32xf32>, vector<2x8x32xf32>, vector<2x2x32xf32> -> vector<2x12x32xf32>
    %29 = vector.extract_strided_slice %28 {offsets = [0, 2, 0], sizes = [2, 8, 32], strides = [1, 1, 1]} : vector<2x12x32xf32> to vector<2x8x32xf32>
    %30 = vector.shape_cast %29 : vector<2x8x32xf32> to vector<16x32xf32>
    %31 = vector.extract_strided_slice %28 {offsets = [0, 1, 0], sizes = [2, 8, 32], strides = [1, 1, 1]} : vector<2x12x32xf32> to vector<2x8x32xf32>
    %32 = vector.shape_cast %31 : vector<2x8x32xf32> to vector<16x32xf32>
    %33 = vector.extract_strided_slice %28 {offsets = [0, 2, 0], sizes = [2, 8, 32], strides = [1, 1, 1]} : vector<2x12x32xf32> to vector<2x8x32xf32>
    %34 = vector.shape_cast %33 : vector<2x8x32xf32> to vector<16x32xf32>
    %35 = vector.extract_strided_slice %28 {offsets = [0, 3, 0], sizes = [2, 8, 32], strides = [1, 1, 1]} : vector<2x12x32xf32> to vector<2x8x32xf32>
    %36 = vector.shape_cast %35 : vector<2x8x32xf32> to vector<16x32xf32>
    %37 = vector.extract_strided_slice %28 {offsets = [0, 0, 0], sizes = [2, 8, 32], strides = [1, 1, 1]} : vector<2x12x32xf32> to vector<2x8x32xf32>
    %38 = vector.shape_cast %37 : vector<2x8x32xf32> to vector<16x32xf32>
    %39 = vector.extract_strided_slice %28 {offsets = [0, 1, 0], sizes = [2, 8, 32], strides = [1, 1, 1]} : vector<2x12x32xf32> to vector<2x8x32xf32>
    %40 = vector.shape_cast %39 : vector<2x8x32xf32> to vector<16x32xf32>
    %41 = vector.extract_strided_slice %28 {offsets = [0, 2, 0], sizes = [2, 8, 32], strides = [1, 1, 1]} : vector<2x12x32xf32> to vector<2x8x32xf32>
    %42 = vector.shape_cast %41 : vector<2x8x32xf32> to vector<16x32xf32>
    %43 = vector.extract_strided_slice %28 {offsets = [0, 3, 0], sizes = [2, 8, 32], strides = [1, 1, 1]} : vector<2x12x32xf32> to vector<2x8x32xf32>
    %44 = vector.shape_cast %43 : vector<2x8x32xf32> to vector<16x32xf32>
    %45 = vector.extract_strided_slice %28 {offsets = [0, 4, 0], sizes = [2, 8, 32], strides = [1, 1, 1]} : vector<2x12x32xf32> to vector<2x8x32xf32>
    %46 = vector.shape_cast %45 : vector<2x8x32xf32> to vector<16x32xf32>
    %c0_11 = arith.constant 0 : index
    %c0_12 = arith.constant 0 : index
    %c0_13 = arith.constant 0 : index
    %47 = vector.load %arg4[%c0_11, %c0_12, %c0_13] : memref<9x32x32xf32, #tpu.memory_space<vmem>>, vector<9x32x32xf32>
    %c0_14 = arith.constant 0 : index
    %c0_15 = arith.constant 0 : index
    %48 = vector.load %arg5[%c0_14, %c0_15] : memref<3x32xf32, #tpu.memory_space<vmem>>, vector<3x32xf32>
    %c0_16 = arith.constant 0 : index
    %c0_17 = arith.constant 0 : index
    %49 = vector.load %arg6[%c0_16, %c0_17] : memref<96x32xf32, #tpu.memory_space<vmem>>, vector<96x32xf32>
    %c0_18 = arith.constant 0 : index
    %c0_19 = arith.constant 0 : index
    %50 = vector.load %arg7[%c0_18, %c0_19] : memref<1x32xf32, #tpu.memory_space<vmem>>, vector<1x32xf32>
    %51 = vector.extract_strided_slice %48 {offsets = [0, 0], sizes = [1, 32], strides = [1, 1]} : vector<3x32xf32> to vector<1x32xf32>
    %52 = vector.extract_strided_slice %47 {offsets = [0, 0, 0], sizes = [1, 32, 32], strides = [1, 1, 1]} : vector<9x32x32xf32> to vector<1x32x32xf32>
    %53 = vector.shape_cast %52 : vector<1x32x32xf32> to vector<32x32xf32>
    %cst_20 = arith.constant dense<0.000000e+00> : vector<16x32xf32>
    %54 = tpu.matmul %30, %53, %cst_20 {dimension_numbers = #tpu.dot_dimension_numbers<[1], [0], [0], [1], [0, 0, 1, 1], [], []>} : vector<16x32xf32>, vector<32x32xf32>, vector<16x32xf32> -> vector<16x32xf32>
    %55 = vector.broadcast %51 : vector<1x32xf32> to vector<16x32xf32>
    %56 = arith.addf %55, %54 : vector<16x32xf32>
    %57 = vector.extract_strided_slice %49 {offsets = [0, 0], sizes = [32, 32], strides = [1, 1]} : vector<96x32xf32> to vector<32x32xf32>
    %cst_21 = arith.constant dense<0.000000e+00> : vector<16x32xf32>
    %58 = tpu.matmul %56, %57, %cst_21 {dimension_numbers = #tpu.dot_dimension_numbers<[1], [0], [0], [1], [0, 0, 1, 1], [], []>} : vector<16x32xf32>, vector<32x32xf32>, vector<16x32xf32> -> vector<16x32xf32>
    %59 = vector.broadcast %50 : vector<1x32xf32> to vector<16x32xf32>
    %60 = arith.addf %59, %58 : vector<16x32xf32>
    %61 = vector.extract_strided_slice %48 {offsets = [1, 0], sizes = [1, 32], strides = [1, 1]} : vector<3x32xf32> to vector<1x32xf32>
    %62 = vector.extract_strided_slice %47 {offsets = [1, 0, 0], sizes = [1, 32, 32], strides = [1, 1, 1]} : vector<9x32x32xf32> to vector<1x32x32xf32>
    %63 = vector.shape_cast %62 : vector<1x32x32xf32> to vector<32x32xf32>
    %cst_22 = arith.constant dense<0.000000e+00> : vector<16x32xf32>
    %64 = tpu.matmul %32, %63, %cst_22 {dimension_numbers = #tpu.dot_dimension_numbers<[1], [0], [0], [1], [0, 0, 1, 1], [], []>} : vector<16x32xf32>, vector<32x32xf32>, vector<16x32xf32> -> vector<16x32xf32>
    %65 = vector.broadcast %61 : vector<1x32xf32> to vector<16x32xf32>
    %66 = arith.addf %65, %64 : vector<16x32xf32>
    %67 = vector.extract_strided_slice %47 {offsets = [2, 0, 0], sizes = [1, 32, 32], strides = [1, 1, 1]} : vector<9x32x32xf32> to vector<1x32x32xf32>
    %68 = vector.shape_cast %67 : vector<1x32x32xf32> to vector<32x32xf32>
    %cst_23 = arith.constant dense<0.000000e+00> : vector<16x32xf32>
    %69 = tpu.matmul %34, %68, %cst_23 {dimension_numbers = #tpu.dot_dimension_numbers<[1], [0], [0], [1], [0, 0, 1, 1], [], []>} : vector<16x32xf32>, vector<32x32xf32>, vector<16x32xf32> -> vector<16x32xf32>
    %70 = arith.addf %66, %69 : vector<16x32xf32>
    %71 = vector.extract_strided_slice %47 {offsets = [3, 0, 0], sizes = [1, 32, 32], strides = [1, 1, 1]} : vector<9x32x32xf32> to vector<1x32x32xf32>
    %72 = vector.shape_cast %71 : vector<1x32x32xf32> to vector<32x32xf32>
    %cst_24 = arith.constant dense<0.000000e+00> : vector<16x32xf32>
    %73 = tpu.matmul %36, %72, %cst_24 {dimension_numbers = #tpu.dot_dimension_numbers<[1], [0], [0], [1], [0, 0, 1, 1], [], []>} : vector<16x32xf32>, vector<32x32xf32>, vector<16x32xf32> -> vector<16x32xf32>
    %74 = arith.addf %70, %73 : vector<16x32xf32>
    %75 = vector.extract_strided_slice %49 {offsets = [32, 0], sizes = [32, 32], strides = [1, 1]} : vector<96x32xf32> to vector<32x32xf32>
    %cst_25 = arith.constant dense<0.000000e+00> : vector<16x32xf32>
    %76 = tpu.matmul %74, %75, %cst_25 {dimension_numbers = #tpu.dot_dimension_numbers<[1], [0], [0], [1], [0, 0, 1, 1], [], []>} : vector<16x32xf32>, vector<32x32xf32>, vector<16x32xf32> -> vector<16x32xf32>
    %77 = arith.addf %60, %76 : vector<16x32xf32>
    %78 = vector.extract_strided_slice %48 {offsets = [2, 0], sizes = [1, 32], strides = [1, 1]} : vector<3x32xf32> to vector<1x32xf32>
    %79 = vector.extract_strided_slice %47 {offsets = [4, 0, 0], sizes = [1, 32, 32], strides = [1, 1, 1]} : vector<9x32x32xf32> to vector<1x32x32xf32>
    %80 = vector.shape_cast %79 : vector<1x32x32xf32> to vector<32x32xf32>
    %cst_26 = arith.constant dense<0.000000e+00> : vector<16x32xf32>
    %81 = tpu.matmul %38, %80, %cst_26 {dimension_numbers = #tpu.dot_dimension_numbers<[1], [0], [0], [1], [0, 0, 1, 1], [], []>} : vector<16x32xf32>, vector<32x32xf32>, vector<16x32xf32> -> vector<16x32xf32>
    %82 = vector.broadcast %78 : vector<1x32xf32> to vector<16x32xf32>
    %83 = arith.addf %82, %81 : vector<16x32xf32>
    %84 = vector.extract_strided_slice %47 {offsets = [5, 0, 0], sizes = [1, 32, 32], strides = [1, 1, 1]} : vector<9x32x32xf32> to vector<1x32x32xf32>
    %85 = vector.shape_cast %84 : vector<1x32x32xf32> to vector<32x32xf32>
    %cst_27 = arith.constant dense<0.000000e+00> : vector<16x32xf32>
    %86 = tpu.matmul %40, %85, %cst_27 {dimension_numbers = #tpu.dot_dimension_numbers<[1], [0], [0], [1], [0, 0, 1, 1], [], []>} : vector<16x32xf32>, vector<32x32xf32>, vector<16x32xf32> -> vector<16x32xf32>
    %87 = arith.addf %83, %86 : vector<16x32xf32>
    %88 = vector.extract_strided_slice %47 {offsets = [6, 0, 0], sizes = [1, 32, 32], strides = [1, 1, 1]} : vector<9x32x32xf32> to vector<1x32x32xf32>
    %89 = vector.shape_cast %88 : vector<1x32x32xf32> to vector<32x32xf32>
    %cst_28 = arith.constant dense<0.000000e+00> : vector<16x32xf32>
    %90 = tpu.matmul %42, %89, %cst_28 {dimension_numbers = #tpu.dot_dimension_numbers<[1], [0], [0], [1], [0, 0, 1, 1], [], []>} : vector<16x32xf32>, vector<32x32xf32>, vector<16x32xf32> -> vector<16x32xf32>
    %91 = arith.addf %87, %90 : vector<16x32xf32>
    %92 = vector.extract_strided_slice %47 {offsets = [7, 0, 0], sizes = [1, 32, 32], strides = [1, 1, 1]} : vector<9x32x32xf32> to vector<1x32x32xf32>
    %93 = vector.shape_cast %92 : vector<1x32x32xf32> to vector<32x32xf32>
    %cst_29 = arith.constant dense<0.000000e+00> : vector<16x32xf32>
    %94 = tpu.matmul %44, %93, %cst_29 {dimension_numbers = #tpu.dot_dimension_numbers<[1], [0], [0], [1], [0, 0, 1, 1], [], []>} : vector<16x32xf32>, vector<32x32xf32>, vector<16x32xf32> -> vector<16x32xf32>
    %95 = arith.addf %91, %94 : vector<16x32xf32>
    %96 = vector.extract_strided_slice %47 {offsets = [8, 0, 0], sizes = [1, 32, 32], strides = [1, 1, 1]} : vector<9x32x32xf32> to vector<1x32x32xf32>
    %97 = vector.shape_cast %96 : vector<1x32x32xf32> to vector<32x32xf32>
    %cst_30 = arith.constant dense<0.000000e+00> : vector<16x32xf32>
    %98 = tpu.matmul %46, %97, %cst_30 {dimension_numbers = #tpu.dot_dimension_numbers<[1], [0], [0], [1], [0, 0, 1, 1], [], []>} : vector<16x32xf32>, vector<32x32xf32>, vector<16x32xf32> -> vector<16x32xf32>
    %99 = arith.addf %95, %98 : vector<16x32xf32>
    %100 = vector.extract_strided_slice %49 {offsets = [64, 0], sizes = [32, 32], strides = [1, 1]} : vector<96x32xf32> to vector<32x32xf32>
    %cst_31 = arith.constant dense<0.000000e+00> : vector<16x32xf32>
    %101 = tpu.matmul %99, %100, %cst_31 {dimension_numbers = #tpu.dot_dimension_numbers<[1], [0], [0], [1], [0, 0, 1, 1], [], []>} : vector<16x32xf32>, vector<32x32xf32>, vector<16x32xf32> -> vector<16x32xf32>
    %102 = arith.addf %77, %101 : vector<16x32xf32>
    %c0_32 = arith.constant 0 : index
    %c0_33 = arith.constant 0 : index
    %c0_34 = arith.constant 0 : index
    %103 = vector.load %arg8[%c0_32, %c0_33, %c0_34] : memref<9x32x32xf32, #tpu.memory_space<vmem>>, vector<9x32x32xf32>
    %c0_35 = arith.constant 0 : index
    %c0_36 = arith.constant 0 : index
    %104 = vector.load %arg9[%c0_35, %c0_36] : memref<3x32xf32, #tpu.memory_space<vmem>>, vector<3x32xf32>
    %c0_37 = arith.constant 0 : index
    %c0_38 = arith.constant 0 : index
    %105 = vector.load %arg10[%c0_37, %c0_38] : memref<96x32xf32, #tpu.memory_space<vmem>>, vector<96x32xf32>
    %c0_39 = arith.constant 0 : index
    %c0_40 = arith.constant 0 : index
    %106 = vector.load %arg11[%c0_39, %c0_40] : memref<1x32xf32, #tpu.memory_space<vmem>>, vector<1x32xf32>
    %107 = vector.extract_strided_slice %104 {offsets = [0, 0], sizes = [1, 32], strides = [1, 1]} : vector<3x32xf32> to vector<1x32xf32>
    %108 = vector.extract_strided_slice %103 {offsets = [0, 0, 0], sizes = [1, 32, 32], strides = [1, 1, 1]} : vector<9x32x32xf32> to vector<1x32x32xf32>
    %109 = vector.shape_cast %108 : vector<1x32x32xf32> to vector<32x32xf32>
    %cst_41 = arith.constant dense<0.000000e+00> : vector<16x32xf32>
    %110 = tpu.matmul %30, %109, %cst_41 {dimension_numbers = #tpu.dot_dimension_numbers<[1], [0], [0], [1], [0, 0, 1, 1], [], []>} : vector<16x32xf32>, vector<32x32xf32>, vector<16x32xf32> -> vector<16x32xf32>
    %111 = vector.broadcast %107 : vector<1x32xf32> to vector<16x32xf32>
    %112 = arith.addf %111, %110 : vector<16x32xf32>
    %113 = vector.extract_strided_slice %105 {offsets = [0, 0], sizes = [32, 32], strides = [1, 1]} : vector<96x32xf32> to vector<32x32xf32>
    %cst_42 = arith.constant dense<0.000000e+00> : vector<16x32xf32>
    %114 = tpu.matmul %112, %113, %cst_42 {dimension_numbers = #tpu.dot_dimension_numbers<[1], [0], [0], [1], [0, 0, 1, 1], [], []>} : vector<16x32xf32>, vector<32x32xf32>, vector<16x32xf32> -> vector<16x32xf32>
    %115 = vector.broadcast %106 : vector<1x32xf32> to vector<16x32xf32>
    %116 = arith.addf %115, %114 : vector<16x32xf32>
    %117 = vector.extract_strided_slice %104 {offsets = [1, 0], sizes = [1, 32], strides = [1, 1]} : vector<3x32xf32> to vector<1x32xf32>
    %118 = vector.extract_strided_slice %103 {offsets = [1, 0, 0], sizes = [1, 32, 32], strides = [1, 1, 1]} : vector<9x32x32xf32> to vector<1x32x32xf32>
    %119 = vector.shape_cast %118 : vector<1x32x32xf32> to vector<32x32xf32>
    %cst_43 = arith.constant dense<0.000000e+00> : vector<16x32xf32>
    %120 = tpu.matmul %32, %119, %cst_43 {dimension_numbers = #tpu.dot_dimension_numbers<[1], [0], [0], [1], [0, 0, 1, 1], [], []>} : vector<16x32xf32>, vector<32x32xf32>, vector<16x32xf32> -> vector<16x32xf32>
    %121 = vector.broadcast %117 : vector<1x32xf32> to vector<16x32xf32>
    %122 = arith.addf %121, %120 : vector<16x32xf32>
    %123 = vector.extract_strided_slice %103 {offsets = [2, 0, 0], sizes = [1, 32, 32], strides = [1, 1, 1]} : vector<9x32x32xf32> to vector<1x32x32xf32>
    %124 = vector.shape_cast %123 : vector<1x32x32xf32> to vector<32x32xf32>
    %cst_44 = arith.constant dense<0.000000e+00> : vector<16x32xf32>
    %125 = tpu.matmul %34, %124, %cst_44 {dimension_numbers = #tpu.dot_dimension_numbers<[1], [0], [0], [1], [0, 0, 1, 1], [], []>} : vector<16x32xf32>, vector<32x32xf32>, vector<16x32xf32> -> vector<16x32xf32>
    %126 = arith.addf %122, %125 : vector<16x32xf32>
    %127 = vector.extract_strided_slice %103 {offsets = [3, 0, 0], sizes = [1, 32, 32], strides = [1, 1, 1]} : vector<9x32x32xf32> to vector<1x32x32xf32>
    %128 = vector.shape_cast %127 : vector<1x32x32xf32> to vector<32x32xf32>
    %cst_45 = arith.constant dense<0.000000e+00> : vector<16x32xf32>
    %129 = tpu.matmul %36, %128, %cst_45 {dimension_numbers = #tpu.dot_dimension_numbers<[1], [0], [0], [1], [0, 0, 1, 1], [], []>} : vector<16x32xf32>, vector<32x32xf32>, vector<16x32xf32> -> vector<16x32xf32>
    %130 = arith.addf %126, %129 : vector<16x32xf32>
    %131 = vector.extract_strided_slice %105 {offsets = [32, 0], sizes = [32, 32], strides = [1, 1]} : vector<96x32xf32> to vector<32x32xf32>
    %cst_46 = arith.constant dense<0.000000e+00> : vector<16x32xf32>
    %132 = tpu.matmul %130, %131, %cst_46 {dimension_numbers = #tpu.dot_dimension_numbers<[1], [0], [0], [1], [0, 0, 1, 1], [], []>} : vector<16x32xf32>, vector<32x32xf32>, vector<16x32xf32> -> vector<16x32xf32>
    %133 = arith.addf %116, %132 : vector<16x32xf32>
    %134 = vector.extract_strided_slice %104 {offsets = [2, 0], sizes = [1, 32], strides = [1, 1]} : vector<3x32xf32> to vector<1x32xf32>
    %135 = vector.extract_strided_slice %103 {offsets = [4, 0, 0], sizes = [1, 32, 32], strides = [1, 1, 1]} : vector<9x32x32xf32> to vector<1x32x32xf32>
    %136 = vector.shape_cast %135 : vector<1x32x32xf32> to vector<32x32xf32>
    %cst_47 = arith.constant dense<0.000000e+00> : vector<16x32xf32>
    %137 = tpu.matmul %38, %136, %cst_47 {dimension_numbers = #tpu.dot_dimension_numbers<[1], [0], [0], [1], [0, 0, 1, 1], [], []>} : vector<16x32xf32>, vector<32x32xf32>, vector<16x32xf32> -> vector<16x32xf32>
    %138 = vector.broadcast %134 : vector<1x32xf32> to vector<16x32xf32>
    %139 = arith.addf %138, %137 : vector<16x32xf32>
    %140 = vector.extract_strided_slice %103 {offsets = [5, 0, 0], sizes = [1, 32, 32], strides = [1, 1, 1]} : vector<9x32x32xf32> to vector<1x32x32xf32>
    %141 = vector.shape_cast %140 : vector<1x32x32xf32> to vector<32x32xf32>
    %cst_48 = arith.constant dense<0.000000e+00> : vector<16x32xf32>
    %142 = tpu.matmul %40, %141, %cst_48 {dimension_numbers = #tpu.dot_dimension_numbers<[1], [0], [0], [1], [0, 0, 1, 1], [], []>} : vector<16x32xf32>, vector<32x32xf32>, vector<16x32xf32> -> vector<16x32xf32>
    %143 = arith.addf %139, %142 : vector<16x32xf32>
    %144 = vector.extract_strided_slice %103 {offsets = [6, 0, 0], sizes = [1, 32, 32], strides = [1, 1, 1]} : vector<9x32x32xf32> to vector<1x32x32xf32>
    %145 = vector.shape_cast %144 : vector<1x32x32xf32> to vector<32x32xf32>
    %cst_49 = arith.constant dense<0.000000e+00> : vector<16x32xf32>
    %146 = tpu.matmul %42, %145, %cst_49 {dimension_numbers = #tpu.dot_dimension_numbers<[1], [0], [0], [1], [0, 0, 1, 1], [], []>} : vector<16x32xf32>, vector<32x32xf32>, vector<16x32xf32> -> vector<16x32xf32>
    %147 = arith.addf %143, %146 : vector<16x32xf32>
    %148 = vector.extract_strided_slice %103 {offsets = [7, 0, 0], sizes = [1, 32, 32], strides = [1, 1, 1]} : vector<9x32x32xf32> to vector<1x32x32xf32>
    %149 = vector.shape_cast %148 : vector<1x32x32xf32> to vector<32x32xf32>
    %cst_50 = arith.constant dense<0.000000e+00> : vector<16x32xf32>
    %150 = tpu.matmul %44, %149, %cst_50 {dimension_numbers = #tpu.dot_dimension_numbers<[1], [0], [0], [1], [0, 0, 1, 1], [], []>} : vector<16x32xf32>, vector<32x32xf32>, vector<16x32xf32> -> vector<16x32xf32>
    %151 = arith.addf %147, %150 : vector<16x32xf32>
    %152 = vector.extract_strided_slice %103 {offsets = [8, 0, 0], sizes = [1, 32, 32], strides = [1, 1, 1]} : vector<9x32x32xf32> to vector<1x32x32xf32>
    %153 = vector.shape_cast %152 : vector<1x32x32xf32> to vector<32x32xf32>
    %cst_51 = arith.constant dense<0.000000e+00> : vector<16x32xf32>
    %154 = tpu.matmul %46, %153, %cst_51 {dimension_numbers = #tpu.dot_dimension_numbers<[1], [0], [0], [1], [0, 0, 1, 1], [], []>} : vector<16x32xf32>, vector<32x32xf32>, vector<16x32xf32> -> vector<16x32xf32>
    %155 = arith.addf %151, %154 : vector<16x32xf32>
    %156 = vector.extract_strided_slice %105 {offsets = [64, 0], sizes = [32, 32], strides = [1, 1]} : vector<96x32xf32> to vector<32x32xf32>
    %cst_52 = arith.constant dense<0.000000e+00> : vector<16x32xf32>
    %157 = tpu.matmul %155, %156, %cst_52 {dimension_numbers = #tpu.dot_dimension_numbers<[1], [0], [0], [1], [0, 0, 1, 1], [], []>} : vector<16x32xf32>, vector<32x32xf32>, vector<16x32xf32> -> vector<16x32xf32>
    %158 = arith.addf %133, %157 : vector<16x32xf32>
    %c0_53 = arith.constant 0 : index
    %c0_54 = arith.constant 0 : index
    %c0_55 = arith.constant 0 : index
    %159 = vector.load %arg12[%c0_53, %c0_54, %c0_55] : memref<9x32x32xf32, #tpu.memory_space<vmem>>, vector<9x32x32xf32>
    %c0_56 = arith.constant 0 : index
    %c0_57 = arith.constant 0 : index
    %160 = vector.load %arg13[%c0_56, %c0_57] : memref<3x32xf32, #tpu.memory_space<vmem>>, vector<3x32xf32>
    %c0_58 = arith.constant 0 : index
    %c0_59 = arith.constant 0 : index
    %161 = vector.load %arg14[%c0_58, %c0_59] : memref<96x32xf32, #tpu.memory_space<vmem>>, vector<96x32xf32>
    %c0_60 = arith.constant 0 : index
    %c0_61 = arith.constant 0 : index
    %162 = vector.load %arg15[%c0_60, %c0_61] : memref<1x32xf32, #tpu.memory_space<vmem>>, vector<1x32xf32>
    %163 = vector.extract_strided_slice %160 {offsets = [0, 0], sizes = [1, 32], strides = [1, 1]} : vector<3x32xf32> to vector<1x32xf32>
    %164 = vector.extract_strided_slice %159 {offsets = [0, 0, 0], sizes = [1, 32, 32], strides = [1, 1, 1]} : vector<9x32x32xf32> to vector<1x32x32xf32>
    %165 = vector.shape_cast %164 : vector<1x32x32xf32> to vector<32x32xf32>
    %cst_62 = arith.constant dense<0.000000e+00> : vector<16x32xf32>
    %166 = tpu.matmul %30, %165, %cst_62 {dimension_numbers = #tpu.dot_dimension_numbers<[1], [0], [0], [1], [0, 0, 1, 1], [], []>} : vector<16x32xf32>, vector<32x32xf32>, vector<16x32xf32> -> vector<16x32xf32>
    %167 = vector.broadcast %163 : vector<1x32xf32> to vector<16x32xf32>
    %168 = arith.addf %167, %166 : vector<16x32xf32>
    %169 = vector.extract_strided_slice %161 {offsets = [0, 0], sizes = [32, 32], strides = [1, 1]} : vector<96x32xf32> to vector<32x32xf32>
    %cst_63 = arith.constant dense<0.000000e+00> : vector<16x32xf32>
    %170 = tpu.matmul %168, %169, %cst_63 {dimension_numbers = #tpu.dot_dimension_numbers<[1], [0], [0], [1], [0, 0, 1, 1], [], []>} : vector<16x32xf32>, vector<32x32xf32>, vector<16x32xf32> -> vector<16x32xf32>
    %171 = vector.broadcast %162 : vector<1x32xf32> to vector<16x32xf32>
    %172 = arith.addf %171, %170 : vector<16x32xf32>
    %173 = vector.extract_strided_slice %160 {offsets = [1, 0], sizes = [1, 32], strides = [1, 1]} : vector<3x32xf32> to vector<1x32xf32>
    %174 = vector.extract_strided_slice %159 {offsets = [1, 0, 0], sizes = [1, 32, 32], strides = [1, 1, 1]} : vector<9x32x32xf32> to vector<1x32x32xf32>
    %175 = vector.shape_cast %174 : vector<1x32x32xf32> to vector<32x32xf32>
    %cst_64 = arith.constant dense<0.000000e+00> : vector<16x32xf32>
    %176 = tpu.matmul %32, %175, %cst_64 {dimension_numbers = #tpu.dot_dimension_numbers<[1], [0], [0], [1], [0, 0, 1, 1], [], []>} : vector<16x32xf32>, vector<32x32xf32>, vector<16x32xf32> -> vector<16x32xf32>
    %177 = vector.broadcast %173 : vector<1x32xf32> to vector<16x32xf32>
    %178 = arith.addf %177, %176 : vector<16x32xf32>
    %179 = vector.extract_strided_slice %159 {offsets = [2, 0, 0], sizes = [1, 32, 32], strides = [1, 1, 1]} : vector<9x32x32xf32> to vector<1x32x32xf32>
    %180 = vector.shape_cast %179 : vector<1x32x32xf32> to vector<32x32xf32>
    %cst_65 = arith.constant dense<0.000000e+00> : vector<16x32xf32>
    %181 = tpu.matmul %34, %180, %cst_65 {dimension_numbers = #tpu.dot_dimension_numbers<[1], [0], [0], [1], [0, 0, 1, 1], [], []>} : vector<16x32xf32>, vector<32x32xf32>, vector<16x32xf32> -> vector<16x32xf32>
    %182 = arith.addf %178, %181 : vector<16x32xf32>
    %183 = vector.extract_strided_slice %159 {offsets = [3, 0, 0], sizes = [1, 32, 32], strides = [1, 1, 1]} : vector<9x32x32xf32> to vector<1x32x32xf32>
    %184 = vector.shape_cast %183 : vector<1x32x32xf32> to vector<32x32xf32>
    %cst_66 = arith.constant dense<0.000000e+00> : vector<16x32xf32>
    %185 = tpu.matmul %36, %184, %cst_66 {dimension_numbers = #tpu.dot_dimension_numbers<[1], [0], [0], [1], [0, 0, 1, 1], [], []>} : vector<16x32xf32>, vector<32x32xf32>, vector<16x32xf32> -> vector<16x32xf32>
    %186 = arith.addf %182, %185 : vector<16x32xf32>
    %187 = vector.extract_strided_slice %161 {offsets = [32, 0], sizes = [32, 32], strides = [1, 1]} : vector<96x32xf32> to vector<32x32xf32>
    %cst_67 = arith.constant dense<0.000000e+00> : vector<16x32xf32>
    %188 = tpu.matmul %186, %187, %cst_67 {dimension_numbers = #tpu.dot_dimension_numbers<[1], [0], [0], [1], [0, 0, 1, 1], [], []>} : vector<16x32xf32>, vector<32x32xf32>, vector<16x32xf32> -> vector<16x32xf32>
    %189 = arith.addf %172, %188 : vector<16x32xf32>
    %190 = vector.extract_strided_slice %160 {offsets = [2, 0], sizes = [1, 32], strides = [1, 1]} : vector<3x32xf32> to vector<1x32xf32>
    %191 = vector.extract_strided_slice %159 {offsets = [4, 0, 0], sizes = [1, 32, 32], strides = [1, 1, 1]} : vector<9x32x32xf32> to vector<1x32x32xf32>
    %192 = vector.shape_cast %191 : vector<1x32x32xf32> to vector<32x32xf32>
    %cst_68 = arith.constant dense<0.000000e+00> : vector<16x32xf32>
    %193 = tpu.matmul %38, %192, %cst_68 {dimension_numbers = #tpu.dot_dimension_numbers<[1], [0], [0], [1], [0, 0, 1, 1], [], []>} : vector<16x32xf32>, vector<32x32xf32>, vector<16x32xf32> -> vector<16x32xf32>
    %194 = vector.broadcast %190 : vector<1x32xf32> to vector<16x32xf32>
    %195 = arith.addf %194, %193 : vector<16x32xf32>
    %196 = vector.extract_strided_slice %159 {offsets = [5, 0, 0], sizes = [1, 32, 32], strides = [1, 1, 1]} : vector<9x32x32xf32> to vector<1x32x32xf32>
    %197 = vector.shape_cast %196 : vector<1x32x32xf32> to vector<32x32xf32>
    %cst_69 = arith.constant dense<0.000000e+00> : vector<16x32xf32>
    %198 = tpu.matmul %40, %197, %cst_69 {dimension_numbers = #tpu.dot_dimension_numbers<[1], [0], [0], [1], [0, 0, 1, 1], [], []>} : vector<16x32xf32>, vector<32x32xf32>, vector<16x32xf32> -> vector<16x32xf32>
    %199 = arith.addf %195, %198 : vector<16x32xf32>
    %200 = vector.extract_strided_slice %159 {offsets = [6, 0, 0], sizes = [1, 32, 32], strides = [1, 1, 1]} : vector<9x32x32xf32> to vector<1x32x32xf32>
    %201 = vector.shape_cast %200 : vector<1x32x32xf32> to vector<32x32xf32>
    %cst_70 = arith.constant dense<0.000000e+00> : vector<16x32xf32>
    %202 = tpu.matmul %42, %201, %cst_70 {dimension_numbers = #tpu.dot_dimension_numbers<[1], [0], [0], [1], [0, 0, 1, 1], [], []>} : vector<16x32xf32>, vector<32x32xf32>, vector<16x32xf32> -> vector<16x32xf32>
    %203 = arith.addf %199, %202 : vector<16x32xf32>
    %204 = vector.extract_strided_slice %159 {offsets = [7, 0, 0], sizes = [1, 32, 32], strides = [1, 1, 1]} : vector<9x32x32xf32> to vector<1x32x32xf32>
    %205 = vector.shape_cast %204 : vector<1x32x32xf32> to vector<32x32xf32>
    %cst_71 = arith.constant dense<0.000000e+00> : vector<16x32xf32>
    %206 = tpu.matmul %44, %205, %cst_71 {dimension_numbers = #tpu.dot_dimension_numbers<[1], [0], [0], [1], [0, 0, 1, 1], [], []>} : vector<16x32xf32>, vector<32x32xf32>, vector<16x32xf32> -> vector<16x32xf32>
    %207 = arith.addf %203, %206 : vector<16x32xf32>
    %208 = vector.extract_strided_slice %159 {offsets = [8, 0, 0], sizes = [1, 32, 32], strides = [1, 1, 1]} : vector<9x32x32xf32> to vector<1x32x32xf32>
    %209 = vector.shape_cast %208 : vector<1x32x32xf32> to vector<32x32xf32>
    %cst_72 = arith.constant dense<0.000000e+00> : vector<16x32xf32>
    %210 = tpu.matmul %46, %209, %cst_72 {dimension_numbers = #tpu.dot_dimension_numbers<[1], [0], [0], [1], [0, 0, 1, 1], [], []>} : vector<16x32xf32>, vector<32x32xf32>, vector<16x32xf32> -> vector<16x32xf32>
    %211 = arith.addf %207, %210 : vector<16x32xf32>
    %212 = vector.extract_strided_slice %161 {offsets = [64, 0], sizes = [32, 32], strides = [1, 1]} : vector<96x32xf32> to vector<32x32xf32>
    %cst_73 = arith.constant dense<0.000000e+00> : vector<16x32xf32>
    %213 = tpu.matmul %211, %212, %cst_73 {dimension_numbers = #tpu.dot_dimension_numbers<[1], [0], [0], [1], [0, 0, 1, 1], [], []>} : vector<16x32xf32>, vector<32x32xf32>, vector<16x32xf32> -> vector<16x32xf32>
    %214 = arith.addf %189, %213 : vector<16x32xf32>
    %cst_74 = arith.constant 0.353553385 : f32
    %215 = vector.broadcast %cst_74 : f32 to vector<16x32xf32>
    %216 = arith.mulf %102, %215 : vector<16x32xf32>
    %217 = vector.shape_cast %216 : vector<16x32xf32> to vector<2x8x32xf32>
    %218 = vector.shape_cast %158 : vector<16x32xf32> to vector<2x8x32xf32>
    %219 = vector.shape_cast %214 : vector<16x32xf32> to vector<2x8x32xf32>
    %c0_75 = arith.constant 0 : index
    %c0_76 = arith.constant 0 : index
    %c0_77 = arith.constant 0 : index
    %220 = vector.load %arg1[%c0_75, %c0_76, %c0_77] : memref<2x1x8xf32, #tpu.memory_space<vmem>>, vector<2x1x8xf32>
    %cst_78 = arith.constant 1.000000e+00 : f32
    %221 = vector.broadcast %cst_78 : f32 to vector<2x1x8xf32>
    %222 = arith.subf %221, %220 : vector<2x1x8xf32>
    %cst_79 = arith.constant -1.000000e+30 : f32
    %223 = vector.broadcast %cst_79 : f32 to vector<2x1x8xf32>
    %224 = arith.mulf %222, %223 : vector<2x1x8xf32>
    %225 = vector.extract_strided_slice %217 {offsets = [0, 0, 0], sizes = [2, 8, 8], strides = [1, 1, 1]} : vector<2x8x32xf32> to vector<2x8x8xf32>
    %226 = vector.extract_strided_slice %218 {offsets = [0, 0, 0], sizes = [2, 8, 8], strides = [1, 1, 1]} : vector<2x8x32xf32> to vector<2x8x8xf32>
    %227 = vector.extract_strided_slice %219 {offsets = [0, 0, 0], sizes = [2, 8, 8], strides = [1, 1, 1]} : vector<2x8x32xf32> to vector<2x8x8xf32>
    "tpu.trace_start"() <{level = 10 : i32, message = "bqd,bkd->bqk"}> : () -> ()
    %cst_80 = arith.constant dense<0.000000e+00> : vector<2x8x8xf32>
    %228 = tpu.matmul %225, %226, %cst_80 {dimension_numbers = #tpu.dot_dimension_numbers<[2], [2], [1], [1], [0, 0, 0, 1, 1, 1], [0], [0]>} : vector<2x8x8xf32>, vector<2x8x8xf32>, vector<2x8x8xf32> -> vector<2x8x8xf32>
    "tpu.trace_stop"() : () -> ()
    %229 = vector.broadcast %224 : vector<2x1x8xf32> to vector<2x8x8xf32>
    %230 = arith.addf %228, %229 : vector<2x8x8xf32>
    %cst_81 = arith.constant dense<0xFF800000> : vector<2x8xf32>
    %231 = vector.multi_reduction <maximumf>, %230, %cst_81 [2] : vector<2x8x8xf32> to vector<2x8xf32>
    %232 = vector.shape_cast %231 : vector<2x8xf32> to vector<2x8x1xf32>
    %233 = vector.broadcast %232 : vector<2x8x1xf32> to vector<2x8x8xf32>
    %234 = arith.subf %230, %233 : vector<2x8x8xf32>
    %235 = math.exp %234 : vector<2x8x8xf32>
    %cst_82 = arith.constant dense<0.000000e+00> : vector<2x8xf32>
    %236 = vector.multi_reduction <add>, %235, %cst_82 [2] : vector<2x8x8xf32> to vector<2x8xf32>
    %237 = vector.shape_cast %236 : vector<2x8xf32> to vector<2x8x1xf32>
    %238 = vector.broadcast %237 : vector<2x8x1xf32> to vector<2x8x8xf32>
    %239 = arith.divf %235, %238 : vector<2x8x8xf32>
    "tpu.trace_start"() <{level = 10 : i32, message = "bqk,bkd->bqd"}> : () -> ()
    %cst_83 = arith.constant dense<0.000000e+00> : vector<2x8x8xf32>
    %240 = tpu.matmul %239, %227, %cst_83 {dimension_numbers = #tpu.dot_dimension_numbers<[2], [1], [1], [2], [0, 0, 0, 1, 1, 2], [0], [0]>} : vector<2x8x8xf32>, vector<2x8x8xf32>, vector<2x8x8xf32> -> vector<2x8x8xf32>
    "tpu.trace_stop"() : () -> ()
    %241 = vector.extract_strided_slice %217 {offsets = [0, 0, 8], sizes = [2, 8, 8], strides = [1, 1, 1]} : vector<2x8x32xf32> to vector<2x8x8xf32>
    %242 = vector.extract_strided_slice %218 {offsets = [0, 0, 8], sizes = [2, 8, 8], strides = [1, 1, 1]} : vector<2x8x32xf32> to vector<2x8x8xf32>
    %243 = vector.extract_strided_slice %219 {offsets = [0, 0, 8], sizes = [2, 8, 8], strides = [1, 1, 1]} : vector<2x8x32xf32> to vector<2x8x8xf32>
    "tpu.trace_start"() <{level = 10 : i32, message = "bqd,bkd->bqk"}> : () -> ()
    %cst_84 = arith.constant dense<0.000000e+00> : vector<2x8x8xf32>
    %244 = tpu.matmul %241, %242, %cst_84 {dimension_numbers = #tpu.dot_dimension_numbers<[2], [2], [1], [1], [0, 0, 0, 1, 1, 1], [0], [0]>} : vector<2x8x8xf32>, vector<2x8x8xf32>, vector<2x8x8xf32> -> vector<2x8x8xf32>
    "tpu.trace_stop"() : () -> ()
    %245 = vector.broadcast %224 : vector<2x1x8xf32> to vector<2x8x8xf32>
    %246 = arith.addf %244, %245 : vector<2x8x8xf32>
    %cst_85 = arith.constant dense<0xFF800000> : vector<2x8xf32>
    %247 = vector.multi_reduction <maximumf>, %246, %cst_85 [2] : vector<2x8x8xf32> to vector<2x8xf32>
    %248 = vector.shape_cast %247 : vector<2x8xf32> to vector<2x8x1xf32>
    %249 = vector.broadcast %248 : vector<2x8x1xf32> to vector<2x8x8xf32>
    %250 = arith.subf %246, %249 : vector<2x8x8xf32>
    %251 = math.exp %250 : vector<2x8x8xf32>
    %cst_86 = arith.constant dense<0.000000e+00> : vector<2x8xf32>
    %252 = vector.multi_reduction <add>, %251, %cst_86 [2] : vector<2x8x8xf32> to vector<2x8xf32>
    %253 = vector.shape_cast %252 : vector<2x8xf32> to vector<2x8x1xf32>
    %254 = vector.broadcast %253 : vector<2x8x1xf32> to vector<2x8x8xf32>
    %255 = arith.divf %251, %254 : vector<2x8x8xf32>
    "tpu.trace_start"() <{level = 10 : i32, message = "bqk,bkd->bqd"}> : () -> ()
    %cst_87 = arith.constant dense<0.000000e+00> : vector<2x8x8xf32>
    %256 = tpu.matmul %255, %243, %cst_87 {dimension_numbers = #tpu.dot_dimension_numbers<[2], [1], [1], [2], [0, 0, 0, 1, 1, 2], [0], [0]>} : vector<2x8x8xf32>, vector<2x8x8xf32>, vector<2x8x8xf32> -> vector<2x8x8xf32>
    "tpu.trace_stop"() : () -> ()
    %257 = vector.extract_strided_slice %217 {offsets = [0, 0, 16], sizes = [2, 8, 8], strides = [1, 1, 1]} : vector<2x8x32xf32> to vector<2x8x8xf32>
    %258 = vector.extract_strided_slice %218 {offsets = [0, 0, 16], sizes = [2, 8, 8], strides = [1, 1, 1]} : vector<2x8x32xf32> to vector<2x8x8xf32>
    %259 = vector.extract_strided_slice %219 {offsets = [0, 0, 16], sizes = [2, 8, 8], strides = [1, 1, 1]} : vector<2x8x32xf32> to vector<2x8x8xf32>
    "tpu.trace_start"() <{level = 10 : i32, message = "bqd,bkd->bqk"}> : () -> ()
    %cst_88 = arith.constant dense<0.000000e+00> : vector<2x8x8xf32>
    %260 = tpu.matmul %257, %258, %cst_88 {dimension_numbers = #tpu.dot_dimension_numbers<[2], [2], [1], [1], [0, 0, 0, 1, 1, 1], [0], [0]>} : vector<2x8x8xf32>, vector<2x8x8xf32>, vector<2x8x8xf32> -> vector<2x8x8xf32>
    "tpu.trace_stop"() : () -> ()
    %261 = vector.broadcast %224 : vector<2x1x8xf32> to vector<2x8x8xf32>
    %262 = arith.addf %260, %261 : vector<2x8x8xf32>
    %cst_89 = arith.constant dense<0xFF800000> : vector<2x8xf32>
    %263 = vector.multi_reduction <maximumf>, %262, %cst_89 [2] : vector<2x8x8xf32> to vector<2x8xf32>
    %264 = vector.shape_cast %263 : vector<2x8xf32> to vector<2x8x1xf32>
    %265 = vector.broadcast %264 : vector<2x8x1xf32> to vector<2x8x8xf32>
    %266 = arith.subf %262, %265 : vector<2x8x8xf32>
    %267 = math.exp %266 : vector<2x8x8xf32>
    %cst_90 = arith.constant dense<0.000000e+00> : vector<2x8xf32>
    %268 = vector.multi_reduction <add>, %267, %cst_90 [2] : vector<2x8x8xf32> to vector<2x8xf32>
    %269 = vector.shape_cast %268 : vector<2x8xf32> to vector<2x8x1xf32>
    %270 = vector.broadcast %269 : vector<2x8x1xf32> to vector<2x8x8xf32>
    %271 = arith.divf %267, %270 : vector<2x8x8xf32>
    "tpu.trace_start"() <{level = 10 : i32, message = "bqk,bkd->bqd"}> : () -> ()
    %cst_91 = arith.constant dense<0.000000e+00> : vector<2x8x8xf32>
    %272 = tpu.matmul %271, %259, %cst_91 {dimension_numbers = #tpu.dot_dimension_numbers<[2], [1], [1], [2], [0, 0, 0, 1, 1, 2], [0], [0]>} : vector<2x8x8xf32>, vector<2x8x8xf32>, vector<2x8x8xf32> -> vector<2x8x8xf32>
    "tpu.trace_stop"() : () -> ()
    %273 = vector.extract_strided_slice %217 {offsets = [0, 0, 24], sizes = [2, 8, 8], strides = [1, 1, 1]} : vector<2x8x32xf32> to vector<2x8x8xf32>
    %274 = vector.extract_strided_slice %218 {offsets = [0, 0, 24], sizes = [2, 8, 8], strides = [1, 1, 1]} : vector<2x8x32xf32> to vector<2x8x8xf32>
    %275 = vector.extract_strided_slice %219 {offsets = [0, 0, 24], sizes = [2, 8, 8], strides = [1, 1, 1]} : vector<2x8x32xf32> to vector<2x8x8xf32>
    "tpu.trace_start"() <{level = 10 : i32, message = "bqd,bkd->bqk"}> : () -> ()
    %cst_92 = arith.constant dense<0.000000e+00> : vector<2x8x8xf32>
    %276 = tpu.matmul %273, %274, %cst_92 {dimension_numbers = #tpu.dot_dimension_numbers<[2], [2], [1], [1], [0, 0, 0, 1, 1, 1], [0], [0]>} : vector<2x8x8xf32>, vector<2x8x8xf32>, vector<2x8x8xf32> -> vector<2x8x8xf32>
    "tpu.trace_stop"() : () -> ()
    %277 = vector.broadcast %224 : vector<2x1x8xf32> to vector<2x8x8xf32>
    %278 = arith.addf %276, %277 : vector<2x8x8xf32>
    %cst_93 = arith.constant dense<0xFF800000> : vector<2x8xf32>
    %279 = vector.multi_reduction <maximumf>, %278, %cst_93 [2] : vector<2x8x8xf32> to vector<2x8xf32>
    %280 = vector.shape_cast %279 : vector<2x8xf32> to vector<2x8x1xf32>
    %281 = vector.broadcast %280 : vector<2x8x1xf32> to vector<2x8x8xf32>
    %282 = arith.subf %278, %281 : vector<2x8x8xf32>
    %283 = math.exp %282 : vector<2x8x8xf32>
    %cst_94 = arith.constant dense<0.000000e+00> : vector<2x8xf32>
    %284 = vector.multi_reduction <add>, %283, %cst_94 [2] : vector<2x8x8xf32> to vector<2x8xf32>
    %285 = vector.shape_cast %284 : vector<2x8xf32> to vector<2x8x1xf32>
    %286 = vector.broadcast %285 : vector<2x8x1xf32> to vector<2x8x8xf32>
    %287 = arith.divf %283, %286 : vector<2x8x8xf32>
    "tpu.trace_start"() <{level = 10 : i32, message = "bqk,bkd->bqd"}> : () -> ()
    %cst_95 = arith.constant dense<0.000000e+00> : vector<2x8x8xf32>
    %288 = tpu.matmul %287, %275, %cst_95 {dimension_numbers = #tpu.dot_dimension_numbers<[2], [1], [1], [2], [0, 0, 0, 1, 1, 2], [0], [0]>} : vector<2x8x8xf32>, vector<2x8x8xf32>, vector<2x8x8xf32> -> vector<2x8x8xf32>
    "tpu.trace_stop"() : () -> ()
    %289 = tpu.concatenate %240, %256, %272, %288 in 2 : vector<2x8x8xf32>, vector<2x8x8xf32>, vector<2x8x8xf32>, vector<2x8x8xf32> -> vector<2x8x32xf32>
    %290 = vector.shape_cast %289 : vector<2x8x32xf32> to vector<16x32xf32>
    %291 = arith.addf %1, %290 : vector<16x32xf32>
    %c0_96 = arith.constant 0 : index
    %c0_97 = arith.constant 0 : index
    %292 = vector.load %arg16[%c0_96, %c0_97] : memref<1x32xf32, #tpu.memory_space<vmem>>, vector<1x32xf32>
    %c0_98 = arith.constant 0 : index
    %c0_99 = arith.constant 0 : index
    %293 = vector.load %arg17[%c0_98, %c0_99] : memref<1x32xf32, #tpu.memory_space<vmem>>, vector<1x32xf32>
    %cst_100 = arith.constant dense<0.000000e+00> : vector<16xf32>
    %294 = vector.multi_reduction <add>, %291, %cst_100 [1] : vector<16x32xf32> to vector<16xf32>
    %295 = vector.shape_cast %294 : vector<16xf32> to vector<16x1xf32>
    %cst_101 = arith.constant 3.200000e+01 : f32
    %296 = vector.broadcast %cst_101 : f32 to vector<16x1xf32>
    %297 = arith.divf %295, %296 : vector<16x1xf32>
    %298 = vector.broadcast %297 : vector<16x1xf32> to vector<16x32xf32>
    %299 = arith.subf %291, %298 : vector<16x32xf32>
    %300 = arith.mulf %299, %299 : vector<16x32xf32>
    %cst_102 = arith.constant dense<0.000000e+00> : vector<16xf32>
    %301 = vector.multi_reduction <add>, %300, %cst_102 [1] : vector<16x32xf32> to vector<16xf32>
    %302 = vector.shape_cast %301 : vector<16xf32> to vector<16x1xf32>
    %cst_103 = arith.constant 3.200000e+01 : f32
    %303 = vector.broadcast %cst_103 : f32 to vector<16x1xf32>
    %304 = arith.divf %302, %303 : vector<16x1xf32>
    %305 = vector.broadcast %297 : vector<16x1xf32> to vector<16x32xf32>
    %306 = arith.subf %291, %305 : vector<16x32xf32>
    %cst_104 = arith.constant 9.99999997E-7 : f32
    %307 = vector.broadcast %cst_104 : f32 to vector<16x1xf32>
    %308 = arith.addf %304, %307 : vector<16x1xf32>
    %309 = math.rsqrt %308 : vector<16x1xf32>
    %310 = vector.broadcast %309 : vector<16x1xf32> to vector<16x32xf32>
    %311 = arith.mulf %306, %310 : vector<16x32xf32>
    %312 = vector.broadcast %292 : vector<1x32xf32> to vector<16x32xf32>
    %313 = arith.mulf %311, %312 : vector<16x32xf32>
    %314 = vector.broadcast %293 : vector<1x32xf32> to vector<16x32xf32>
    %315 = arith.addf %313, %314 : vector<16x32xf32>
    %c0_105 = arith.constant 0 : index
    %c0_106 = arith.constant 0 : index
    %316 = vector.load %arg18[%c0_105, %c0_106] : memref<32x32xf32, #tpu.memory_space<vmem>>, vector<32x32xf32>
    %cst_107 = arith.constant dense<0.000000e+00> : vector<16x32xf32>
    %317 = tpu.matmul %315, %316, %cst_107 {dimension_numbers = #tpu.dot_dimension_numbers<[1], [0], [0], [1], [0, 0, 1, 1], [], []>} : vector<16x32xf32>, vector<32x32xf32>, vector<16x32xf32> -> vector<16x32xf32>
    %c0_108 = arith.constant 0 : index
    %c0_109 = arith.constant 0 : index
    %318 = vector.load %arg19[%c0_108, %c0_109] : memref<1x32xf32, #tpu.memory_space<vmem>>, vector<1x32xf32>
    %319 = vector.broadcast %318 : vector<1x32xf32> to vector<16x32xf32>
    %320 = arith.addf %317, %319 : vector<16x32xf32>
    %cst_110 = arith.constant 5.000000e-01 : f32
    %321 = vector.broadcast %cst_110 : f32 to vector<16x32xf32>
    %322 = arith.mulf %321, %320 : vector<16x32xf32>
    %cst_111 = arith.constant 4.471500e-02 : f32
    %323 = vector.broadcast %cst_111 : f32 to vector<16x32xf32>
    %324 = arith.mulf %323, %320 : vector<16x32xf32>
    %325 = arith.mulf %324, %320 : vector<16x32xf32>
    %326 = arith.mulf %325, %320 : vector<16x32xf32>
    %327 = arith.addf %320, %326 : vector<16x32xf32>
    %cst_112 = arith.constant 0.797884583 : f32
    %328 = vector.broadcast %cst_112 : f32 to vector<16x32xf32>
    %329 = arith.mulf %328, %327 : vector<16x32xf32>
    %330 = math.tanh %329 : vector<16x32xf32>
    %cst_113 = arith.constant 1.000000e+00 : f32
    %331 = vector.broadcast %cst_113 : f32 to vector<16x32xf32>
    %332 = arith.addf %331, %330 : vector<16x32xf32>
    %333 = arith.mulf %322, %332 : vector<16x32xf32>
    %c0_114 = arith.constant 0 : index
    %c0_115 = arith.constant 0 : index
    %334 = vector.load %arg20[%c0_114, %c0_115] : memref<32x32xf32, #tpu.memory_space<vmem>>, vector<32x32xf32>
    %cst_116 = arith.constant dense<0.000000e+00> : vector<16x32xf32>
    %335 = tpu.matmul %333, %334, %cst_116 {dimension_numbers = #tpu.dot_dimension_numbers<[1], [0], [0], [1], [0, 0, 1, 1], [], []>} : vector<16x32xf32>, vector<32x32xf32>, vector<16x32xf32> -> vector<16x32xf32>
    %c0_117 = arith.constant 0 : index
    %c0_118 = arith.constant 0 : index
    %336 = vector.load %arg21[%c0_117, %c0_118] : memref<1x32xf32, #tpu.memory_space<vmem>>, vector<1x32xf32>
    %337 = vector.broadcast %336 : vector<1x32xf32> to vector<16x32xf32>
    %338 = arith.addf %335, %337 : vector<16x32xf32>
    %339 = arith.addf %338, %291 : vector<16x32xf32>
    %340 = vector.shape_cast %339 : vector<16x32xf32> to vector<2x8x32xf32>
    %c0_119 = arith.constant 0 : index
    %c0_120 = arith.constant 0 : index
    %c0_121 = arith.constant 0 : index
    %341 = vector.load %arg22[%c0_119, %c0_120, %c0_121] : memref<2x8x32xf32, #tpu.memory_space<vmem>>, vector<2x8x32xf32>
    tpu.vector_store %arg22[%c0_119, %c0_120, %c0_121], %340 {strides = array<i32>} : memref<2x8x32xf32, #tpu.memory_space<vmem>>, vector<2x8x32xf32>,
    return
  }
}

</mosaic_0001>

<llo_original>
// kernel: multi_conv_attention_forward.1
$region0: #{multi_conv_attention_forward.1}
  #allocation0 [shape = 'u32[]', space=smem, size = 0x4, offset = 0x4, fixed_abs, tag = 'smem constant byte address 0x4 - core index']
  #allocation1 [shape = 'u32[144,128]{1,0:T(1,128)}', space=vmem, size = 0x12000, scoped, tag = 'internal scratch']
  %s0 = inlined_call_operand.vmem [shape: f32[2,8,32], index: 0, kind: input, shape index: {}]
  %s1 = inlined_call_operand.vmem [shape: f32[2,1,8], index: 1, kind: input, shape index: {}]
  %s2 = inlined_call_operand.hbm [shape: f32[1,32], index: 2, kind: input, shape index: {}]
  %s3 = inlined_call_operand.hbm [shape: f32[1,32], index: 3, kind: input, shape index: {}]
  %s4 = inlined_call_operand.vmem [shape: f32[9,32,32], index: 4, kind: input, shape index: {}]
  %s5 = inlined_call_operand.hbm [shape: f32[3,32], index: 5, kind: input, shape index: {}]
  %s6 = inlined_call_operand.vmem [shape: f32[96,32], index: 6, kind: input, shape index: {}]
  %s7 = inlined_call_operand.hbm [shape: f32[1,32], index: 7, kind: input, shape index: {}]
  %s8 = inlined_call_operand.hbm [shape: f32[9,32,32], index: 8, kind: input, shape index: {}]
  %s9 = inlined_call_operand.hbm [shape: f32[3,32], index: 9, kind: input, shape index: {}]
  %s10 = inlined_call_operand.vmem [shape: f32[96,32], index: 10, kind: input, shape index: {}]
  %s11 = inlined_call_operand.hbm [shape: f32[1,32], index: 11, kind: input, shape index: {}]
  %s12 = inlined_call_operand.hbm [shape: f32[9,32,32], index: 12, kind: input, shape index: {}]
  %s13 = inlined_call_operand.vmem [shape: f32[3,32], index: 13, kind: input, shape index: {}]
  %s14 = inlined_call_operand.vmem [shape: f32[96,32], index: 14, kind: input, shape index: {}]
  %s15 = inlined_call_operand.vmem [shape: f32[1,32], index: 15, kind: input, shape index: {}]
  %s16 = inlined_call_operand.hbm [shape: f32[1,32], index: 16, kind: input, shape index: {}]
  %s17 = inlined_call_operand.hbm [shape: f32[1,32], index: 17, kind: input, shape index: {}]
  %s18 = inlined_call_operand.vmem [shape: f32[32,32], index: 18, kind: input, shape index: {}]
  %s19 = inlined_call_operand.hbm [shape: f32[1,32], index: 19, kind: input, shape index: {}]
  %s20 = inlined_call_operand.vmem [shape: f32[32,32], index: 20, kind: input, shape index: {}]
  %s21 = inlined_call_operand.hbm [shape: f32[1,32], index: 21, kind: input, shape index: {}]
  %s22 = inlined_call_operand.hbm [shape: f32[2,8,32], index: 22, kind: output, shape index: {}]
  %s23 = sld [smem:[#allocation0]]
  $region146: #{multi_conv_attention_forward.1} parent=0
    _
  %s25 = ssub.s32 1, %s23
  %s26 = scalar_select 0, %s25, %s23
  $region1: #{multi_conv_attention_forward.1} parent=0
    #allocation2 [shape = 'u8[512]{0}', space=vmem, size = 0x400, scoped, tag = 'input window, operand 2, single buffered']
    #allocation3 [shape = 's32[1]{0}', space=sflag, size = 0x4, scoped, tag = 'scoped memory for multi_conv_attention_forward.1']
    #allocation4 [shape = 's32[1]{0}', space=sflag, size = 0x4, scoped, tag = 'scoped memory for multi_conv_attention_forward.1']
    #allocation5 [shape = 'u8[512]{0}', space=vmem, size = 0x400, scoped, tag = 'input window, operand 3, single buffered']
    #allocation6 [shape = 's32[1]{0}', space=sflag, size = 0x4, scoped, tag = 'scoped memory for multi_conv_attention_forward.1']
    #allocation7 [shape = 'u8[2048]{0}', space=vmem, size = 0x800, scoped, tag = 'input window, operand 5, single buffered']
    #allocation8 [shape = 'u8[512]{0}', space=vmem, size = 0x400, scoped, tag = 'input window, operand 7, single buffered']
    #allocation9 [shape = 's32[1]{0}', space=sflag, size = 0x4, scoped, tag = 'scoped memory for multi_conv_attention_forward.1']
    #allocation10 [shape = 'u8[147456]{0}', space=vmem, size = 0x24000, scoped, tag = 'input window, operand 8, single buffered']
    #allocation11 [shape = 'u8[2048]{0}', space=vmem, size = 0x800, scoped, tag = 'input window, operand 9, single buffered']
    #allocation12 [shape = 's32[1]{0}', space=sflag, size = 0x4, scoped, tag = 'scoped memory for multi_conv_attention_forward.1']
    #allocation13 [shape = 'u8[512]{0}', space=vmem, size = 0x400, scoped, tag = 'input window, operand 11, single buffered']
    #allocation14 [shape = 'u8[147456]{0}', space=vmem, size = 0x24000, scoped, tag = 'input window, operand 12, single buffered']
    #allocation15 [shape = 's32[1]{0}', space=sflag, size = 0x4, scoped, tag = 'scoped memory for multi_conv_attention_forward.1']
    #allocation16 [shape = 'u8[512]{0}', space=vmem, size = 0x400, scoped, tag = 'input window, operand 16, single buffered']
    #allocation17 [shape = 'u8[512]{0}', space=vmem, size = 0x400, scoped, tag = 'input window, operand 17, single buffered']
    #allocation18 [shape = 's32[1]{0}', space=sflag, size = 0x4, scoped, tag = 'scoped memory for multi_conv_attention_forward.1']
    #allocation19 [shape = 'u8[512]{0}', space=vmem, size = 0x400, scoped, tag = 'input window, operand 19, single buffered']
    #allocation20 [shape = 'u8[512]{0}', space=vmem, size = 0x400, scoped, tag = 'input window, operand 21, single buffered']
    #allocation21 [shape = 's32[1]{0}', space=sflag, size = 0x4, scoped, tag = 'scoped memory for multi_conv_attention_forward.1']
    #allocation22 [shape = 'u8[8192]{0}', space=vmem, size = 0x2000, scoped, tag = 'output window, operand 0, single buffered']
    %27 = vsyncpa [#allocation3], 0
    %28 = vsyncpa [#allocation6], 0
    %29 = vsyncpa [#allocation9], 0
    %30 = vsyncpa [#allocation12], 0
    %31 = vsyncpa [#allocation15], 0
    %32 = vsyncpa [#allocation18], 0
    %33 = vsyncpa [#allocation21], 0
    %34 = vsyncpa [#allocation4], 0
    // Predicated region
    $region2: #{multi_conv_attention_forward.1} parent=1 // pred_check
      _
    $region3: #{multi_conv_attention_forward.1} parent=1 // pred_check_branch
      %36 = sbr.rel (0) target = $region5
    $region4: #{multi_conv_attention_forward.1} parent=1 // pred_region
      _
    $region5: #{multi_conv_attention_forward.1} parent=1 // pred_fallthru
      _
    // Predicated region
    $region6: #{multi_conv_attention_forward.1} parent=1 // pred_check
      _
    $region7: #{multi_conv_attention_forward.1} parent=1 // pred_check_branch
      %38 = sbr.rel (0) target = $region9
    $region8: #{multi_conv_attention_forward.1} parent=1 // pred_region
      _
    $region9: #{multi_conv_attention_forward.1} parent=1 // pred_fallthru
      _
    // Predicated region
    $region10: #{multi_conv_attention_forward.1} parent=1 // pred_check
      _
    $region11: #{multi_conv_attention_forward.1} parent=1 // pred_check_branch
      %40 = sbr.rel (0) target = $region13
    $region12: #{multi_conv_attention_forward.1} parent=1 // pred_region
      %s42 = ssub.s32 16, 16
      %43 = vsyncadd [#allocation3], %s42
      %s45 = sshll.u32 [#allocation2], 4
      %s46 = int_to_ptr.vmem [resolvable:$true] %s45
      %48 = dma.hbm_to_vmem [thread:$0]  %s2, 16, %s46, [#allocation3]
    $region13: #{multi_conv_attention_forward.1} parent=1 // pred_fallthru
      _
    // Predicated region
    $region14: #{multi_conv_attention_forward.1} parent=1 // pred_check
      _
    $region15: #{multi_conv_attention_forward.1} parent=1 // pred_check_branch
      %50 = sbr.rel (0) target = $region17
    $region16: #{multi_conv_attention_forward.1} parent=1 // pred_region
      %s52 = ssub.s32 16, 16
      %53 = vsyncadd [#allocation6], %s52
      %s55 = sshll.u32 [#allocation5], 4
      %s56 = int_to_ptr.vmem [resolvable:$true] %s55
      %58 = dma.hbm_to_vmem [thread:$0]  %s3, 16, %s56, [#allocation6]
    $region17: #{multi_conv_attention_forward.1} parent=1 // pred_fallthru
      _
    // Predicated region
    $region18: #{multi_conv_attention_forward.1} parent=1 // pred_check
      _
    $region19: #{multi_conv_attention_forward.1} parent=1 // pred_check_branch
      %60 = sbr.rel (0) target = $region21
    $region20: #{multi_conv_attention_forward.1} parent=1 // pred_region
      _
    $region21: #{multi_conv_attention_forward.1} parent=1 // pred_fallthru
      _
    // Predicated region
    $region22: #{multi_conv_attention_forward.1} parent=1 // pred_check
      _
    $region23: #{multi_conv_attention_forward.1} parent=1 // pred_check_branch
      %62 = sbr.rel (0) target = $region25
    $region24: #{multi_conv_attention_forward.1} parent=1 // pred_region
      %s64 = ssub.s32 64, 64
      %65 = vsyncadd [#allocation6], %s64
      %s67 = sshll.u32 [#allocation7], 4
      %s68 = int_to_ptr.vmem [resolvable:$true] %s67
      %70 = dma.hbm_to_vmem [thread:$0]  %s5, 64, %s68, [#allocation6]
    $region25: #{multi_conv_attention_forward.1} parent=1 // pred_fallthru
      _
    // Predicated region
    $region26: #{multi_conv_attention_forward.1} parent=1 // pred_check
      _
    $region27: #{multi_conv_attention_forward.1} parent=1 // pred_check_branch
      %72 = sbr.rel (0) target = $region29
    $region28: #{multi_conv_attention_forward.1} parent=1 // pred_region
      _
    $region29: #{multi_conv_attention_forward.1} parent=1 // pred_fallthru
      _
    // Predicated region
    $region30: #{multi_conv_attention_forward.1} parent=1 // pred_check
      _
    $region31: #{multi_conv_attention_forward.1} parent=1 // pred_check_branch
      %74 = sbr.rel (0) target = $region33
    $region32: #{multi_conv_attention_forward.1} parent=1 // pred_region
      %s76 = ssub.s32 16, 16
      %77 = vsyncadd [#allocation9], %s76
      %s79 = sshll.u32 [#allocation8], 4
      %s80 = int_to_ptr.vmem [resolvable:$true] %s79
      %82 = dma.hbm_to_vmem [thread:$0]  %s7, 16, %s80, [#allocation9]
    $region33: #{multi_conv_attention_forward.1} parent=1 // pred_fallthru
      _
    // Predicated region
    $region34: #{multi_conv_attention_forward.1} parent=1 // pred_check
      _
    $region35: #{multi_conv_attention_forward.1} parent=1 // pred_check_branch
      %84 = sbr.rel (0) target = $region37
    $region36: #{multi_conv_attention_forward.1} parent=1 // pred_region
      %s86 = ssub.s32 4608, 4608
      %87 = vsyncadd [#allocation9], %s86
      %s88 = sshll.u32 [#allocation10], 4
      %s89 = int_to_ptr.vmem [resolvable:$true] %s88
      %94 = dma.hbm_to_vmem [thread:$0]  %s8, 4608, %s89, [#allocation9], 128, 128, 8
    $region37: #{multi_conv_attention_forward.1} parent=1 // pred_fallthru
      _
    // Predicated region
    $region38: #{multi_conv_attention_forward.1} parent=1 // pred_check
      _
    $region39: #{multi_conv_attention_forward.1} parent=1 // pred_check_branch
      %96 = sbr.rel (0) target = $region41
    $region40: #{multi_conv_attention_forward.1} parent=1 // pred_region
      %s98 = ssub.s32 64, 64
      %99 = vsyncadd [#allocation12], %s98
      %s101 = sshll.u32 [#allocation11], 4
      %s102 = int_to_ptr.vmem [resolvable:$true] %s101
      %104 = dma.hbm_to_vmem [thread:$0]  %s9, 64, %s102, [#allocation12]
    $region41: #{multi_conv_attention_forward.1} parent=1 // pred_fallthru
      _
    // Predicated region
    $region42: #{multi_conv_attention_forward.1} parent=1 // pred_check
      _
    $region43: #{multi_conv_attention_forward.1} parent=1 // pred_check_branch
      %106 = sbr.rel (0) target = $region45
    $region44: #{multi_conv_attention_forward.1} parent=1 // pred_region
      _
    $region45: #{multi_conv_attention_forward.1} parent=1 // pred_fallthru
      _
    // Predicated region
    $region46: #{multi_conv_attention_forward.1} parent=1 // pred_check
      _
    $region47: #{multi_conv_attention_forward.1} parent=1 // pred_check_branch
      %108 = sbr.rel (0) target = $region49
    $region48: #{multi_conv_attention_forward.1} parent=1 // pred_region
      %s110 = ssub.s32 16, 16
      %111 = vsyncadd [#allocation12], %s110
      %s113 = sshll.u32 [#allocation13], 4
      %s114 = int_to_ptr.vmem [resolvable:$true] %s113
      %116 = dma.hbm_to_vmem [thread:$0]  %s11, 16, %s114, [#allocation12]
    $region49: #{multi_conv_attention_forward.1} parent=1 // pred_fallthru
      _
    // Predicated region
    $region50: #{multi_conv_attention_forward.1} parent=1 // pred_check
      _
    $region51: #{multi_conv_attention_forward.1} parent=1 // pred_check_branch
      %118 = sbr.rel (0) target = $region53
    $region52: #{multi_conv_attention_forward.1} parent=1 // pred_region
      %s120 = ssub.s32 4608, 4608
      %121 = vsyncadd [#allocation15], %s120
      %s122 = sshll.u32 [#allocation14], 4
      %s123 = int_to_ptr.vmem [resolvable:$true] %s122
      %128 = dma.hbm_to_vmem [thread:$0]  %s12, 4608, %s123, [#allocation15], 128, 128, 8
    $region53: #{multi_conv_attention_forward.1} parent=1 // pred_fallthru
      _
    // Predicated region
    $region54: #{multi_conv_attention_forward.1} parent=1 // pred_check
      _
    $region55: #{multi_conv_attention_forward.1} parent=1 // pred_check_branch
      %130 = sbr.rel (0) target = $region57
    $region56: #{multi_conv_attention_forward.1} parent=1 // pred_region
      _
    $region57: #{multi_conv_attention_forward.1} parent=1 // pred_fallthru
      _
    // Predicated region
    $region58: #{multi_conv_attention_forward.1} parent=1 // pred_check
      _
    $region59: #{multi_conv_attention_forward.1} parent=1 // pred_check_branch
      %132 = sbr.rel (0) target = $region61
    $region60: #{multi_conv_attention_forward.1} parent=1 // pred_region
      _
    $region61: #{multi_conv_attention_forward.1} parent=1 // pred_fallthru
      _
    // Predicated region
    $region62: #{multi_conv_attention_forward.1} parent=1 // pred_check
      _
    $region63: #{multi_conv_attention_forward.1} parent=1 // pred_check_branch
      %134 = sbr.rel (0) target = $region65
    $region64: #{multi_conv_attention_forward.1} parent=1 // pred_region
      _
    $region65: #{multi_conv_attention_forward.1} parent=1 // pred_fallthru
      _
    // Predicated region
    $region66: #{multi_conv_attention_forward.1} parent=1 // pred_check
      _
    $region67: #{multi_conv_attention_forward.1} parent=1 // pred_check_branch
      %136 = sbr.rel (0) target = $region69
    $region68: #{multi_conv_attention_forward.1} parent=1 // pred_region
      %s138 = ssub.s32 16, 16
      %139 = vsyncadd [#allocation15], %s138
      %s141 = sshll.u32 [#allocation16], 4
      %s142 = int_to_ptr.vmem [resolvable:$true] %s141
      %144 = dma.hbm_to_vmem [thread:$0]  %s16, 16, %s142, [#allocation15]
    $region69: #{multi_conv_attention_forward.1} parent=1 // pred_fallthru
      _
    // Predicated region
    $region70: #{multi_conv_attention_forward.1} parent=1 // pred_check
      _
    $region71: #{multi_conv_attention_forward.1} parent=1 // pred_check_branch
      %146 = sbr.rel (0) target = $region73
    $region72: #{multi_conv_attention_forward.1} parent=1 // pred_region
      %s148 = ssub.s32 16, 16
      %149 = vsyncadd [#allocation18], %s148
      %s151 = sshll.u32 [#allocation17], 4
      %s152 = int_to_ptr.vmem [resolvable:$true] %s151
      %154 = dma.hbm_to_vmem [thread:$0]  %s17, 16, %s152, [#allocation18]
    $region73: #{multi_conv_attention_forward.1} parent=1 // pred_fallthru
      _
    // Predicated region
    $region74: #{multi_conv_attention_forward.1} parent=1 // pred_check
      _
    $region75: #{multi_conv_attention_forward.1} parent=1 // pred_check_branch
      %156 = sbr.rel (0) target = $region77
    $region76: #{multi_conv_attention_forward.1} parent=1 // pred_region
      _
    $region77: #{multi_conv_attention_forward.1} parent=1 // pred_fallthru
      _
    // Predicated region
    $region78: #{multi_conv_attention_forward.1} parent=1 // pred_check
      _
    $region79: #{multi_conv_attention_forward.1} parent=1 // pred_check_branch
      %158 = sbr.rel (0) target = $region81
    $region80: #{multi_conv_attention_forward.1} parent=1 // pred_region
      %s160 = ssub.s32 16, 16
      %161 = vsyncadd [#allocation18], %s160
      %s163 = sshll.u32 [#allocation19], 4
      %s164 = int_to_ptr.vmem [resolvable:$true] %s163
      %166 = dma.hbm_to_vmem [thread:$0]  %s19, 16, %s164, [#allocation18]
    $region81: #{multi_conv_attention_forward.1} parent=1 // pred_fallthru
      _
    // Predicated region
    $region82: #{multi_conv_attention_forward.1} parent=1 // pred_check
      _
    $region83: #{multi_conv_attention_forward.1} parent=1 // pred_check_branch
      %168 = sbr.rel (0) target = $region85
    $region84: #{multi_conv_attention_forward.1} parent=1 // pred_region
      _
    $region85: #{multi_conv_attention_forward.1} parent=1 // pred_fallthru
      _
    // Predicated region
    $region86: #{multi_conv_attention_forward.1} parent=1 // pred_check
      _
    $region87: #{multi_conv_attention_forward.1} parent=1 // pred_check_branch
      %170 = sbr.rel (0) target = $region89
    $region88: #{multi_conv_attention_forward.1} parent=1 // pred_region
      %s172 = ssub.s32 16, 16
      %173 = vsyncadd [#allocation21], %s172
      %s175 = sshll.u32 [#allocation20], 4
      %s176 = int_to_ptr.vmem [resolvable:$true] %s175
      %178 = dma.hbm_to_vmem [thread:$0]  %s21, 16, %s176, [#allocation21]
    $region89: #{multi_conv_attention_forward.1} parent=1 // pred_fallthru
      _
    // Predicated region
    $region90: #{multi_conv_attention_forward.1} parent=1 // pred_check
      _
    $region91: #{multi_conv_attention_forward.1} parent=1 // pred_check_branch
      %180 = sbr.rel (0) target = $region93
    $region92: #{multi_conv_attention_forward.1} parent=1 // pred_region
      %181 = dma.done [#allocation3], 16
    $region93: #{multi_conv_attention_forward.1} parent=1 // pred_fallthru
      _
    // Predicated region
    $region94: #{multi_conv_attention_forward.1} parent=1 // pred_check
      _
    $region95: #{multi_conv_attention_forward.1} parent=1 // pred_check_branch
      %183 = sbr.rel (0) target = $region97
    $region96: #{multi_conv_attention_forward.1} parent=1 // pred_region
      %184 = dma.done [#allocation6], 16
    $region97: #{multi_conv_attention_forward.1} parent=1 // pred_fallthru
      _
    // Predicated region
    $region98: #{multi_conv_attention_forward.1} parent=1 // pred_check
      _
    $region99: #{multi_conv_attention_forward.1} parent=1 // pred_check_branch
      %186 = sbr.rel (0) target = $region101
    $region100: #{multi_conv_attention_forward.1} parent=1 // pred_region
      %187 = dma.done [#allocation6], 64
    $region101: #{multi_conv_attention_forward.1} parent=1 // pred_fallthru
      _
    // Predicated region
    $region102: #{multi_conv_attention_forward.1} parent=1 // pred_check
      _
    $region103: #{multi_conv_attention_forward.1} parent=1 // pred_check_branch
      %189 = sbr.rel (0) target = $region105
    $region104: #{multi_conv_attention_forward.1} parent=1 // pred_region
      %190 = dma.done [#allocation9], 16
    $region105: #{multi_conv_attention_forward.1} parent=1 // pred_fallthru
      _
    // Predicated region
    $region106: #{multi_conv_attention_forward.1} parent=1 // pred_check
      _
    $region107: #{multi_conv_attention_forward.1} parent=1 // pred_check_branch
      %192 = sbr.rel (0) target = $region109
    $region108: #{multi_conv_attention_forward.1} parent=1 // pred_region
      %193 = dma.done [#allocation9], 4608
    $region109: #{multi_conv_attention_forward.1} parent=1 // pred_fallthru
      _
    // Predicated region
    $region110: #{multi_conv_attention_forward.1} parent=1 // pred_check
      _
    $region111: #{multi_conv_attention_forward.1} parent=1 // pred_check_branch
      %195 = sbr.rel (0) target = $region113
    $region112: #{multi_conv_attention_forward.1} parent=1 // pred_region
      %196 = dma.done [#allocation12], 64
    $region113: #{multi_conv_attention_forward.1} parent=1 // pred_fallthru
      _
    // Predicated region
    $region114: #{multi_conv_attention_forward.1} parent=1 // pred_check
      _
    $region115: #{multi_conv_attention_forward.1} parent=1 // pred_check_branch
      %198 = sbr.rel (0) target = $region117
    $region116: #{multi_conv_attention_forward.1} parent=1 // pred_region
      %199 = dma.done [#allocation12], 16
    $region117: #{multi_conv_attention_forward.1} parent=1 // pred_fallthru
      _
    // Predicated region
    $region118: #{multi_conv_attention_forward.1} parent=1 // pred_check
      _
    $region119: #{multi_conv_attention_forward.1} parent=1 // pred_check_branch
      %201 = sbr.rel (0) target = $region121
    $region120: #{multi_conv_attention_forward.1} parent=1 // pred_region
      %202 = dma.done [#allocation15], 4608
    $region121: #{multi_conv_attention_forward.1} parent=1 // pred_fallthru
      _
    // Predicated region
    $region122: #{multi_conv_attention_forward.1} parent=1 // pred_check
      _
    $region123: #{multi_conv_attention_forward.1} parent=1 // pred_check_branch
      %204 = sbr.rel (0) target = $region125
    $region124: #{multi_conv_attention_forward.1} parent=1 // pred_region
      %205 = dma.done [#allocation15], 16
    $region125: #{multi_conv_attention_forward.1} parent=1 // pred_fallthru
      _
    // Predicated region
    $region126: #{multi_conv_attention_forward.1} parent=1 // pred_check
      _
    $region127: #{multi_conv_attention_forward.1} parent=1 // pred_check_branch
      %207 = sbr.rel (0) target = $region129
    $region128: #{multi_conv_attention_forward.1} parent=1 // pred_region
      %208 = dma.done [#allocation18], 16
    $region129: #{multi_conv_attention_forward.1} parent=1 // pred_fallthru
      _
    // Predicated region
    $region130: #{multi_conv_attention_forward.1} parent=1 // pred_check
      _
    $region131: #{multi_conv_attention_forward.1} parent=1 // pred_check_branch
      %210 = sbr.rel (0) target = $region133
    $region132: #{multi_conv_attention_forward.1} parent=1 // pred_region
      %211 = dma.done [#allocation18], 16
    $region133: #{multi_conv_attention_forward.1} parent=1 // pred_fallthru
      _
    // Predicated region
    $region134: #{multi_conv_attention_forward.1} parent=1 // pred_check
      _
    $region135: #{multi_conv_attention_forward.1} parent=1 // pred_check_branch
      %213 = sbr.rel (0) target = $region137
    $region136: #{multi_conv_attention_forward.1} parent=1 // pred_region
      %214 = dma.done [#allocation21], 16
    $region137: #{multi_conv_attention_forward.1} parent=1 // pred_fallthru
      _
    %v215 = vld [vmem:[%s0] sm:$0xff]
    %v216 = vld [vmem:[%s0 + $0x8] sm:$0xff]
    %v217 = vld [vmem:[#allocation2] sm:$0x1]
    %v218 = vld [vmem:[#allocation5] sm:$0x1]
    %vm219 = vcmask 261120
    %v220 = vsel %vm219, %v215, 0.0
    %221 = vadd.xlane.f32.xlu0 %v220
    %v222 = vpop.xlane.xlu0 %221
    %v223 = vsel %vm219, %v216, 0.0
    %224 = vadd.xlane.f32.xlu0 %v223
    %v225 = vpop.xlane.xlu0 %224
    %v226 = vrcp.pop 32.0
    %v227 = vmul.f32 %v222, %v226
    %v228 = vmul.f32 %v225, %v226
    %v229 = vsub.f32 %v215, %v227
    %v230 = vsub.f32 %v216, %v228
    %v231 = vmul.f32 %v229, %v229
    %v232 = vmul.f32 %v230, %v230
    %v233 = vsel %vm219, %v231, 0.0
    %234 = vadd.xlane.f32.xlu0 %v233
    %v235 = vpop.xlane.xlu0 %234
    %v236 = vsel %vm219, %v232, 0.0
    %237 = vadd.xlane.f32.xlu0 %v236
    %v238 = vpop.xlane.xlu0 %237
    %v239 = vmul.f32 %v235, %v226
    %v240 = vmul.f32 %v238, %v226
    %v241 = vadd.f32 %v239, 1e-06
    %v242 = vadd.f32 %v240, 1e-06
    %v243 = vrsqrt.pop %v241
    %v244 = vrsqrt.pop %v242
    %v245 = vmul.f32 %v229, %v243
    %v246 = vmul.f32 %v230, %v244
    %v248 = vlaneseq
    %v249 = vshrl.u32 %v248, 7
    %v250 = vsub.s32 0, %v249
    %v251 = vrot.slane %v217, %v250
    %v253 = vmul.f32 %v245, %v251
    %v254 = vmul.f32 %v246, %v251
    %v256 = vlaneseq
    %v257 = vshrl.u32 %v256, 7
    %v258 = vsub.s32 0, %v257
    %v259 = vrot.slane %v218, %v258
    %v261 = vadd.f32 %v253, %v259
    %v262 = vadd.f32 %v254, %v259
    %v265 = vrot.slane %v261, 6
    %v266 = vrot.slane %v262, 6
    %vm269 = vcmask 1041408
    %v270 = vsel %vm269, 0.0, %v265
    %v271 = vsel %vm269, 0.0, %v266
    %v272 = vsel %vm269, %v265, 0.0
    %v273 = vsel %vm269, %v266, 0.0
    %vm278 = vcmask 1045504
    %v279 = vrot.slane %v270, 2
    %v280 = vrot.slane %v272, 2
    %v281 = vsel %vm278, %v279, %v280
    %v282 = vrot.slane %v271, 2
    %v283 = vrot.slane %v273, 2
    %v284 = vsel %vm278, %v282, %v283
    %vm285 = vcmask 1046528
    %v286 = vrot.slane %v270, 1
    %v287 = vrot.slane %v272, 1
    %v288 = vsel %vm285, %v286, %v287
    %v289 = vrot.slane %v271, 1
    %v290 = vrot.slane %v273, 1
    %v291 = vsel %vm285, %v289, %v290
    %vm292 = vcmask 1044480
    %v293 = vrot.slane %v270, 3
    %v294 = vrot.slane %v272, 3
    %v295 = vsel %vm292, %v293, %v294
    %v296 = vrot.slane %v271, 3
    %v297 = vrot.slane %v273, 3
    %v298 = vsel %vm292, %v296, %v297
    %vm299 = vcmask 1043456
    %v300 = vrot.slane %v270, 4
    %v301 = vrot.slane %v272, 4
    %v302 = vsel %vm299, %v300, %v301
    %v303 = vrot.slane %v271, 4
    %v304 = vrot.slane %v273, 4
    %v305 = vsel %vm299, %v303, %v304
    %v306 = vld [vmem:[%s4] sm:$0xff]
    %v307 = vld [vmem:[%s4 + $0x8] sm:$0xff]
    %v308 = vld [vmem:[%s4 + $0x10] sm:$0xff]
    %v309 = vld [vmem:[%s4 + $0x18] sm:$0xff]
    %v310 = vld [vmem:[%s4 + $0x20] sm:$0xff]
    %v311 = vld [vmem:[%s4 + $0x28] sm:$0xff]
    %v312 = vld [vmem:[%s4 + $0x30] sm:$0xff]
    %v313 = vld [vmem:[%s4 + $0x38] sm:$0xff]
    %v314 = vld [vmem:[%s4 + $0x40] sm:$0xff]
    %v315 = vld [vmem:[%s4 + $0x48] sm:$0xff]
    %v316 = vld [vmem:[%s4 + $0x50] sm:$0xff]
    %v317 = vld [vmem:[%s4 + $0x58] sm:$0xff]
    %v318 = vld [vmem:[%s4 + $0x60] sm:$0xff]
    %v319 = vld [vmem:[%s4 + $0x68] sm:$0xff]
    %v320 = vld [vmem:[%s4 + $0x70] sm:$0xff]
    %v321 = vld [vmem:[%s4 + $0x78] sm:$0xff]
    %v322 = vld [vmem:[%s4 + $0x80] sm:$0xff]
    %v323 = vld [vmem:[%s4 + $0x88] sm:$0xff]
    %v324 = vld [vmem:[%s4 + $0x90] sm:$0xff]
    %v325 = vld [vmem:[%s4 + $0x98] sm:$0xff]
    %v326 = vld [vmem:[%s4 + $0xa0] sm:$0xff]
    %v327 = vld [vmem:[%s4 + $0xa8] sm:$0xff]
    %v328 = vld [vmem:[%s4 + $0xb0] sm:$0xff]
    %v329 = vld [vmem:[%s4 + $0xb8] sm:$0xff]
    %v330 = vld [vmem:[%s4 + $0xc0] sm:$0xff]
    %v331 = vld [vmem:[%s4 + $0xc8] sm:$0xff]
    %v332 = vld [vmem:[%s4 + $0xd0] sm:$0xff]
    %v333 = vld [vmem:[%s4 + $0xd8] sm:$0xff]
    %v334 = vld [vmem:[%s4 + $0xe0] sm:$0xff]
    %v335 = vld [vmem:[%s4 + $0xe8] sm:$0xff]
    %v336 = vld [vmem:[%s4 + $0xf0] sm:$0xff]
    %v337 = vld [vmem:[%s4 + $0xf8] sm:$0xff]
    %v338 = vld [vmem:[%s4 + $0x100] sm:$0xff]
    %v339 = vld [vmem:[%s4 + $0x108] sm:$0xff]
    %v340 = vld [vmem:[%s4 + $0x110] sm:$0xff]
    %v341 = vld [vmem:[%s4 + $0x118] sm:$0xff]
    %v342 = vld [vmem:[#allocation7] sm:$0x7]
    %v343 = vld [vmem:[%s6] sm:$0xff]
    %v344 = vld [vmem:[%s6 + $0x8] sm:$0xff]
    %v345 = vld [vmem:[%s6 + $0x10] sm:$0xff]
    %v346 = vld [vmem:[%s6 + $0x18] sm:$0xff]
    %v347 = vld [vmem:[%s6 + $0x20] sm:$0xff]
    %v348 = vld [vmem:[%s6 + $0x28] sm:$0xff]
    %v349 = vld [vmem:[%s6 + $0x30] sm:$0xff]
    %v350 = vld [vmem:[%s6 + $0x38] sm:$0xff]
    %v351 = vld [vmem:[%s6 + $0x40] sm:$0xff]
    %v352 = vld [vmem:[%s6 + $0x48] sm:$0xff]
    %v353 = vld [vmem:[%s6 + $0x50] sm:$0xff]
    %v354 = vld [vmem:[%s6 + $0x58] sm:$0xff]
    %v355 = vld [vmem:[#allocation8] sm:$0x1]
    %v356 = vsel %vm219, %v281, 0
    %v358 = vsel %vm219, %v284, 0
    %360 = vmatprep.subr.mxu0 0.0
    %361 = vmatpush1.msra.mxu0 %v306
    %362 = vmatprep.subr.mxu0 0.0
    %363 = vmatpush1.msra.mxu0 %v307
    %364 = vmatprep.subr.mxu0 0.0
    %365 = vmatpush1.msra.mxu0 %v308
    %366 = vmatprep.subr.mxu0 0.0
    %367 = vmatpush1.msra.mxu0 %v309
    %368 = vmatprep.subr.mxu0 0.0
    %369 = vmatpush1.msra.mxu0 0.0
    %370 = vmatprep.subr.mxu0 0.0
    %371 = vmatpush1.msra.mxu0 0.0
    %372 = vmatprep.subr.mxu0 0.0
    %373 = vmatpush1.msra.mxu0 0.0
    %374 = vmatprep.subr.mxu0 0.0
    %375 = vmatpush1.msra.mxu0 0.0
    %376 = vmatprep.subr.mxu0 0.0
    %377 = vmatpush1.msra.mxu0 0.0
    %378 = vmatprep.subr.mxu0 0.0
    %379 = vmatpush1.msra.mxu0 0.0
    %380 = vmatprep.subr.mxu0 0.0
    %381 = vmatpush1.msra.mxu0 0.0
    %382 = vmatprep.subr.mxu0 0.0
    %383 = vmatpush1.msra.mxu0 0.0
    %384 = vmatprep.subr.mxu0 0.0
    %385 = vmatpush1.msra.mxu0 0.0
    %386 = vmatprep.subr.mxu0 0.0
    %387 = vmatpush1.msra.mxu0 0.0
    %388 = vmatprep.subr.mxu0 0.0
    %389 = vmatpush1.msra.mxu0 0.0
    %390 = vmatprep.subr.mxu0 0.0
    %391 = vmatpush1.msra.mxu0 0.0
    %392 = vmatprep.subr.mxu0 0.0
    %393 = vmatpush1.msra.mxu0 0.0
    %394 = vmatprep.subr.mxu0 0.0
    %395 = vmatpush1.msra.mxu0 0.0
    %396 = vmatprep.subr.mxu0 0.0
    %397 = vmatpush1.msra.mxu0 0.0
    %398 = vmatprep.subr.mxu0 0.0
    %399 = vmatpush1.msra.mxu0 0.0
    %400 = vmatprep.subr.mxu0 0.0
    %401 = vmatpush1.msra.mxu0 0.0
    %402 = vmatprep.subr.mxu0 0.0
    %403 = vmatpush1.msra.mxu0 0.0
    %404 = vmatprep.subr.mxu0 0.0
    %405 = vmatpush1.msra.mxu0 0.0
    %406 = vmatprep.subr.mxu0 0.0
    %407 = vmatpush1.msra.mxu0 0.0
    %408 = vmatprep.subr.mxu0 0.0
    %409 = vmatpush1.msra.mxu0 0.0
    %410 = vmatprep.subr.mxu0 0.0
    %411 = vmatpush1.msra.mxu0 0.0
    %412 = vmatprep.subr.mxu0 0.0
    %413 = vmatpush1.msra.mxu0 0.0
    %414 = vmatprep.subr.mxu0 0.0
    %415 = vmatpush1.msra.mxu0 0.0
    %416 = vmatprep.subr.mxu0 0.0
    %417 = vmatpush1.msra.mxu0 0.0
    %418 = vmatprep.subr.mxu0 0.0
    %419 = vmatpush1.msra.mxu0 0.0
    %420 = vmatprep.subr.mxu0 0.0
    %421 = vmatpush1.msra.mxu0 0.0
    %422 = vmatprep.subr.mxu0 0.0
    %423 = vmatpush1.msra.mxu0 0.0
    %424 = vmatprep.mubr.f32.mxu0 0.0
    %425 = vmatmul.mubr.f32.gmra.mrb[0].mxu0 %v356
    %v426 = vpop.f32.mrb[0].mxu0
    %v427 = vadd.f32 0.0, %v426
    %v428 = vpop.f32.mrb[0].mxu0
    %429 = vmatprep.mubr.f32.mxu0 0.0
    %430 = vmatmul.mubr.f32.gmra.mrb[0].mxu0 %v358
    %v431 = vpop.f32.mrb[0].mxu0
    %v432 = vadd.f32 0.0, %v431
    %v433 = vpop.f32.mrb[0].mxu0
    %434 = vdwg.mxu0
    %v435 = vlaneseq
    %v436 = vshrl.u32 %v435, 7
    %v437 = vsub.s32 0, %v436
    %v438 = vrot.slane %v342, %v437
    %v439 = vadd.f32 %v438, %v427
    %v440 = vadd.f32 %v438, %v432
    %v442 = vsel %vm219, %v439, 0
    %v445 = vsel %vm219, %v440, 0
    %447 = vmatprep.subr.mxu0 0.0
    %448 = vmatpush1.msra.mxu0 %v343
    %449 = vmatprep.subr.mxu0 0.0
    %450 = vmatpush1.msra.mxu0 %v344
    %451 = vmatprep.subr.mxu0 0.0
    %452 = vmatpush1.msra.mxu0 %v345
    %453 = vmatprep.subr.mxu0 0.0
    %454 = vmatpush1.msra.mxu0 %v346
    %455 = vmatprep.subr.mxu0 0.0
    %456 = vmatpush1.msra.mxu0 0.0
    %457 = vmatprep.subr.mxu0 0.0
    %458 = vmatpush1.msra.mxu0 0.0
    %459 = vmatprep.subr.mxu0 0.0
    %460 = vmatpush1.msra.mxu0 0.0
    %461 = vmatprep.subr.mxu0 0.0
    %462 = vmatpush1.msra.mxu0 0.0
    %463 = vmatprep.subr.mxu0 0.0
    %464 = vmatpush1.msra.mxu0 0.0
    %465 = vmatprep.subr.mxu0 0.0
    %466 = vmatpush1.msra.mxu0 0.0
    %467 = vmatprep.subr.mxu0 0.0
    %468 = vmatpush1.msra.mxu0 0.0
    %469 = vmatprep.subr.mxu0 0.0
    %470 = vmatpush1.msra.mxu0 0.0
    %471 = vmatprep.subr.mxu0 0.0
    %472 = vmatpush1.msra.mxu0 0.0
    %473 = vmatprep.subr.mxu0 0.0
    %474 = vmatpush1.msra.mxu0 0.0
    %475 = vmatprep.subr.mxu0 0.0
    %476 = vmatpush1.msra.mxu0 0.0
    %477 = vmatprep.subr.mxu0 0.0
    %478 = vmatpush1.msra.mxu0 0.0
    %479 = vmatprep.subr.mxu0 0.0
    %480 = vmatpush1.msra.mxu0 0.0
    %481 = vmatprep.subr.mxu0 0.0
    %482 = vmatpush1.msra.mxu0 0.0
    %483 = vmatprep.subr.mxu0 0.0
    %484 = vmatpush1.msra.mxu0 0.0
    %485 = vmatprep.subr.mxu0 0.0
    %486 = vmatpush1.msra.mxu0 0.0
    %487 = vmatprep.subr.mxu0 0.0
    %488 = vmatpush1.msra.mxu0 0.0
    %489 = vmatprep.subr.mxu0 0.0
    %490 = vmatpush1.msra.mxu0 0.0
    %491 = vmatprep.subr.mxu0 0.0
    %492 = vmatpush1.msra.mxu0 0.0
    %493 = vmatprep.subr.mxu0 0.0
    %494 = vmatpush1.msra.mxu0 0.0
    %495 = vmatprep.subr.mxu0 0.0
    %496 = vmatpush1.msra.mxu0 0.0
    %497 = vmatprep.subr.mxu0 0.0
    %498 = vmatpush1.msra.mxu0 0.0
    %499 = vmatprep.subr.mxu0 0.0
    %500 = vmatpush1.msra.mxu0 0.0
    %501 = vmatprep.subr.mxu0 0.0
    %502 = vmatpush1.msra.mxu0 0.0
    %503 = vmatprep.subr.mxu0 0.0
    %504 = vmatpush1.msra.mxu0 0.0
    %505 = vmatprep.subr.mxu0 0.0
    %506 = vmatpush1.msra.mxu0 0.0
    %507 = vmatprep.subr.mxu0 0.0
    %508 = vmatpush1.msra.mxu0 0.0
    %509 = vmatprep.subr.mxu0 0.0
    %510 = vmatpush1.msra.mxu0 0.0
    %511 = vmatprep.mubr.f32.mxu0 0.0
    %512 = vmatmul.mubr.f32.gmra.mrb[0].mxu0 %v442
    %v513 = vpop.f32.mrb[0].mxu0
    %v514 = vadd.f32 0.0, %v513
    %v515 = vpop.f32.mrb[0].mxu0
    %516 = vmatprep.mubr.f32.mxu0 0.0
    %517 = vmatmul.mubr.f32.gmra.mrb[0].mxu0 %v445
    %v518 = vpop.f32.mrb[0].mxu0
    %v519 = vadd.f32 0.0, %v518
    %v520 = vpop.f32.mrb[0].mxu0
    %521 = vdwg.mxu0
    %v523 = vlaneseq
    %v524 = vshrl.u32 %v523, 7
    %v525 = vsub.s32 0, %v524
    %v526 = vrot.slane %v355, %v525
    %v528 = vadd.f32 %v526, %v514
    %v529 = vadd.f32 %v526, %v519
    %v530 = vsel %vm219, %v288, 0
    %v532 = vsel %vm219, %v291, 0
    %534 = vmatprep.subr.mxu0 0.0
    %535 = vmatpush1.msra.mxu0 %v310
    %536 = vmatprep.subr.mxu0 0.0
    %537 = vmatpush1.msra.mxu0 %v311
    %538 = vmatprep.subr.mxu0 0.0
    %539 = vmatpush1.msra.mxu0 %v312
    %540 = vmatprep.subr.mxu0 0.0
    %541 = vmatpush1.msra.mxu0 %v313
    %542 = vmatprep.subr.mxu0 0.0
    %543 = vmatpush1.msra.mxu0 0.0
    %544 = vmatprep.subr.mxu0 0.0
    %545 = vmatpush1.msra.mxu0 0.0
    %546 = vmatprep.subr.mxu0 0.0
    %547 = vmatpush1.msra.mxu0 0.0
    %548 = vmatprep.subr.mxu0 0.0
    %549 = vmatpush1.msra.mxu0 0.0
    %550 = vmatprep.subr.mxu0 0.0
    %551 = vmatpush1.msra.mxu0 0.0
    %552 = vmatprep.subr.mxu0 0.0
    %553 = vmatpush1.msra.mxu0 0.0
    %554 = vmatprep.subr.mxu0 0.0
    %555 = vmatpush1.msra.mxu0 0.0
    %556 = vmatprep.subr.mxu0 0.0
    %557 = vmatpush1.msra.mxu0 0.0
    %558 = vmatprep.subr.mxu0 0.0
    %559 = vmatpush1.msra.mxu0 0.0
    %560 = vmatprep.subr.mxu0 0.0
    %561 = vmatpush1.msra.mxu0 0.0
    %562 = vmatprep.subr.mxu0 0.0
    %563 = vmatpush1.msra.mxu0 0.0
    %564 = vmatprep.subr.mxu0 0.0
    %565 = vmatpush1.msra.mxu0 0.0
    %566 = vmatprep.subr.mxu0 0.0
    %567 = vmatpush1.msra.mxu0 0.0
    %568 = vmatprep.subr.mxu0 0.0
    %569 = vmatpush1.msra.mxu0 0.0
    %570 = vmatprep.subr.mxu0 0.0
    %571 = vmatpush1.msra.mxu0 0.0
    %572 = vmatprep.subr.mxu0 0.0
    %573 = vmatpush1.msra.mxu0 0.0
    %574 = vmatprep.subr.mxu0 0.0
    %575 = vmatpush1.msra.mxu0 0.0
    %576 = vmatprep.subr.mxu0 0.0
    %577 = vmatpush1.msra.mxu0 0.0
    %578 = vmatprep.subr.mxu0 0.0
    %579 = vmatpush1.msra.mxu0 0.0
    %580 = vmatprep.subr.mxu0 0.0
    %581 = vmatpush1.msra.mxu0 0.0
    %582 = vmatprep.subr.mxu0 0.0
    %583 = vmatpush1.msra.mxu0 0.0
    %584 = vmatprep.subr.mxu0 0.0
    %585 = vmatpush1.msra.mxu0 0.0
    %586 = vmatprep.subr.mxu0 0.0
    %587 = vmatpush1.msra.mxu0 0.0
    %588 = vmatprep.subr.mxu0 0.0
    %589 = vmatpush1.msra.mxu0 0.0
    %590 = vmatprep.subr.mxu0 0.0
    %591 = vmatpush1.msra.mxu0 0.0
    %592 = vmatprep.subr.mxu0 0.0
    %593 = vmatpush1.msra.mxu0 0.0
    %594 = vmatprep.subr.mxu0 0.0
    %595 = vmatpush1.msra.mxu0 0.0
    %596 = vmatprep.subr.mxu0 0.0
    %597 = vmatpush1.msra.mxu0 0.0
    %598 = vmatprep.mubr.f32.mxu0 0.0
    %599 = vmatmul.mubr.f32.gmra.mrb[0].mxu0 %v530
    %v600 = vpop.f32.mrb[0].mxu0
    %v601 = vadd.f32 0.0, %v600
    %v602 = vpop.f32.mrb[0].mxu0
    %603 = vmatprep.mubr.f32.mxu0 0.0
    %604 = vmatmul.mubr.f32.gmra.mrb[0].mxu0 %v532
    %v605 = vpop.f32.mrb[0].mxu0
    %v606 = vadd.f32 0.0, %v605
    %v607 = vpop.f32.mrb[0].mxu0
    %608 = vdwg.mxu0
    %v609 = vlaneseq
    %v610 = vshrl.u32 %v609, 7
    %v611 = vsub.s32 1, %v610
    %v612 = vrot.slane %v342, %v611
    %v613 = vadd.f32 %v612, %v601
    %v614 = vadd.f32 %v612, %v606
    %615 = vmatprep.subr.mxu0 0.0
    %616 = vmatpush1.msra.mxu0 %v314
    %617 = vmatprep.subr.mxu0 0.0
    %618 = vmatpush1.msra.mxu0 %v315
    %619 = vmatprep.subr.mxu0 0.0
    %620 = vmatpush1.msra.mxu0 %v316
    %621 = vmatprep.subr.mxu0 0.0
    %622 = vmatpush1.msra.mxu0 %v317
    %623 = vmatprep.subr.mxu0 0.0
    %624 = vmatpush1.msra.mxu0 0.0
    %625 = vmatprep.subr.mxu0 0.0
    %626 = vmatpush1.msra.mxu0 0.0
    %627 = vmatprep.subr.mxu0 0.0
    %628 = vmatpush1.msra.mxu0 0.0
    %629 = vmatprep.subr.mxu0 0.0
    %630 = vmatpush1.msra.mxu0 0.0
    %631 = vmatprep.subr.mxu0 0.0
    %632 = vmatpush1.msra.mxu0 0.0
    %633 = vmatprep.subr.mxu0 0.0
    %634 = vmatpush1.msra.mxu0 0.0
    %635 = vmatprep.subr.mxu0 0.0
    %636 = vmatpush1.msra.mxu0 0.0
    %637 = vmatprep.subr.mxu0 0.0
    %638 = vmatpush1.msra.mxu0 0.0
    %639 = vmatprep.subr.mxu0 0.0
    %640 = vmatpush1.msra.mxu0 0.0
    %641 = vmatprep.subr.mxu0 0.0
    %642 = vmatpush1.msra.mxu0 0.0
    %643 = vmatprep.subr.mxu0 0.0
    %644 = vmatpush1.msra.mxu0 0.0
    %645 = vmatprep.subr.mxu0 0.0
    %646 = vmatpush1.msra.mxu0 0.0
    %647 = vmatprep.subr.mxu0 0.0
    %648 = vmatpush1.msra.mxu0 0.0
    %649 = vmatprep.subr.mxu0 0.0
    %650 = vmatpush1.msra.mxu0 0.0
    %651 = vmatprep.subr.mxu0 0.0
    %652 = vmatpush1.msra.mxu0 0.0
    %653 = vmatprep.subr.mxu0 0.0
    %654 = vmatpush1.msra.mxu0 0.0
    %655 = vmatprep.subr.mxu0 0.0
    %656 = vmatpush1.msra.mxu0 0.0
    %657 = vmatprep.subr.mxu0 0.0
    %658 = vmatpush1.msra.mxu0 0.0
    %659 = vmatprep.subr.mxu0 0.0
    %660 = vmatpush1.msra.mxu0 0.0
    %661 = vmatprep.subr.mxu0 0.0
    %662 = vmatpush1.msra.mxu0 0.0
    %663 = vmatprep.subr.mxu0 0.0
    %664 = vmatpush1.msra.mxu0 0.0
    %665 = vmatprep.subr.mxu0 0.0
    %666 = vmatpush1.msra.mxu0 0.0
    %667 = vmatprep.subr.mxu0 0.0
    %668 = vmatpush1.msra.mxu0 0.0
    %669 = vmatprep.subr.mxu0 0.0
    %670 = vmatpush1.msra.mxu0 0.0
    %671 = vmatprep.subr.mxu0 0.0
    %672 = vmatpush1.msra.mxu0 0.0
    %673 = vmatprep.subr.mxu0 0.0
    %674 = vmatpush1.msra.mxu0 0.0
    %675 = vmatprep.subr.mxu0 0.0
    %676 = vmatpush1.msra.mxu0 0.0
    %677 = vmatprep.subr.mxu0 0.0
    %678 = vmatpush1.msra.mxu0 0.0
    %679 = vmatprep.mubr.f32.mxu0 0.0
    %680 = vmatmul.mubr.f32.gmra.mrb[0].mxu0 %v356
    %v681 = vpop.f32.mrb[0].mxu0
    %v682 = vadd.f32 0.0, %v681
    %v683 = vpop.f32.mrb[0].mxu0
    %684 = vmatprep.mubr.f32.mxu0 0.0
    %685 = vmatmul.mubr.f32.gmra.mrb[0].mxu0 %v358
    %v686 = vpop.f32.mrb[0].mxu0
    %v687 = vadd.f32 0.0, %v686
    %v688 = vpop.f32.mrb[0].mxu0
    %689 = vdwg.mxu0
    %v690 = vadd.f32 %v613, %v682
    %v691 = vadd.f32 %v614, %v687
    %v692 = vsel %vm219, %v295, 0
    %v694 = vsel %vm219, %v298, 0
    %696 = vmatprep.subr.mxu0 0.0
    %697 = vmatpush1.msra.mxu0 %v318
    %698 = vmatprep.subr.mxu0 0.0
    %699 = vmatpush1.msra.mxu0 %v319
    %700 = vmatprep.subr.mxu0 0.0
    %701 = vmatpush1.msra.mxu0 %v320
    %702 = vmatprep.subr.mxu0 0.0
    %703 = vmatpush1.msra.mxu0 %v321
    %704 = vmatprep.subr.mxu0 0.0
    %705 = vmatpush1.msra.mxu0 0.0
    %706 = vmatprep.subr.mxu0 0.0
    %707 = vmatpush1.msra.mxu0 0.0
    %708 = vmatprep.subr.mxu0 0.0
    %709 = vmatpush1.msra.mxu0 0.0
    %710 = vmatprep.subr.mxu0 0.0
    %711 = vmatpush1.msra.mxu0 0.0
    %712 = vmatprep.subr.mxu0 0.0
    %713 = vmatpush1.msra.mxu0 0.0
    %714 = vmatprep.subr.mxu0 0.0
    %715 = vmatpush1.msra.mxu0 0.0
    %716 = vmatprep.subr.mxu0 0.0
    %717 = vmatpush1.msra.mxu0 0.0
    %718 = vmatprep.subr.mxu0 0.0
    %719 = vmatpush1.msra.mxu0 0.0
    %720 = vmatprep.subr.mxu0 0.0
    %721 = vmatpush1.msra.mxu0 0.0
    %722 = vmatprep.subr.mxu0 0.0
    %723 = vmatpush1.msra.mxu0 0.0
    %724 = vmatprep.subr.mxu0 0.0
    %725 = vmatpush1.msra.mxu0 0.0
    %726 = vmatprep.subr.mxu0 0.0
    %727 = vmatpush1.msra.mxu0 0.0
    %728 = vmatprep.subr.mxu0 0.0
    %729 = vmatpush1.msra.mxu0 0.0
    %730 = vmatprep.subr.mxu0 0.0
    %731 = vmatpush1.msra.mxu0 0.0
    %732 = vmatprep.subr.mxu0 0.0
    %733 = vmatpush1.msra.mxu0 0.0
    %734 = vmatprep.subr.mxu0 0.0
    %735 = vmatpush1.msra.mxu0 0.0
    %736 = vmatprep.subr.mxu0 0.0
    %737 = vmatpush1.msra.mxu0 0.0
    %738 = vmatprep.subr.mxu0 0.0
    %739 = vmatpush1.msra.mxu0 0.0
    %740 = vmatprep.subr.mxu0 0.0
    %741 = vmatpush1.msra.mxu0 0.0
    %742 = vmatprep.subr.mxu0 0.0
    %743 = vmatpush1.msra.mxu0 0.0
    %744 = vmatprep.subr.mxu0 0.0
    %745 = vmatpush1.msra.mxu0 0.0
    %746 = vmatprep.subr.mxu0 0.0
    %747 = vmatpush1.msra.mxu0 0.0
    %748 = vmatprep.subr.mxu0 0.0
    %749 = vmatpush1.msra.mxu0 0.0
    %750 = vmatprep.subr.mxu0 0.0
    %751 = vmatpush1.msra.mxu0 0.0
    %752 = vmatprep.subr.mxu0 0.0
    %753 = vmatpush1.msra.mxu0 0.0
    %754 = vmatprep.subr.mxu0 0.0
    %755 = vmatpush1.msra.mxu0 0.0
    %756 = vmatprep.subr.mxu0 0.0
    %757 = vmatpush1.msra.mxu0 0.0
    %758 = vmatprep.subr.mxu0 0.0
    %759 = vmatpush1.msra.mxu0 0.0
    %760 = vmatprep.mubr.f32.mxu0 0.0
    %761 = vmatmul.mubr.f32.gmra.mrb[0].mxu0 %v692
    %v762 = vpop.f32.mrb[0].mxu0
    %v763 = vadd.f32 0.0, %v762
    %v764 = vpop.f32.mrb[0].mxu0
    %765 = vmatprep.mubr.f32.mxu0 0.0
    %766 = vmatmul.mubr.f32.gmra.mrb[0].mxu0 %v694
    %v767 = vpop.f32.mrb[0].mxu0
    %v768 = vadd.f32 0.0, %v767
    %v769 = vpop.f32.mrb[0].mxu0
    %770 = vdwg.mxu0
    %v771 = vadd.f32 %v690, %v763
    %v772 = vadd.f32 %v691, %v768
    %v774 = vsel %vm219, %v771, 0
    %v777 = vsel %vm219, %v772, 0
    %779 = vmatprep.subr.mxu0 0.0
    %780 = vmatpush1.msra.mxu0 %v347
    %781 = vmatprep.subr.mxu0 0.0
    %782 = vmatpush1.msra.mxu0 %v348
    %783 = vmatprep.subr.mxu0 0.0
    %784 = vmatpush1.msra.mxu0 %v349
    %785 = vmatprep.subr.mxu0 0.0
    %786 = vmatpush1.msra.mxu0 %v350
    %787 = vmatprep.subr.mxu0 0.0
    %788 = vmatpush1.msra.mxu0 0.0
    %789 = vmatprep.subr.mxu0 0.0
    %790 = vmatpush1.msra.mxu0 0.0
    %791 = vmatprep.subr.mxu0 0.0
    %792 = vmatpush1.msra.mxu0 0.0
    %793 = vmatprep.subr.mxu0 0.0
    %794 = vmatpush1.msra.mxu0 0.0
    %795 = vmatprep.subr.mxu0 0.0
    %796 = vmatpush1.msra.mxu0 0.0
    %797 = vmatprep.subr.mxu0 0.0
    %798 = vmatpush1.msra.mxu0 0.0
    %799 = vmatprep.subr.mxu0 0.0
    %800 = vmatpush1.msra.mxu0 0.0
    %801 = vmatprep.subr.mxu0 0.0
    %802 = vmatpush1.msra.mxu0 0.0
    %803 = vmatprep.subr.mxu0 0.0
    %804 = vmatpush1.msra.mxu0 0.0
    %805 = vmatprep.subr.mxu0 0.0
    %806 = vmatpush1.msra.mxu0 0.0
    %807 = vmatprep.subr.mxu0 0.0
    %808 = vmatpush1.msra.mxu0 0.0
    %809 = vmatprep.subr.mxu0 0.0
    %810 = vmatpush1.msra.mxu0 0.0
    %811 = vmatprep.subr.mxu0 0.0
    %812 = vmatpush1.msra.mxu0 0.0
    %813 = vmatprep.subr.mxu0 0.0
    %814 = vmatpush1.msra.mxu0 0.0
    %815 = vmatprep.subr.mxu0 0.0
    %816 = vmatpush1.msra.mxu0 0.0
    %817 = vmatprep.subr.mxu0 0.0
    %818 = vmatpush1.msra.mxu0 0.0
    %819 = vmatprep.subr.mxu0 0.0
    %820 = vmatpush1.msra.mxu0 0.0
    %821 = vmatprep.subr.mxu0 0.0
    %822 = vmatpush1.msra.mxu0 0.0
    %823 = vmatprep.subr.mxu0 0.0
    %824 = vmatpush1.msra.mxu0 0.0
    %825 = vmatprep.subr.mxu0 0.0
    %826 = vmatpush1.msra.mxu0 0.0
    %827 = vmatprep.subr.mxu0 0.0
    %828 = vmatpush1.msra.mxu0 0.0
    %829 = vmatprep.subr.mxu0 0.0
    %830 = vmatpush1.msra.mxu0 0.0
    %831 = vmatprep.subr.mxu0 0.0
    %832 = vmatpush1.msra.mxu0 0.0
    %833 = vmatprep.subr.mxu0 0.0
    %834 = vmatpush1.msra.mxu0 0.0
    %835 = vmatprep.subr.mxu0 0.0
    %836 = vmatpush1.msra.mxu0 0.0
    %837 = vmatprep.subr.mxu0 0.0
    %838 = vmatpush1.msra.mxu0 0.0
    %839 = vmatprep.subr.mxu0 0.0
    %840 = vmatpush1.msra.mxu0 0.0
    %841 = vmatprep.subr.mxu0 0.0
    %842 = vmatpush1.msra.mxu0 0.0
    %843 = vmatprep.mubr.f32.mxu0 0.0
    %844 = vmatmul.mubr.f32.gmra.mrb[0].mxu0 %v774
    %v845 = vpop.f32.mrb[0].mxu0
    %v846 = vadd.f32 0.0, %v845
    %v847 = vpop.f32.mrb[0].mxu0
    %848 = vmatprep.mubr.f32.mxu0 0.0
    %849 = vmatmul.mubr.f32.gmra.mrb[0].mxu0 %v777
    %v850 = vpop.f32.mrb[0].mxu0
    %v851 = vadd.f32 0.0, %v850
    %v852 = vpop.f32.mrb[0].mxu0
    %853 = vdwg.mxu0
    %v854 = vadd.f32 %v528, %v846
    %v855 = vadd.f32 %v529, %v851
    %v856 = vsel %vm219, %v270, 0
    %v858 = vsel %vm219, %v271, 0
    %860 = vmatprep.subr.mxu0 0.0
    %861 = vmatpush1.msra.mxu0 %v322
    %862 = vmatprep.subr.mxu0 0.0
    %863 = vmatpush1.msra.mxu0 %v323
    %864 = vmatprep.subr.mxu0 0.0
    %865 = vmatpush1.msra.mxu0 %v324
    %866 = vmatprep.subr.mxu0 0.0
    %867 = vmatpush1.msra.mxu0 %v325
    %868 = vmatprep.subr.mxu0 0.0
    %869 = vmatpush1.msra.mxu0 0.0
    %870 = vmatprep.subr.mxu0 0.0
    %871 = vmatpush1.msra.mxu0 0.0
    %872 = vmatprep.subr.mxu0 0.0
    %873 = vmatpush1.msra.mxu0 0.0
    %874 = vmatprep.subr.mxu0 0.0
    %875 = vmatpush1.msra.mxu0 0.0
    %876 = vmatprep.subr.mxu0 0.0
    %877 = vmatpush1.msra.mxu0 0.0
    %878 = vmatprep.subr.mxu0 0.0
    %879 = vmatpush1.msra.mxu0 0.0
    %880 = vmatprep.subr.mxu0 0.0
    %881 = vmatpush1.msra.mxu0 0.0
    %882 = vmatprep.subr.mxu0 0.0
    %883 = vmatpush1.msra.mxu0 0.0
    %884 = vmatprep.subr.mxu0 0.0
    %885 = vmatpush1.msra.mxu0 0.0
    %886 = vmatprep.subr.mxu0 0.0
    %887 = vmatpush1.msra.mxu0 0.0
    %888 = vmatprep.subr.mxu0 0.0
    %889 = vmatpush1.msra.mxu0 0.0
    %890 = vmatprep.subr.mxu0 0.0
    %891 = vmatpush1.msra.mxu0 0.0
    %892 = vmatprep.subr.mxu0 0.0
    %893 = vmatpush1.msra.mxu0 0.0
    %894 = vmatprep.subr.mxu0 0.0
    %895 = vmatpush1.msra.mxu0 0.0
    %896 = vmatprep.subr.mxu0 0.0
    %897 = vmatpush1.msra.mxu0 0.0
    %898 = vmatprep.subr.mxu0 0.0
    %899 = vmatpush1.msra.mxu0 0.0
    %900 = vmatprep.subr.mxu0 0.0
    %901 = vmatpush1.msra.mxu0 0.0
    %902 = vmatprep.subr.mxu0 0.0
    %903 = vmatpush1.msra.mxu0 0.0
    %904 = vmatprep.subr.mxu0 0.0
    %905 = vmatpush1.msra.mxu0 0.0
    %906 = vmatprep.subr.mxu0 0.0
    %907 = vmatpush1.msra.mxu0 0.0
    %908 = vmatprep.subr.mxu0 0.0
    %909 = vmatpush1.msra.mxu0 0.0
    %910 = vmatprep.subr.mxu0 0.0
    %911 = vmatpush1.msra.mxu0 0.0
    %912 = vmatprep.subr.mxu0 0.0
    %913 = vmatpush1.msra.mxu0 0.0
    %914 = vmatprep.subr.mxu0 0.0
    %915 = vmatpush1.msra.mxu0 0.0
    %916 = vmatprep.subr.mxu0 0.0
    %917 = vmatpush1.msra.mxu0 0.0
    %918 = vmatprep.subr.mxu0 0.0
    %919 = vmatpush1.msra.mxu0 0.0
    %920 = vmatprep.subr.mxu0 0.0
    %921 = vmatpush1.msra.mxu0 0.0
    %922 = vmatprep.subr.mxu0 0.0
    %923 = vmatpush1.msra.mxu0 0.0
    %924 = vmatprep.mubr.f32.mxu0 0.0
    %925 = vmatmul.mubr.f32.gmra.mrb[0].mxu0 %v856
    %v926 = vpop.f32.mrb[0].mxu0
    %v927 = vadd.f32 0.0, %v926
    %v928 = vpop.f32.mrb[0].mxu0
    %929 = vmatprep.mubr.f32.mxu0 0.0
    %930 = vmatmul.mubr.f32.gmra.mrb[0].mxu0 %v858
    %v931 = vpop.f32.mrb[0].mxu0
    %v932 = vadd.f32 0.0, %v931
    %v933 = vpop.f32.mrb[0].mxu0
    %934 = vdwg.mxu0
    %v935 = vlaneseq
    %v936 = vshrl.u32 %v935, 7
    %v937 = vsub.s32 2, %v936
    %v938 = vrot.slane %v342, %v937
    %v939 = vadd.f32 %v938, %v927
    %v940 = vadd.f32 %v938, %v932
    %941 = vmatprep.subr.mxu0 0.0
    %942 = vmatpush1.msra.mxu0 %v326
    %943 = vmatprep.subr.mxu0 0.0
    %944 = vmatpush1.msra.mxu0 %v327
    %945 = vmatprep.subr.mxu0 0.0
    %946 = vmatpush1.msra.mxu0 %v328
    %947 = vmatprep.subr.mxu0 0.0
    %948 = vmatpush1.msra.mxu0 %v329
    %949 = vmatprep.subr.mxu0 0.0
    %950 = vmatpush1.msra.mxu0 0.0
    %951 = vmatprep.subr.mxu0 0.0
    %952 = vmatpush1.msra.mxu0 0.0
    %953 = vmatprep.subr.mxu0 0.0
    %954 = vmatpush1.msra.mxu0 0.0
    %955 = vmatprep.subr.mxu0 0.0
    %956 = vmatpush1.msra.mxu0 0.0
    %957 = vmatprep.subr.mxu0 0.0
    %958 = vmatpush1.msra.mxu0 0.0
    %959 = vmatprep.subr.mxu0 0.0
    %960 = vmatpush1.msra.mxu0 0.0
    %961 = vmatprep.subr.mxu0 0.0
    %962 = vmatpush1.msra.mxu0 0.0
    %963 = vmatprep.subr.mxu0 0.0
    %964 = vmatpush1.msra.mxu0 0.0
    %965 = vmatprep.subr.mxu0 0.0
    %966 = vmatpush1.msra.mxu0 0.0
    %967 = vmatprep.subr.mxu0 0.0
    %968 = vmatpush1.msra.mxu0 0.0
    %969 = vmatprep.subr.mxu0 0.0
    %970 = vmatpush1.msra.mxu0 0.0
    %971 = vmatprep.subr.mxu0 0.0
    %972 = vmatpush1.msra.mxu0 0.0
    %973 = vmatprep.subr.mxu0 0.0
    %974 = vmatpush1.msra.mxu0 0.0
    %975 = vmatprep.subr.mxu0 0.0
    %976 = vmatpush1.msra.mxu0 0.0
    %977 = vmatprep.subr.mxu0 0.0
    %978 = vmatpush1.msra.mxu0 0.0
    %979 = vmatprep.subr.mxu0 0.0
    %980 = vmatpush1.msra.mxu0 0.0
    %981 = vmatprep.subr.mxu0 0.0
    %982 = vmatpush1.msra.mxu0 0.0
    %983 = vmatprep.subr.mxu0 0.0
    %984 = vmatpush1.msra.mxu0 0.0
    %985 = vmatprep.subr.mxu0 0.0
    %986 = vmatpush1.msra.mxu0 0.0
    %987 = vmatprep.subr.mxu0 0.0
    %988 = vmatpush1.msra.mxu0 0.0
    %989 = vmatprep.subr.mxu0 0.0
    %990 = vmatpush1.msra.mxu0 0.0
    %991 = vmatprep.subr.mxu0 0.0
    %992 = vmatpush1.msra.mxu0 0.0
    %993 = vmatprep.subr.mxu0 0.0
    %994 = vmatpush1.msra.mxu0 0.0
    %995 = vmatprep.subr.mxu0 0.0
    %996 = vmatpush1.msra.mxu0 0.0
    %997 = vmatprep.subr.mxu0 0.0
    %998 = vmatpush1.msra.mxu0 0.0
    %999 = vmatprep.subr.mxu0 0.0
    %1000 = vmatpush1.msra.mxu0 0.0
    %1001 = vmatprep.subr.mxu0 0.0
    %1002 = vmatpush1.msra.mxu0 0.0
    %1003 = vmatprep.subr.mxu0 0.0
    %1004 = vmatpush1.msra.mxu0 0.0
    %1005 = vmatprep.mubr.f32.mxu0 0.0
    %1006 = vmatmul.mubr.f32.gmra.mrb[0].mxu0 %v530
    %v1007 = vpop.f32.mrb[0].mxu0
    %v1008 = vadd.f32 0.0, %v1007
    %v1009 = vpop.f32.mrb[0].mxu0
    %1010 = vmatprep.mubr.f32.mxu0 0.0
    %1011 = vmatmul.mubr.f32.gmra.mrb[0].mxu0 %v532
    %v1012 = vpop.f32.mrb[0].mxu0
    %v1013 = vadd.f32 0.0, %v1012
    %v1014 = vpop.f32.mrb[0].mxu0
    %1015 = vdwg.mxu0
    %v1016 = vadd.f32 %v939, %v1008
    %v1017 = vadd.f32 %v940, %v1013
    %1018 = vmatprep.subr.mxu0 0.0
    %1019 = vmatpush1.msra.mxu0 %v330
    %1020 = vmatprep.subr.mxu0 0.0
    %1021 = vmatpush1.msra.mxu0 %v331
    %1022 = vmatprep.subr.mxu0 0.0
    %1023 = vmatpush1.msra.mxu0 %v332
    %1024 = vmatprep.subr.mxu0 0.0
    %1025 = vmatpush1.msra.mxu0 %v333
    %1026 = vmatprep.subr.mxu0 0.0
    %1027 = vmatpush1.msra.mxu0 0.0
    %1028 = vmatprep.subr.mxu0 0.0
    %1029 = vmatpush1.msra.mxu0 0.0
    %1030 = vmatprep.subr.mxu0 0.0
    %1031 = vmatpush1.msra.mxu0 0.0
    %1032 = vmatprep.subr.mxu0 0.0
    %1033 = vmatpush1.msra.mxu0 0.0
    %1034 = vmatprep.subr.mxu0 0.0
    %1035 = vmatpush1.msra.mxu0 0.0
    %1036 = vmatprep.subr.mxu0 0.0
    %1037 = vmatpush1.msra.mxu0 0.0
    %1038 = vmatprep.subr.mxu0 0.0
    %1039 = vmatpush1.msra.mxu0 0.0
    %1040 = vmatprep.subr.mxu0 0.0
    %1041 = vmatpush1.msra.mxu0 0.0
    %1042 = vmatprep.subr.mxu0 0.0
    %1043 = vmatpush1.msra.mxu0 0.0
    %1044 = vmatprep.subr.mxu0 0.0
    %1045 = vmatpush1.msra.mxu0 0.0
    %1046 = vmatprep.subr.mxu0 0.0
    %1047 = vmatpush1.msra.mxu0 0.0
    %1048 = vmatprep.subr.mxu0 0.0
    %1049 = vmatpush1.msra.mxu0 0.0
    %1050 = vmatprep.subr.mxu0 0.0
    %1051 = vmatpush1.msra.mxu0 0.0
    %1052 = vmatprep.subr.mxu0 0.0
    %1053 = vmatpush1.msra.mxu0 0.0
    %1054 = vmatprep.subr.mxu0 0.0
    %1055 = vmatpush1.msra.mxu0 0.0
    %1056 = vmatprep.subr.mxu0 0.0
    %1057 = vmatpush1.msra.mxu0 0.0
    %1058 = vmatprep.subr.mxu0 0.0
    %1059 = vmatpush1.msra.mxu0 0.0
    %1060 = vmatprep.subr.mxu0 0.0
    %1061 = vmatpush1.msra.mxu0 0.0
    %1062 = vmatprep.subr.mxu0 0.0
    %1063 = vmatpush1.msra.mxu0 0.0
    %1064 = vmatprep.subr.mxu0 0.0
    %1065 = vmatpush1.msra.mxu0 0.0
    %1066 = vmatprep.subr.mxu0 0.0
    %1067 = vmatpush1.msra.mxu0 0.0
    %1068 = vmatprep.subr.mxu0 0.0
    %1069 = vmatpush1.msra.mxu0 0.0
    %1070 = vmatprep.subr.mxu0 0.0
    %1071 = vmatpush1.msra.mxu0 0.0
    %1072 = vmatprep.subr.mxu0 0.0
    %1073 = vmatpush1.msra.mxu0 0.0
    %1074 = vmatprep.subr.mxu0 0.0
    %1075 = vmatpush1.msra.mxu0 0.0
    %1076 = vmatprep.subr.mxu0 0.0
    %1077 = vmatpush1.msra.mxu0 0.0
    %1078 = vmatprep.subr.mxu0 0.0
    %1079 = vmatpush1.msra.mxu0 0.0
    %1080 = vmatprep.subr.mxu0 0.0
    %1081 = vmatpush1.msra.mxu0 0.0
    %1082 = vmatprep.mubr.f32.mxu0 0.0
    %1083 = vmatmul.mubr.f32.gmra.mrb[0].mxu0 %v356
    %v1084 = vpop.f32.mrb[0].mxu0
    %v1085 = vadd.f32 0.0, %v1084
    %v1086 = vpop.f32.mrb[0].mxu0
    %1087 = vmatprep.mubr.f32.mxu0 0.0
    %1088 = vmatmul.mubr.f32.gmra.mrb[0].mxu0 %v358
    %v1089 = vpop.f32.mrb[0].mxu0
    %v1090 = vadd.f32 0.0, %v1089
    %v1091 = vpop.f32.mrb[0].mxu0
    %1092 = vdwg.mxu0
    %v1093 = vadd.f32 %v1016, %v1085
    %v1094 = vadd.f32 %v1017, %v1090
    %1095 = vmatprep.subr.mxu0 0.0
    %1096 = vmatpush1.msra.mxu0 %v334
    %1097 = vmatprep.subr.mxu0 0.0
    %1098 = vmatpush1.msra.mxu0 %v335
    %1099 = vmatprep.subr.mxu0 0.0
    %1100 = vmatpush1.msra.mxu0 %v336
    %1101 = vmatprep.subr.mxu0 0.0
    %1102 = vmatpush1.msra.mxu0 %v337
    %1103 = vmatprep.subr.mxu0 0.0
    %1104 = vmatpush1.msra.mxu0 0.0
    %1105 = vmatprep.subr.mxu0 0.0
    %1106 = vmatpush1.msra.mxu0 0.0
    %1107 = vmatprep.subr.mxu0 0.0
    %1108 = vmatpush1.msra.mxu0 0.0
    %1109 = vmatprep.subr.mxu0 0.0
    %1110 = vmatpush1.msra.mxu0 0.0
    %1111 = vmatprep.subr.mxu0 0.0
    %1112 = vmatpush1.msra.mxu0 0.0
    %1113 = vmatprep.subr.mxu0 0.0
    %1114 = vmatpush1.msra.mxu0 0.0
    %1115 = vmatprep.subr.mxu0 0.0
    %1116 = vmatpush1.msra.mxu0 0.0
    %1117 = vmatprep.subr.mxu0 0.0
    %1118 = vmatpush1.msra.mxu0 0.0
    %1119 = vmatprep.subr.mxu0 0.0
    %1120 = vmatpush1.msra.mxu0 0.0
    %1121 = vmatprep.subr.mxu0 0.0
    %1122 = vmatpush1.msra.mxu0 0.0
    %1123 = vmatprep.subr.mxu0 0.0
    %1124 = vmatpush1.msra.mxu0 0.0
    %1125 = vmatprep.subr.mxu0 0.0
    %1126 = vmatpush1.msra.mxu0 0.0
    %1127 = vmatprep.subr.mxu0 0.0
    %1128 = vmatpush1.msra.mxu0 0.0
    %1129 = vmatprep.subr.mxu0 0.0
    %1130 = vmatpush1.msra.mxu0 0.0
    %1131 = vmatprep.subr.mxu0 0.0
    %1132 = vmatpush1.msra.mxu0 0.0
    %1133 = vmatprep.subr.mxu0 0.0
    %1134 = vmatpush1.msra.mxu0 0.0
    %1135 = vmatprep.subr.mxu0 0.0
    %1136 = vmatpush1.msra.mxu0 0.0
    %1137 = vmatprep.subr.mxu0 0.0
    %1138 = vmatpush1.msra.mxu0 0.0
    %1139 = vmatprep.subr.mxu0 0.0
    %1140 = vmatpush1.msra.mxu0 0.0
    %1141 = vmatprep.subr.mxu0 0.0
    %1142 = vmatpush1.msra.mxu0 0.0
    %1143 = vmatprep.subr.mxu0 0.0
    %1144 = vmatpush1.msra.mxu0 0.0
    %1145 = vmatprep.subr.mxu0 0.0
    %1146 = vmatpush1.msra.mxu0 0.0
    %1147 = vmatprep.subr.mxu0 0.0
    %1148 = vmatpush1.msra.mxu0 0.0
    %1149 = vmatprep.subr.mxu0 0.0
    %1150 = vmatpush1.msra.mxu0 0.0
    %1151 = vmatprep.subr.mxu0 0.0
    %1152 = vmatpush1.msra.mxu0 0.0
    %1153 = vmatprep.subr.mxu0 0.0
    %1154 = vmatpush1.msra.mxu0 0.0
    %1155 = vmatprep.subr.mxu0 0.0
    %1156 = vmatpush1.msra.mxu0 0.0
    %1157 = vmatprep.subr.mxu0 0.0
    %1158 = vmatpush1.msra.mxu0 0.0
    %1159 = vmatprep.mubr.f32.mxu0 0.0
    %1160 = vmatmul.mubr.f32.gmra.mrb[0].mxu0 %v692
    %v1161 = vpop.f32.mrb[0].mxu0
    %v1162 = vadd.f32 0.0, %v1161
    %v1163 = vpop.f32.mrb[0].mxu0
    %1164 = vmatprep.mubr.f32.mxu0 0.0
    %1165 = vmatmul.mubr.f32.gmra.mrb[0].mxu0 %v694
    %v1166 = vpop.f32.mrb[0].mxu0
    %v1167 = vadd.f32 0.0, %v1166
    %v1168 = vpop.f32.mrb[0].mxu0
    %1169 = vdwg.mxu0
    %v1170 = vadd.f32 %v1093, %v1162
    %v1171 = vadd.f32 %v1094, %v1167
    %v1172 = vsel %vm219, %v302, 0
    %v1174 = vsel %vm219, %v305, 0
    %1176 = vmatprep.subr.mxu0 0.0
    %1177 = vmatpush1.msra.mxu0 %v338
    %1178 = vmatprep.subr.mxu0 0.0
    %1179 = vmatpush1.msra.mxu0 %v339
    %1180 = vmatprep.subr.mxu0 0.0
    %1181 = vmatpush1.msra.mxu0 %v340
    %1182 = vmatprep.subr.mxu0 0.0
    %1183 = vmatpush1.msra.mxu0 %v341
    %1184 = vmatprep.subr.mxu0 0.0
    %1185 = vmatpush1.msra.mxu0 0.0
    %1186 = vmatprep.subr.mxu0 0.0
    %1187 = vmatpush1.msra.mxu0 0.0
    %1188 = vmatprep.subr.mxu0 0.0
    %1189 = vmatpush1.msra.mxu0 0.0
    %1190 = vmatprep.subr.mxu0 0.0
    %1191 = vmatpush1.msra.mxu0 0.0
    %1192 = vmatprep.subr.mxu0 0.0
    %1193 = vmatpush1.msra.mxu0 0.0
    %1194 = vmatprep.subr.mxu0 0.0
    %1195 = vmatpush1.msra.mxu0 0.0
    %1196 = vmatprep.subr.mxu0 0.0
    %1197 = vmatpush1.msra.mxu0 0.0
    %1198 = vmatprep.subr.mxu0 0.0
    %1199 = vmatpush1.msra.mxu0 0.0
    %1200 = vmatprep.subr.mxu0 0.0
    %1201 = vmatpush1.msra.mxu0 0.0
    %1202 = vmatprep.subr.mxu0 0.0
    %1203 = vmatpush1.msra.mxu0 0.0
    %1204 = vmatprep.subr.mxu0 0.0
    %1205 = vmatpush1.msra.mxu0 0.0
    %1206 = vmatprep.subr.mxu0 0.0
    %1207 = vmatpush1.msra.mxu0 0.0
    %1208 = vmatprep.subr.mxu0 0.0
    %1209 = vmatpush1.msra.mxu0 0.0
    %1210 = vmatprep.subr.mxu0 0.0
    %1211 = vmatpush1.msra.mxu0 0.0
    %1212 = vmatprep.subr.mxu0 0.0
    %1213 = vmatpush1.msra.mxu0 0.0
    %1214 = vmatprep.subr.mxu0 0.0
    %1215 = vmatpush1.msra.mxu0 0.0
    %1216 = vmatprep.subr.mxu0 0.0
    %1217 = vmatpush1.msra.mxu0 0.0
    %1218 = vmatprep.subr.mxu0 0.0
    %1219 = vmatpush1.msra.mxu0 0.0
    %1220 = vmatprep.subr.mxu0 0.0
    %1221 = vmatpush1.msra.mxu0 0.0
    %1222 = vmatprep.subr.mxu0 0.0
    %1223 = vmatpush1.msra.mxu0 0.0
    %1224 = vmatprep.subr.mxu0 0.0
    %1225 = vmatpush1.msra.mxu0 0.0
    %1226 = vmatprep.subr.mxu0 0.0
    %1227 = vmatpush1.msra.mxu0 0.0
    %1228 = vmatprep.subr.mxu0 0.0
    %1229 = vmatpush1.msra.mxu0 0.0
    %1230 = vmatprep.subr.mxu0 0.0
    %1231 = vmatpush1.msra.mxu0 0.0
    %1232 = vmatprep.subr.mxu0 0.0
    %1233 = vmatpush1.msra.mxu0 0.0
    %1234 = vmatprep.subr.mxu0 0.0
    %1235 = vmatpush1.msra.mxu0 0.0
    %1236 = vmatprep.subr.mxu0 0.0
    %1237 = vmatpush1.msra.mxu0 0.0
    %1238 = vmatprep.subr.mxu0 0.0
    %1239 = vmatpush1.msra.mxu0 0.0
    %1240 = vmatprep.mubr.f32.mxu0 0.0
    %1241 = vmatmul.mubr.f32.gmra.mrb[0].mxu0 %v1172
    %v1242 = vpop.f32.mrb[0].mxu0
    %v1243 = vadd.f32 0.0, %v1242
    %v1244 = vpop.f32.mrb[0].mxu0
    %1245 = vmatprep.mubr.f32.mxu0 0.0
    %1246 = vmatmul.mubr.f32.gmra.mrb[0].mxu0 %v1174
    %v1247 = vpop.f32.mrb[0].mxu0
    %v1248 = vadd.f32 0.0, %v1247
    %v1249 = vpop.f32.mrb[0].mxu0
    %1250 = vdwg.mxu0
    %v1251 = vadd.f32 %v1170, %v1243
    %v1252 = vadd.f32 %v1171, %v1248
    %v1254 = vsel %vm219, %v1251, 0
    %v1257 = vsel %vm219, %v1252, 0
    %1259 = vmatprep.subr.mxu0 0.0
    %1260 = vmatpush1.msra.mxu0 %v351
    %1261 = vmatprep.subr.mxu0 0.0
    %1262 = vmatpush1.msra.mxu0 %v352
    %1263 = vmatprep.subr.mxu0 0.0
    %1264 = vmatpush1.msra.mxu0 %v353
    %1265 = vmatprep.subr.mxu0 0.0
    %1266 = vmatpush1.msra.mxu0 %v354
    %1267 = vmatprep.subr.mxu0 0.0
    %1268 = vmatpush1.msra.mxu0 0.0
    %1269 = vmatprep.subr.mxu0 0.0
    %1270 = vmatpush1.msra.mxu0 0.0
    %1271 = vmatprep.subr.mxu0 0.0
    %1272 = vmatpush1.msra.mxu0 0.0
    %1273 = vmatprep.subr.mxu0 0.0
    %1274 = vmatpush1.msra.mxu0 0.0
    %1275 = vmatprep.subr.mxu0 0.0
    %1276 = vmatpush1.msra.mxu0 0.0
    %1277 = vmatprep.subr.mxu0 0.0
    %1278 = vmatpush1.msra.mxu0 0.0
    %1279 = vmatprep.subr.mxu0 0.0
    %1280 = vmatpush1.msra.mxu0 0.0
    %1281 = vmatprep.subr.mxu0 0.0
    %1282 = vmatpush1.msra.mxu0 0.0
    %1283 = vmatprep.subr.mxu0 0.0
    %1284 = vmatpush1.msra.mxu0 0.0
    %1285 = vmatprep.subr.mxu0 0.0
    %1286 = vmatpush1.msra.mxu0 0.0
    %1287 = vmatprep.subr.mxu0 0.0
    %1288 = vmatpush1.msra.mxu0 0.0
    %1289 = vmatprep.subr.mxu0 0.0
    %1290 = vmatpush1.msra.mxu0 0.0
    %1291 = vmatprep.subr.mxu0 0.0
    %1292 = vmatpush1.msra.mxu0 0.0
    %1293 = vmatprep.subr.mxu0 0.0
    %1294 = vmatpush1.msra.mxu0 0.0
    %1295 = vmatprep.subr.mxu0 0.0
    %1296 = vmatpush1.msra.mxu0 0.0
    %1297 = vmatprep.subr.mxu0 0.0
    %1298 = vmatpush1.msra.mxu0 0.0
    %1299 = vmatprep.subr.mxu0 0.0
    %1300 = vmatpush1.msra.mxu0 0.0
    %1301 = vmatprep.subr.mxu0 0.0
    %1302 = vmatpush1.msra.mxu0 0.0
    %1303 = vmatprep.subr.mxu0 0.0
    %1304 = vmatpush1.msra.mxu0 0.0
    %1305 = vmatprep.subr.mxu0 0.0
    %1306 = vmatpush1.msra.mxu0 0.0
    %1307 = vmatprep.subr.mxu0 0.0
    %1308 = vmatpush1.msra.mxu0 0.0
    %1309 = vmatprep.subr.mxu0 0.0
    %1310 = vmatpush1.msra.mxu0 0.0
    %1311 = vmatprep.subr.mxu0 0.0
    %1312 = vmatpush1.msra.mxu0 0.0
    %1313 = vmatprep.subr.mxu0 0.0
    %1314 = vmatpush1.msra.mxu0 0.0
    %1315 = vmatprep.subr.mxu0 0.0
    %1316 = vmatpush1.msra.mxu0 0.0
    %1317 = vmatprep.subr.mxu0 0.0
    %1318 = vmatpush1.msra.mxu0 0.0
    %1319 = vmatprep.subr.mxu0 0.0
    %1320 = vmatpush1.msra.mxu0 0.0
    %1321 = vmatprep.subr.mxu0 0.0
    %1322 = vmatpush1.msra.mxu0 0.0
    %1323 = vmatprep.mubr.f32.mxu0 0.0
    %1324 = vmatmul.mubr.f32.gmra.mrb[0].mxu0 %v1254
    %v1325 = vpop.f32.mrb[0].mxu0
    %v1326 = vadd.f32 0.0, %v1325
    %v1327 = vpop.f32.mrb[0].mxu0
    %1328 = vmatprep.mubr.f32.mxu0 0.0
    %1329 = vmatmul.mubr.f32.gmra.mrb[0].mxu0 %v1257
    %v1330 = vpop.f32.mrb[0].mxu0
    %v1331 = vadd.f32 0.0, %v1330
    %v1332 = vpop.f32.mrb[0].mxu0
    %1333 = vdwg.mxu0
    %v1334 = vadd.f32 %v854, %v1326
    %v1335 = vadd.f32 %v855, %v1331
    %v1336 = vld [vmem:[#allocation10] sm:$0xff]
    %v1337 = vld [vmem:[#allocation10 + $0x8] sm:$0xff]
    %v1338 = vld [vmem:[#allocation10 + $0x10] sm:$0xff]
    %v1339 = vld [vmem:[#allocation10 + $0x18] sm:$0xff]
    %v1340 = vld [vmem:[#allocation10 + $0x20] sm:$0xff]
    %v1341 = vld [vmem:[#allocation10 + $0x28] sm:$0xff]
    %v1342 = vld [vmem:[#allocation10 + $0x30] sm:$0xff]
    %v1343 = vld [vmem:[#allocation10 + $0x38] sm:$0xff]
    %v1344 = vld [vmem:[#allocation10 + $0x40] sm:$0xff]
    %v1345 = vld [vmem:[#allocation10 + $0x48] sm:$0xff]
    %v1346 = vld [vmem:[#allocation10 + $0x50] sm:$0xff]
    %v1347 = vld [vmem:[#allocation10 + $0x58] sm:$0xff]
    %v1348 = vld [vmem:[#allocation10 + $0x60] sm:$0xff]
    %v1349 = vld [vmem:[#allocation10 + $0x68] sm:$0xff]
    %v1350 = vld [vmem:[#allocation10 + $0x70] sm:$0xff]
    %v1351 = vld [vmem:[#allocation10 + $0x78] sm:$0xff]
    %v1352 = vld [vmem:[#allocation10 + $0x80] sm:$0xff]
    %v1353 = vld [vmem:[#allocation10 + $0x88] sm:$0xff]
    %v1354 = vld [vmem:[#allocation10 + $0x90] sm:$0xff]
    %v1355 = vld [vmem:[#allocation10 + $0x98] sm:$0xff]
    %v1356 = vld [vmem:[#allocation10 + $0xa0] sm:$0xff]
    %v1357 = vld [vmem:[#allocation10 + $0xa8] sm:$0xff]
    %v1358 = vld [vmem:[#allocation10 + $0xb0] sm:$0xff]
    %v1359 = vld [vmem:[#allocation10 + $0xb8] sm:$0xff]
    %v1360 = vld [vmem:[#allocation10 + $0xc0] sm:$0xff]
    %v1361 = vld [vmem:[#allocation10 + $0xc8] sm:$0xff]
    %v1362 = vld [vmem:[#allocation10 + $0xd0] sm:$0xff]
    %v1363 = vld [vmem:[#allocation10 + $0xd8] sm:$0xff]
    %v1364 = vld [vmem:[#allocation10 + $0xe0] sm:$0xff]
    %v1365 = vld [vmem:[#allocation10 + $0xe8] sm:$0xff]
    %v1366 = vld [vmem:[#allocation10 + $0xf0] sm:$0xff]
    %v1367 = vld [vmem:[#allocation10 + $0xf8] sm:$0xff]
    %v1368 = vld [vmem:[#allocation10 + $0x100] sm:$0xff]
    %v1369 = vld [vmem:[#allocation10 + $0x108] sm:$0xff]
    %v1370 = vld [vmem:[#allocation10 + $0x110] sm:$0xff]
    %v1371 = vld [vmem:[#allocation10 + $0x118] sm:$0xff]
    %v1372 = vld [vmem:[#allocation11] sm:$0x7]
    %v1373 = vld [vmem:[%s10] sm:$0xff]
    %v1374 = vld [vmem:[%s10 + $0x8] sm:$0xff]
    %v1375 = vld [vmem:[%s10 + $0x10] sm:$0xff]
    %v1376 = vld [vmem:[%s10 + $0x18] sm:$0xff]
    %v1377 = vld [vmem:[%s10 + $0x20] sm:$0xff]
    %v1378 = vld [vmem:[%s10 + $0x28] sm:$0xff]
    %v1379 = vld [vmem:[%s10 + $0x30] sm:$0xff]
    %v1380 = vld [vmem:[%s10 + $0x38] sm:$0xff]
    %v1381 = vld [vmem:[%s10 + $0x40] sm:$0xff]
    %v1382 = vld [vmem:[%s10 + $0x48] sm:$0xff]
    %v1383 = vld [vmem:[%s10 + $0x50] sm:$0xff]
    %v1384 = vld [vmem:[%s10 + $0x58] sm:$0xff]
    %v1385 = vld [vmem:[#allocation13] sm:$0x1]
    %1386 = vmatprep.subr.mxu0 0.0
    %1387 = vmatpush1.msra.mxu0 %v1336
    %1388 = vmatprep.subr.mxu0 0.0
    %1389 = vmatpush1.msra.mxu0 %v1337
    %1390 = vmatprep.subr.mxu0 0.0
    %1391 = vmatpush1.msra.mxu0 %v1338
    %1392 = vmatprep.subr.mxu0 0.0
    %1393 = vmatpush1.msra.mxu0 %v1339
    %1394 = vmatprep.subr.mxu0 0.0
    %1395 = vmatpush1.msra.mxu0 0.0
    %1396 = vmatprep.subr.mxu0 0.0
    %1397 = vmatpush1.msra.mxu0 0.0
    %1398 = vmatprep.subr.mxu0 0.0
    %1399 = vmatpush1.msra.mxu0 0.0
    %1400 = vmatprep.subr.mxu0 0.0
    %1401 = vmatpush1.msra.mxu0 0.0
    %1402 = vmatprep.subr.mxu0 0.0
    %1403 = vmatpush1.msra.mxu0 0.0
    %1404 = vmatprep.subr.mxu0 0.0
    %1405 = vmatpush1.msra.mxu0 0.0
    %1406 = vmatprep.subr.mxu0 0.0
    %1407 = vmatpush1.msra.mxu0 0.0
    %1408 = vmatprep.subr.mxu0 0.0
    %1409 = vmatpush1.msra.mxu0 0.0
    %1410 = vmatprep.subr.mxu0 0.0
    %1411 = vmatpush1.msra.mxu0 0.0
    %1412 = vmatprep.subr.mxu0 0.0
    %1413 = vmatpush1.msra.mxu0 0.0
    %1414 = vmatprep.subr.mxu0 0.0
    %1415 = vmatpush1.msra.mxu0 0.0
    %1416 = vmatprep.subr.mxu0 0.0
    %1417 = vmatpush1.msra.mxu0 0.0
    %1418 = vmatprep.subr.mxu0 0.0
    %1419 = vmatpush1.msra.mxu0 0.0
    %1420 = vmatprep.subr.mxu0 0.0
    %1421 = vmatpush1.msra.mxu0 0.0
    %1422 = vmatprep.subr.mxu0 0.0
    %1423 = vmatpush1.msra.mxu0 0.0
    %1424 = vmatprep.subr.mxu0 0.0
    %1425 = vmatpush1.msra.mxu0 0.0
    %1426 = vmatprep.subr.mxu0 0.0
    %1427 = vmatpush1.msra.mxu0 0.0
    %1428 = vmatprep.subr.mxu0 0.0
    %1429 = vmatpush1.msra.mxu0 0.0
    %1430 = vmatprep.subr.mxu0 0.0
    %1431 = vmatpush1.msra.mxu0 0.0
    %1432 = vmatprep.subr.mxu0 0.0
    %1433 = vmatpush1.msra.mxu0 0.0
    %1434 = vmatprep.subr.mxu0 0.0
    %1435 = vmatpush1.msra.mxu0 0.0
    %1436 = vmatprep.subr.mxu0 0.0
    %1437 = vmatpush1.msra.mxu0 0.0
    %1438 = vmatprep.subr.mxu0 0.0
    %1439 = vmatpush1.msra.mxu0 0.0
    %1440 = vmatprep.subr.mxu0 0.0
    %1441 = vmatpush1.msra.mxu0 0.0
    %1442 = vmatprep.subr.mxu0 0.0
    %1443 = vmatpush1.msra.mxu0 0.0
    %1444 = vmatprep.subr.mxu0 0.0
    %1445 = vmatpush1.msra.mxu0 0.0
    %1446 = vmatprep.subr.mxu0 0.0
    %1447 = vmatpush1.msra.mxu0 0.0
    %1448 = vmatprep.subr.mxu0 0.0
    %1449 = vmatpush1.msra.mxu0 0.0
    %1450 = vmatprep.mubr.f32.mxu0 0.0
    %1451 = vmatmul.mubr.f32.gmra.mrb[0].mxu0 %v356
    %v1452 = vpop.f32.mrb[0].mxu0
    %v1453 = vadd.f32 0.0, %v1452
    %v1454 = vpop.f32.mrb[0].mxu0
    %1455 = vmatprep.mubr.f32.mxu0 0.0
    %1456 = vmatmul.mubr.f32.gmra.mrb[0].mxu0 %v358
    %v1457 = vpop.f32.mrb[0].mxu0
    %v1458 = vadd.f32 0.0, %v1457
    %v1459 = vpop.f32.mrb[0].mxu0
    %1460 = vdwg.mxu0
    %v1461 = vlaneseq
    %v1462 = vshrl.u32 %v1461, 7
    %v1463 = vsub.s32 0, %v1462
    %v1464 = vrot.slane %v1372, %v1463
    %v1465 = vadd.f32 %v1464, %v1453
    %v1466 = vadd.f32 %v1464, %v1458
    %v1468 = vsel %vm219, %v1465, 0
    %v1471 = vsel %vm219, %v1466, 0
    %1473 = vmatprep.subr.mxu0 0.0
    %1474 = vmatpush1.msra.mxu0 %v1373
    %1475 = vmatprep.subr.mxu0 0.0
    %1476 = vmatpush1.msra.mxu0 %v1374
    %1477 = vmatprep.subr.mxu0 0.0
    %1478 = vmatpush1.msra.mxu0 %v1375
    %1479 = vmatprep.subr.mxu0 0.0
    %1480 = vmatpush1.msra.mxu0 %v1376
    %1481 = vmatprep.subr.mxu0 0.0
    %1482 = vmatpush1.msra.mxu0 0.0
    %1483 = vmatprep.subr.mxu0 0.0
    %1484 = vmatpush1.msra.mxu0 0.0
    %1485 = vmatprep.subr.mxu0 0.0
    %1486 = vmatpush1.msra.mxu0 0.0
    %1487 = vmatprep.subr.mxu0 0.0
    %1488 = vmatpush1.msra.mxu0 0.0
    %1489 = vmatprep.subr.mxu0 0.0
    %1490 = vmatpush1.msra.mxu0 0.0
    %1491 = vmatprep.subr.mxu0 0.0
    %1492 = vmatpush1.msra.mxu0 0.0
    %1493 = vmatprep.subr.mxu0 0.0
    %1494 = vmatpush1.msra.mxu0 0.0
    %1495 = vmatprep.subr.mxu0 0.0
    %1496 = vmatpush1.msra.mxu0 0.0
    %1497 = vmatprep.subr.mxu0 0.0
    %1498 = vmatpush1.msra.mxu0 0.0
    %1499 = vmatprep.subr.mxu0 0.0
    %1500 = vmatpush1.msra.mxu0 0.0
    %1501 = vmatprep.subr.mxu0 0.0
    %1502 = vmatpush1.msra.mxu0 0.0
    %1503 = vmatprep.subr.mxu0 0.0
    %1504 = vmatpush1.msra.mxu0 0.0
    %1505 = vmatprep.subr.mxu0 0.0
    %1506 = vmatpush1.msra.mxu0 0.0
    %1507 = vmatprep.subr.mxu0 0.0
    %1508 = vmatpush1.msra.mxu0 0.0
    %1509 = vmatprep.subr.mxu0 0.0
    %1510 = vmatpush1.msra.mxu0 0.0
    %1511 = vmatprep.subr.mxu0 0.0
    %1512 = vmatpush1.msra.mxu0 0.0
    %1513 = vmatprep.subr.mxu0 0.0
    %1514 = vmatpush1.msra.mxu0 0.0
    %1515 = vmatprep.subr.mxu0 0.0
    %1516 = vmatpush1.msra.mxu0 0.0
    %1517 = vmatprep.subr.mxu0 0.0
    %1518 = vmatpush1.msra.mxu0 0.0
    %1519 = vmatprep.subr.mxu0 0.0
    %1520 = vmatpush1.msra.mxu0 0.0
    %1521 = vmatprep.subr.mxu0 0.0
    %1522 = vmatpush1.msra.mxu0 0.0
    %1523 = vmatprep.subr.mxu0 0.0
    %1524 = vmatpush1.msra.mxu0 0.0
    %1525 = vmatprep.subr.mxu0 0.0
    %1526 = vmatpush1.msra.mxu0 0.0
    %1527 = vmatprep.subr.mxu0 0.0
    %1528 = vmatpush1.msra.mxu0 0.0
    %1529 = vmatprep.subr.mxu0 0.0
    %1530 = vmatpush1.msra.mxu0 0.0
    %1531 = vmatprep.subr.mxu0 0.0
    %1532 = vmatpush1.msra.mxu0 0.0
    %1533 = vmatprep.subr.mxu0 0.0
    %1534 = vmatpush1.msra.mxu0 0.0
    %1535 = vmatprep.subr.mxu0 0.0
    %1536 = vmatpush1.msra.mxu0 0.0
    %1537 = vmatprep.mubr.f32.mxu0 0.0
    %1538 = vmatmul.mubr.f32.gmra.mrb[0].mxu0 %v1468
    %v1539 = vpop.f32.mrb[0].mxu0
    %v1540 = vadd.f32 0.0, %v1539
    %v1541 = vpop.f32.mrb[0].mxu0
    %1542 = vmatprep.mubr.f32.mxu0 0.0
    %1543 = vmatmul.mubr.f32.gmra.mrb[0].mxu0 %v1471
    %v1544 = vpop.f32.mrb[0].mxu0
    %v1545 = vadd.f32 0.0, %v1544
    %v1546 = vpop.f32.mrb[0].mxu0
    %1547 = vdwg.mxu0
    %v1549 = vlaneseq
    %v1550 = vshrl.u32 %v1549, 7
    %v1551 = vsub.s32 0, %v1550
    %v1552 = vrot.slane %v1385, %v1551
    %v1554 = vadd.f32 %v1552, %v1540
    %v1555 = vadd.f32 %v1552, %v1545
    %1556 = vmatprep.subr.mxu0 0.0
    %1557 = vmatpush1.msra.mxu0 %v1340
    %1558 = vmatprep.subr.mxu0 0.0
    %1559 = vmatpush1.msra.mxu0 %v1341
    %1560 = vmatprep.subr.mxu0 0.0
    %1561 = vmatpush1.msra.mxu0 %v1342
    %1562 = vmatprep.subr.mxu0 0.0
    %1563 = vmatpush1.msra.mxu0 %v1343
    %1564 = vmatprep.subr.mxu0 0.0
    %1565 = vmatpush1.msra.mxu0 0.0
    %1566 = vmatprep.subr.mxu0 0.0
    %1567 = vmatpush1.msra.mxu0 0.0
    %1568 = vmatprep.subr.mxu0 0.0
    %1569 = vmatpush1.msra.mxu0 0.0
    %1570 = vmatprep.subr.mxu0 0.0
    %1571 = vmatpush1.msra.mxu0 0.0
    %1572 = vmatprep.subr.mxu0 0.0
    %1573 = vmatpush1.msra.mxu0 0.0
    %1574 = vmatprep.subr.mxu0 0.0
    %1575 = vmatpush1.msra.mxu0 0.0
    %1576 = vmatprep.subr.mxu0 0.0
    %1577 = vmatpush1.msra.mxu0 0.0
    %1578 = vmatprep.subr.mxu0 0.0
    %1579 = vmatpush1.msra.mxu0 0.0
    %1580 = vmatprep.subr.mxu0 0.0
    %1581 = vmatpush1.msra.mxu0 0.0
    %1582 = vmatprep.subr.mxu0 0.0
    %1583 = vmatpush1.msra.mxu0 0.0
    %1584 = vmatprep.subr.mxu0 0.0
    %1585 = vmatpush1.msra.mxu0 0.0
    %1586 = vmatprep.subr.mxu0 0.0
    %1587 = vmatpush1.msra.mxu0 0.0
    %1588 = vmatprep.subr.mxu0 0.0
    %1589 = vmatpush1.msra.mxu0 0.0
    %1590 = vmatprep.subr.mxu0 0.0
    %1591 = vmatpush1.msra.mxu0 0.0
    %1592 = vmatprep.subr.mxu0 0.0
    %1593 = vmatpush1.msra.mxu0 0.0
    %1594 = vmatprep.subr.mxu0 0.0
    %1595 = vmatpush1.msra.mxu0 0.0
    %1596 = vmatprep.subr.mxu0 0.0
    %1597 = vmatpush1.msra.mxu0 0.0
    %1598 = vmatprep.subr.mxu0 0.0
    %1599 = vmatpush1.msra.mxu0 0.0
    %1600 = vmatprep.subr.mxu0 0.0
    %1601 = vmatpush1.msra.mxu0 0.0
    %1602 = vmatprep.subr.mxu0 0.0
    %1603 = vmatpush1.msra.mxu0 0.0
    %1604 = vmatprep.subr.mxu0 0.0
    %1605 = vmatpush1.msra.mxu0 0.0
    %1606 = vmatprep.subr.mxu0 0.0
    %1607 = vmatpush1.msra.mxu0 0.0
    %1608 = vmatprep.subr.mxu0 0.0
    %1609 = vmatpush1.msra.mxu0 0.0
    %1610 = vmatprep.subr.mxu0 0.0
    %1611 = vmatpush1.msra.mxu0 0.0
    %1612 = vmatprep.subr.mxu0 0.0
    %1613 = vmatpush1.msra.mxu0 0.0
    %1614 = vmatprep.subr.mxu0 0.0
    %1615 = vmatpush1.msra.mxu0 0.0
    %1616 = vmatprep.subr.mxu0 0.0
    %1617 = vmatpush1.msra.mxu0 0.0
    %1618 = vmatprep.subr.mxu0 0.0
    %1619 = vmatpush1.msra.mxu0 0.0
    %1620 = vmatprep.mubr.f32.mxu0 0.0
    %1621 = vmatmul.mubr.f32.gmra.mrb[0].mxu0 %v530
    %v1622 = vpop.f32.mrb[0].mxu0
    %v1623 = vadd.f32 0.0, %v1622
    %v1624 = vpop.f32.mrb[0].mxu0
    %1625 = vmatprep.mubr.f32.mxu0 0.0
    %1626 = vmatmul.mubr.f32.gmra.mrb[0].mxu0 %v532
    %v1627 = vpop.f32.mrb[0].mxu0
    %v1628 = vadd.f32 0.0, %v1627
    %v1629 = vpop.f32.mrb[0].mxu0
    %1630 = vdwg.mxu0
    %v1631 = vlaneseq
    %v1632 = vshrl.u32 %v1631, 7
    %v1633 = vsub.s32 1, %v1632
    %v1634 = vrot.slane %v1372, %v1633
    %v1635 = vadd.f32 %v1634, %v1623
    %v1636 = vadd.f32 %v1634, %v1628
    %1637 = vmatprep.subr.mxu0 0.0
    %1638 = vmatpush1.msra.mxu0 %v1344
    %1639 = vmatprep.subr.mxu0 0.0
    %1640 = vmatpush1.msra.mxu0 %v1345
    %1641 = vmatprep.subr.mxu0 0.0
    %1642 = vmatpush1.msra.mxu0 %v1346
    %1643 = vmatprep.subr.mxu0 0.0
    %1644 = vmatpush1.msra.mxu0 %v1347
    %1645 = vmatprep.subr.mxu0 0.0
    %1646 = vmatpush1.msra.mxu0 0.0
    %1647 = vmatprep.subr.mxu0 0.0
    %1648 = vmatpush1.msra.mxu0 0.0
    %1649 = vmatprep.subr.mxu0 0.0
    %1650 = vmatpush1.msra.mxu0 0.0
    %1651 = vmatprep.subr.mxu0 0.0
    %1652 = vmatpush1.msra.mxu0 0.0
    %1653 = vmatprep.subr.mxu0 0.0
    %1654 = vmatpush1.msra.mxu0 0.0
    %1655 = vmatprep.subr.mxu0 0.0
    %1656 = vmatpush1.msra.mxu0 0.0
    %1657 = vmatprep.subr.mxu0 0.0
    %1658 = vmatpush1.msra.mxu0 0.0
    %1659 = vmatprep.subr.mxu0 0.0
    %1660 = vmatpush1.msra.mxu0 0.0
    %1661 = vmatprep.subr.mxu0 0.0
    %1662 = vmatpush1.msra.mxu0 0.0
    %1663 = vmatprep.subr.mxu0 0.0
    %1664 = vmatpush1.msra.mxu0 0.0
    %1665 = vmatprep.subr.mxu0 0.0
    %1666 = vmatpush1.msra.mxu0 0.0
    %1667 = vmatprep.subr.mxu0 0.0
    %1668 = vmatpush1.msra.mxu0 0.0
    %1669 = vmatprep.subr.mxu0 0.0
    %1670 = vmatpush1.msra.mxu0 0.0
    %1671 = vmatprep.subr.mxu0 0.0
    %1672 = vmatpush1.msra.mxu0 0.0
    %1673 = vmatprep.subr.mxu0 0.0
    %1674 = vmatpush1.msra.mxu0 0.0
    %1675 = vmatprep.subr.mxu0 0.0
    %1676 = vmatpush1.msra.mxu0 0.0
    %1677 = vmatprep.subr.mxu0 0.0
    %1678 = vmatpush1.msra.mxu0 0.0
    %1679 = vmatprep.subr.mxu0 0.0
    %1680 = vmatpush1.msra.mxu0 0.0
    %1681 = vmatprep.subr.mxu0 0.0
    %1682 = vmatpush1.msra.mxu0 0.0
    %1683 = vmatprep.subr.mxu0 0.0
    %1684 = vmatpush1.msra.mxu0 0.0
    %1685 = vmatprep.subr.mxu0 0.0
    %1686 = vmatpush1.msra.mxu0 0.0
    %1687 = vmatprep.subr.mxu0 0.0
    %1688 = vmatpush1.msra.mxu0 0.0
    %1689 = vmatprep.subr.mxu0 0.0
    %1690 = vmatpush1.msra.mxu0 0.0
    %1691 = vmatprep.subr.mxu0 0.0
    %1692 = vmatpush1.msra.mxu0 0.0
    %1693 = vmatprep.subr.mxu0 0.0
    %1694 = vmatpush1.msra.mxu0 0.0
    %1695 = vmatprep.subr.mxu0 0.0
    %1696 = vmatpush1.msra.mxu0 0.0
    %1697 = vmatprep.subr.mxu0 0.0
    %1698 = vmatpush1.msra.mxu0 0.0
    %1699 = vmatprep.subr.mxu0 0.0
    %1700 = vmatpush1.msra.mxu0 0.0
    %1701 = vmatprep.mubr.f32.mxu0 0.0
    %1702 = vmatmul.mubr.f32.gmra.mrb[0].mxu0 %v356
    %v1703 = vpop.f32.mrb[0].mxu0
    %v1704 = vadd.f32 0.0, %v1703
    %v1705 = vpop.f32.mrb[0].mxu0
    %1706 = vmatprep.mubr.f32.mxu0 0.0
    %1707 = vmatmul.mubr.f32.gmra.mrb[0].mxu0 %v358
    %v1708 = vpop.f32.mrb[0].mxu0
    %v1709 = vadd.f32 0.0, %v1708
    %v1710 = vpop.f32.mrb[0].mxu0
    %1711 = vdwg.mxu0
    %v1712 = vadd.f32 %v1635, %v1704
    %v1713 = vadd.f32 %v1636, %v1709
    %1714 = vmatprep.subr.mxu0 0.0
    %1715 = vmatpush1.msra.mxu0 %v1348
    %1716 = vmatprep.subr.mxu0 0.0
    %1717 = vmatpush1.msra.mxu0 %v1349
    %1718 = vmatprep.subr.mxu0 0.0
    %1719 = vmatpush1.msra.mxu0 %v1350
    %1720 = vmatprep.subr.mxu0 0.0
    %1721 = vmatpush1.msra.mxu0 %v1351
    %1722 = vmatprep.subr.mxu0 0.0
    %1723 = vmatpush1.msra.mxu0 0.0
    %1724 = vmatprep.subr.mxu0 0.0
    %1725 = vmatpush1.msra.mxu0 0.0
    %1726 = vmatprep.subr.mxu0 0.0
    %1727 = vmatpush1.msra.mxu0 0.0
    %1728 = vmatprep.subr.mxu0 0.0
    %1729 = vmatpush1.msra.mxu0 0.0
    %1730 = vmatprep.subr.mxu0 0.0
    %1731 = vmatpush1.msra.mxu0 0.0
    %1732 = vmatprep.subr.mxu0 0.0
    %1733 = vmatpush1.msra.mxu0 0.0
    %1734 = vmatprep.subr.mxu0 0.0
    %1735 = vmatpush1.msra.mxu0 0.0
    %1736 = vmatprep.subr.mxu0 0.0
    %1737 = vmatpush1.msra.mxu0 0.0
    %1738 = vmatprep.subr.mxu0 0.0
    %1739 = vmatpush1.msra.mxu0 0.0
    %1740 = vmatprep.subr.mxu0 0.0
    %1741 = vmatpush1.msra.mxu0 0.0
    %1742 = vmatprep.subr.mxu0 0.0
    %1743 = vmatpush1.msra.mxu0 0.0
    %1744 = vmatprep.subr.mxu0 0.0
    %1745 = vmatpush1.msra.mxu0 0.0
    %1746 = vmatprep.subr.mxu0 0.0
    %1747 = vmatpush1.msra.mxu0 0.0
    %1748 = vmatprep.subr.mxu0 0.0
    %1749 = vmatpush1.msra.mxu0 0.0
    %1750 = vmatprep.subr.mxu0 0.0
    %1751 = vmatpush1.msra.mxu0 0.0
    %1752 = vmatprep.subr.mxu0 0.0
    %1753 = vmatpush1.msra.mxu0 0.0
    %1754 = vmatprep.subr.mxu0 0.0
    %1755 = vmatpush1.msra.mxu0 0.0
    %1756 = vmatprep.subr.mxu0 0.0
    %1757 = vmatpush1.msra.mxu0 0.0
    %1758 = vmatprep.subr.mxu0 0.0
    %1759 = vmatpush1.msra.mxu0 0.0
    %1760 = vmatprep.subr.mxu0 0.0
    %1761 = vmatpush1.msra.mxu0 0.0
    %1762 = vmatprep.subr.mxu0 0.0
    %1763 = vmatpush1.msra.mxu0 0.0
    %1764 = vmatprep.subr.mxu0 0.0
    %1765 = vmatpush1.msra.mxu0 0.0
    %1766 = vmatprep.subr.mxu0 0.0
    %1767 = vmatpush1.msra.mxu0 0.0
    %1768 = vmatprep.subr.mxu0 0.0
    %1769 = vmatpush1.msra.mxu0 0.0
    %1770 = vmatprep.subr.mxu0 0.0
    %1771 = vmatpush1.msra.mxu0 0.0
    %1772 = vmatprep.subr.mxu0 0.0
    %1773 = vmatpush1.msra.mxu0 0.0
    %1774 = vmatprep.subr.mxu0 0.0
    %1775 = vmatpush1.msra.mxu0 0.0
    %1776 = vmatprep.subr.mxu0 0.0
    %1777 = vmatpush1.msra.mxu0 0.0
    %1778 = vmatprep.mubr.f32.mxu0 0.0
    %1779 = vmatmul.mubr.f32.gmra.mrb[0].mxu0 %v692
    %v1780 = vpop.f32.mrb[0].mxu0
    %v1781 = vadd.f32 0.0, %v1780
    %v1782 = vpop.f32.mrb[0].mxu0
    %1783 = vmatprep.mubr.f32.mxu0 0.0
    %1784 = vmatmul.mubr.f32.gmra.mrb[0].mxu0 %v694
    %v1785 = vpop.f32.mrb[0].mxu0
    %v1786 = vadd.f32 0.0, %v1785
    %v1787 = vpop.f32.mrb[0].mxu0
    %1788 = vdwg.mxu0
    %v1789 = vadd.f32 %v1712, %v1781
    %v1790 = vadd.f32 %v1713, %v1786
    %v1792 = vsel %vm219, %v1789, 0
    %v1795 = vsel %vm219, %v1790, 0
    %1797 = vmatprep.subr.mxu0 0.0
    %1798 = vmatpush1.msra.mxu0 %v1377
    %1799 = vmatprep.subr.mxu0 0.0
    %1800 = vmatpush1.msra.mxu0 %v1378
    %1801 = vmatprep.subr.mxu0 0.0
    %1802 = vmatpush1.msra.mxu0 %v1379
    %1803 = vmatprep.subr.mxu0 0.0
    %1804 = vmatpush1.msra.mxu0 %v1380
    %1805 = vmatprep.subr.mxu0 0.0
    %1806 = vmatpush1.msra.mxu0 0.0
    %1807 = vmatprep.subr.mxu0 0.0
    %1808 = vmatpush1.msra.mxu0 0.0
    %1809 = vmatprep.subr.mxu0 0.0
    %1810 = vmatpush1.msra.mxu0 0.0
    %1811 = vmatprep.subr.mxu0 0.0
    %1812 = vmatpush1.msra.mxu0 0.0
    %1813 = vmatprep.subr.mxu0 0.0
    %1814 = vmatpush1.msra.mxu0 0.0
    %1815 = vmatprep.subr.mxu0 0.0
    %1816 = vmatpush1.msra.mxu0 0.0
    %1817 = vmatprep.subr.mxu0 0.0
    %1818 = vmatpush1.msra.mxu0 0.0
    %1819 = vmatprep.subr.mxu0 0.0
    %1820 = vmatpush1.msra.mxu0 0.0
    %1821 = vmatprep.subr.mxu0 0.0
    %1822 = vmatpush1.msra.mxu0 0.0
    %1823 = vmatprep.subr.mxu0 0.0
    %1824 = vmatpush1.msra.mxu0 0.0
    %1825 = vmatprep.subr.mxu0 0.0
    %1826 = vmatpush1.msra.mxu0 0.0
    %1827 = vmatprep.subr.mxu0 0.0
    %1828 = vmatpush1.msra.mxu0 0.0
    %1829 = vmatprep.subr.mxu0 0.0
    %1830 = vmatpush1.msra.mxu0 0.0
    %1831 = vmatprep.subr.mxu0 0.0
    %1832 = vmatpush1.msra.mxu0 0.0
    %1833 = vmatprep.subr.mxu0 0.0
    %1834 = vmatpush1.msra.mxu0 0.0
    %1835 = vmatprep.subr.mxu0 0.0
    %1836 = vmatpush1.msra.mxu0 0.0
    %1837 = vmatprep.subr.mxu0 0.0
    %1838 = vmatpush1.msra.mxu0 0.0
    %1839 = vmatprep.subr.mxu0 0.0
    %1840 = vmatpush1.msra.mxu0 0.0
    %1841 = vmatprep.subr.mxu0 0.0
    %1842 = vmatpush1.msra.mxu0 0.0
    %1843 = vmatprep.subr.mxu0 0.0
    %1844 = vmatpush1.msra.mxu0 0.0
    %1845 = vmatprep.subr.mxu0 0.0
    %1846 = vmatpush1.msra.mxu0 0.0
    %1847 = vmatprep.subr.mxu0 0.0
    %1848 = vmatpush1.msra.mxu0 0.0
    %1849 = vmatprep.subr.mxu0 0.0
    %1850 = vmatpush1.msra.mxu0 0.0
    %1851 = vmatprep.subr.mxu0 0.0
    %1852 = vmatpush1.msra.mxu0 0.0
    %1853 = vmatprep.subr.mxu0 0.0
    %1854 = vmatpush1.msra.mxu0 0.0
    %1855 = vmatprep.subr.mxu0 0.0
    %1856 = vmatpush1.msra.mxu0 0.0
    %1857 = vmatprep.subr.mxu0 0.0
    %1858 = vmatpush1.msra.mxu0 0.0
    %1859 = vmatprep.subr.mxu0 0.0
    %1860 = vmatpush1.msra.mxu0 0.0
    %1861 = vmatprep.mubr.f32.mxu0 0.0
    %1862 = vmatmul.mubr.f32.gmra.mrb[0].mxu0 %v1792
    %v1863 = vpop.f32.mrb[0].mxu0
    %v1864 = vadd.f32 0.0, %v1863
    %v1865 = vpop.f32.mrb[0].mxu0
    %1866 = vmatprep.mubr.f32.mxu0 0.0
    %1867 = vmatmul.mubr.f32.gmra.mrb[0].mxu0 %v1795
    %v1868 = vpop.f32.mrb[0].mxu0
    %v1869 = vadd.f32 0.0, %v1868
    %v1870 = vpop.f32.mrb[0].mxu0
    %1871 = vdwg.mxu0
    %v1872 = vadd.f32 %v1554, %v1864
    %v1873 = vadd.f32 %v1555, %v1869
    %1874 = vmatprep.subr.mxu0 0.0
    %1875 = vmatpush1.msra.mxu0 %v1352
    %1876 = vmatprep.subr.mxu0 0.0
    %1877 = vmatpush1.msra.mxu0 %v1353
    %1878 = vmatprep.subr.mxu0 0.0
    %1879 = vmatpush1.msra.mxu0 %v1354
    %1880 = vmatprep.subr.mxu0 0.0
    %1881 = vmatpush1.msra.mxu0 %v1355
    %1882 = vmatprep.subr.mxu0 0.0
    %1883 = vmatpush1.msra.mxu0 0.0
    %1884 = vmatprep.subr.mxu0 0.0
    %1885 = vmatpush1.msra.mxu0 0.0
    %1886 = vmatprep.subr.mxu0 0.0
    %1887 = vmatpush1.msra.mxu0 0.0
    %1888 = vmatprep.subr.mxu0 0.0
    %1889 = vmatpush1.msra.mxu0 0.0
    %1890 = vmatprep.subr.mxu0 0.0
    %1891 = vmatpush1.msra.mxu0 0.0
    %1892 = vmatprep.subr.mxu0 0.0
    %1893 = vmatpush1.msra.mxu0 0.0
    %1894 = vmatprep.subr.mxu0 0.0
    %1895 = vmatpush1.msra.mxu0 0.0
    %1896 = vmatprep.subr.mxu0 0.0
    %1897 = vmatpush1.msra.mxu0 0.0
    %1898 = vmatprep.subr.mxu0 0.0
    %1899 = vmatpush1.msra.mxu0 0.0
    %1900 = vmatprep.subr.mxu0 0.0
    %1901 = vmatpush1.msra.mxu0 0.0
    %1902 = vmatprep.subr.mxu0 0.0
    %1903 = vmatpush1.msra.mxu0 0.0
    %1904 = vmatprep.subr.mxu0 0.0
    %1905 = vmatpush1.msra.mxu0 0.0
    %1906 = vmatprep.subr.mxu0 0.0
    %1907 = vmatpush1.msra.mxu0 0.0
    %1908 = vmatprep.subr.mxu0 0.0
    %1909 = vmatpush1.msra.mxu0 0.0
    %1910 = vmatprep.subr.mxu0 0.0
    %1911 = vmatpush1.msra.mxu0 0.0
    %1912 = vmatprep.subr.mxu0 0.0
    %1913 = vmatpush1.msra.mxu0 0.0
    %1914 = vmatprep.subr.mxu0 0.0
    %1915 = vmatpush1.msra.mxu0 0.0
    %1916 = vmatprep.subr.mxu0 0.0
    %1917 = vmatpush1.msra.mxu0 0.0
    %1918 = vmatprep.subr.mxu0 0.0
    %1919 = vmatpush1.msra.mxu0 0.0
    %1920 = vmatprep.subr.mxu0 0.0
    %1921 = vmatpush1.msra.mxu0 0.0
    %1922 = vmatprep.subr.mxu0 0.0
    %1923 = vmatpush1.msra.mxu0 0.0
    %1924 = vmatprep.subr.mxu0 0.0
    %1925 = vmatpush1.msra.mxu0 0.0
    %1926 = vmatprep.subr.mxu0 0.0
    %1927 = vmatpush1.msra.mxu0 0.0
    %1928 = vmatprep.subr.mxu0 0.0
    %1929 = vmatpush1.msra.mxu0 0.0
    %1930 = vmatprep.subr.mxu0 0.0
    %1931 = vmatpush1.msra.mxu0 0.0
    %1932 = vmatprep.subr.mxu0 0.0
    %1933 = vmatpush1.msra.mxu0 0.0
    %1934 = vmatprep.subr.mxu0 0.0
    %1935 = vmatpush1.msra.mxu0 0.0
    %1936 = vmatprep.subr.mxu0 0.0
    %1937 = vmatpush1.msra.mxu0 0.0
    %1938 = vmatprep.mubr.f32.mxu0 0.0
    %1939 = vmatmul.mubr.f32.gmra.mrb[0].mxu0 %v856
    %v1940 = vpop.f32.mrb[0].mxu0
    %v1941 = vadd.f32 0.0, %v1940
    %v1942 = vpop.f32.mrb[0].mxu0
    %1943 = vmatprep.mubr.f32.mxu0 0.0
    %1944 = vmatmul.mubr.f32.gmra.mrb[0].mxu0 %v858
    %v1945 = vpop.f32.mrb[0].mxu0
    %v1946 = vadd.f32 0.0, %v1945
    %v1947 = vpop.f32.mrb[0].mxu0
    %1948 = vdwg.mxu0
    %v1949 = vlaneseq
    %v1950 = vshrl.u32 %v1949, 7
    %v1951 = vsub.s32 2, %v1950
    %v1952 = vrot.slane %v1372, %v1951
    %v1953 = vadd.f32 %v1952, %v1941
    %v1954 = vadd.f32 %v1952, %v1946
    %1955 = vmatprep.subr.mxu0 0.0
    %1956 = vmatpush1.msra.mxu0 %v1356
    %1957 = vmatprep.subr.mxu0 0.0
    %1958 = vmatpush1.msra.mxu0 %v1357
    %1959 = vmatprep.subr.mxu0 0.0
    %1960 = vmatpush1.msra.mxu0 %v1358
    %1961 = vmatprep.subr.mxu0 0.0
    %1962 = vmatpush1.msra.mxu0 %v1359
    %1963 = vmatprep.subr.mxu0 0.0
    %1964 = vmatpush1.msra.mxu0 0.0
    %1965 = vmatprep.subr.mxu0 0.0
    %1966 = vmatpush1.msra.mxu0 0.0
    %1967 = vmatprep.subr.mxu0 0.0
    %1968 = vmatpush1.msra.mxu0 0.0
    %1969 = vmatprep.subr.mxu0 0.0
    %1970 = vmatpush1.msra.mxu0 0.0
    %1971 = vmatprep.subr.mxu0 0.0
    %1972 = vmatpush1.msra.mxu0 0.0
    %1973 = vmatprep.subr.mxu0 0.0
    %1974 = vmatpush1.msra.mxu0 0.0
    %1975 = vmatprep.subr.mxu0 0.0
    %1976 = vmatpush1.msra.mxu0 0.0
    %1977 = vmatprep.subr.mxu0 0.0
    %1978 = vmatpush1.msra.mxu0 0.0
    %1979 = vmatprep.subr.mxu0 0.0
    %1980 = vmatpush1.msra.mxu0 0.0
    %1981 = vmatprep.subr.mxu0 0.0
    %1982 = vmatpush1.msra.mxu0 0.0
    %1983 = vmatprep.subr.mxu0 0.0
    %1984 = vmatpush1.msra.mxu0 0.0
    %1985 = vmatprep.subr.mxu0 0.0
    %1986 = vmatpush1.msra.mxu0 0.0
    %1987 = vmatprep.subr.mxu0 0.0
    %1988 = vmatpush1.msra.mxu0 0.0
    %1989 = vmatprep.subr.mxu0 0.0
    %1990 = vmatpush1.msra.mxu0 0.0
    %1991 = vmatprep.subr.mxu0 0.0
    %1992 = vmatpush1.msra.mxu0 0.0
    %1993 = vmatprep.subr.mxu0 0.0
    %1994 = vmatpush1.msra.mxu0 0.0
    %1995 = vmatprep.subr.mxu0 0.0
    %1996 = vmatpush1.msra.mxu0 0.0
    %1997 = vmatprep.subr.mxu0 0.0
    %1998 = vmatpush1.msra.mxu0 0.0
    %1999 = vmatprep.subr.mxu0 0.0
    %2000 = vmatpush1.msra.mxu0 0.0
    %2001 = vmatprep.subr.mxu0 0.0
    %2002 = vmatpush1.msra.mxu0 0.0
    %2003 = vmatprep.subr.mxu0 0.0
    %2004 = vmatpush1.msra.mxu0 0.0
    %2005 = vmatprep.subr.mxu0 0.0
    %2006 = vmatpush1.msra.mxu0 0.0
    %2007 = vmatprep.subr.mxu0 0.0
    %2008 = vmatpush1.msra.mxu0 0.0
    %2009 = vmatprep.subr.mxu0 0.0
    %2010 = vmatpush1.msra.mxu0 0.0
    %2011 = vmatprep.subr.mxu0 0.0
    %2012 = vmatpush1.msra.mxu0 0.0
    %2013 = vmatprep.subr.mxu0 0.0
    %2014 = vmatpush1.msra.mxu0 0.0
    %2015 = vmatprep.subr.mxu0 0.0
    %2016 = vmatpush1.msra.mxu0 0.0
    %2017 = vmatprep.subr.mxu0 0.0
    %2018 = vmatpush1.msra.mxu0 0.0
    %2019 = vmatprep.mubr.f32.mxu0 0.0
    %2020 = vmatmul.mubr.f32.gmra.mrb[0].mxu0 %v530
    %v2021 = vpop.f32.mrb[0].mxu0
    %v2022 = vadd.f32 0.0, %v2021
    %v2023 = vpop.f32.mrb[0].mxu0
    %2024 = vmatprep.mubr.f32.mxu0 0.0
    %2025 = vmatmul.mubr.f32.gmra.mrb[0].mxu0 %v532
    %v2026 = vpop.f32.mrb[0].mxu0
    %v2027 = vadd.f32 0.0, %v2026
    %v2028 = vpop.f32.mrb[0].mxu0
    %2029 = vdwg.mxu0
    %v2030 = vadd.f32 %v1953, %v2022
    %v2031 = vadd.f32 %v1954, %v2027
    %2032 = vmatprep.subr.mxu0 0.0
    %2033 = vmatpush1.msra.mxu0 %v1360
    %2034 = vmatprep.subr.mxu0 0.0
    %2035 = vmatpush1.msra.mxu0 %v1361
    %2036 = vmatprep.subr.mxu0 0.0
    %2037 = vmatpush1.msra.mxu0 %v1362
    %2038 = vmatprep.subr.mxu0 0.0
    %2039 = vmatpush1.msra.mxu0 %v1363
    %2040 = vmatprep.subr.mxu0 0.0
    %2041 = vmatpush1.msra.mxu0 0.0
    %2042 = vmatprep.subr.mxu0 0.0
    %2043 = vmatpush1.msra.mxu0 0.0
    %2044 = vmatprep.subr.mxu0 0.0
    %2045 = vmatpush1.msra.mxu0 0.0
    %2046 = vmatprep.subr.mxu0 0.0
    %2047 = vmatpush1.msra.mxu0 0.0
    %2048 = vmatprep.subr.mxu0 0.0
    %2049 = vmatpush1.msra.mxu0 0.0
    %2050 = vmatprep.subr.mxu0 0.0
    %2051 = vmatpush1.msra.mxu0 0.0
    %2052 = vmatprep.subr.mxu0 0.0
    %2053 = vmatpush1.msra.mxu0 0.0
    %2054 = vmatprep.subr.mxu0 0.0
    %2055 = vmatpush1.msra.mxu0 0.0
    %2056 = vmatprep.subr.mxu0 0.0
    %2057 = vmatpush1.msra.mxu0 0.0
    %2058 = vmatprep.subr.mxu0 0.0
    %2059 = vmatpush1.msra.mxu0 0.0
    %2060 = vmatprep.subr.mxu0 0.0
    %2061 = vmatpush1.msra.mxu0 0.0
    %2062 = vmatprep.subr.mxu0 0.0
    %2063 = vmatpush1.msra.mxu0 0.0
    %2064 = vmatprep.subr.mxu0 0.0
    %2065 = vmatpush1.msra.mxu0 0.0
    %2066 = vmatprep.subr.mxu0 0.0
    %2067 = vmatpush1.msra.mxu0 0.0
    %2068 = vmatprep.subr.mxu0 0.0
    %2069 = vmatpush1.msra.mxu0 0.0
    %2070 = vmatprep.subr.mxu0 0.0
    %2071 = vmatpush1.msra.mxu0 0.0
    %2072 = vmatprep.subr.mxu0 0.0
    %2073 = vmatpush1.msra.mxu0 0.0
    %2074 = vmatprep.subr.mxu0 0.0
    %2075 = vmatpush1.msra.mxu0 0.0
    %2076 = vmatprep.subr.mxu0 0.0
    %2077 = vmatpush1.msra.mxu0 0.0
    %2078 = vmatprep.subr.mxu0 0.0
    %2079 = vmatpush1.msra.mxu0 0.0
    %2080 = vmatprep.subr.mxu0 0.0
    %2081 = vmatpush1.msra.mxu0 0.0
    %2082 = vmatprep.subr.mxu0 0.0
    %2083 = vmatpush1.msra.mxu0 0.0
    %2084 = vmatprep.subr.mxu0 0.0
    %2085 = vmatpush1.msra.mxu0 0.0
    %2086 = vmatprep.subr.mxu0 0.0
    %2087 = vmatpush1.msra.mxu0 0.0
    %2088 = vmatprep.subr.mxu0 0.0
    %2089 = vmatpush1.msra.mxu0 0.0
    %2090 = vmatprep.subr.mxu0 0.0
    %2091 = vmatpush1.msra.mxu0 0.0
    %2092 = vmatprep.subr.mxu0 0.0
    %2093 = vmatpush1.msra.mxu0 0.0
    %2094 = vmatprep.subr.mxu0 0.0
    %2095 = vmatpush1.msra.mxu0 0.0
    %2096 = vmatprep.mubr.f32.mxu0 0.0
    %2097 = vmatmul.mubr.f32.gmra.mrb[0].mxu0 %v356
    %v2098 = vpop.f32.mrb[0].mxu0
    %v2099 = vadd.f32 0.0, %v2098
    %v2100 = vpop.f32.mrb[0].mxu0
    %2101 = vmatprep.mubr.f32.mxu0 0.0
    %2102 = vmatmul.mubr.f32.gmra.mrb[0].mxu0 %v358
    %v2103 = vpop.f32.mrb[0].mxu0
    %v2104 = vadd.f32 0.0, %v2103
    %v2105 = vpop.f32.mrb[0].mxu0
    %2106 = vdwg.mxu0
    %v2107 = vadd.f32 %v2030, %v2099
    %v2108 = vadd.f32 %v2031, %v2104
    %2109 = vmatprep.subr.mxu0 0.0
    %2110 = vmatpush1.msra.mxu0 %v1364
    %2111 = vmatprep.subr.mxu0 0.0
    %2112 = vmatpush1.msra.mxu0 %v1365
    %2113 = vmatprep.subr.mxu0 0.0
    %2114 = vmatpush1.msra.mxu0 %v1366
    %2115 = vmatprep.subr.mxu0 0.0
    %2116 = vmatpush1.msra.mxu0 %v1367
    %2117 = vmatprep.subr.mxu0 0.0
    %2118 = vmatpush1.msra.mxu0 0.0
    %2119 = vmatprep.subr.mxu0 0.0
    %2120 = vmatpush1.msra.mxu0 0.0
    %2121 = vmatprep.subr.mxu0 0.0
    %2122 = vmatpush1.msra.mxu0 0.0
    %2123 = vmatprep.subr.mxu0 0.0
    %2124 = vmatpush1.msra.mxu0 0.0
    %2125 = vmatprep.subr.mxu0 0.0
    %2126 = vmatpush1.msra.mxu0 0.0
    %2127 = vmatprep.subr.mxu0 0.0
    %2128 = vmatpush1.msra.mxu0 0.0
    %2129 = vmatprep.subr.mxu0 0.0
    %2130 = vmatpush1.msra.mxu0 0.0
    %2131 = vmatprep.subr.mxu0 0.0
    %2132 = vmatpush1.msra.mxu0 0.0
    %2133 = vmatprep.subr.mxu0 0.0
    %2134 = vmatpush1.msra.mxu0 0.0
    %2135 = vmatprep.subr.mxu0 0.0
    %2136 = vmatpush1.msra.mxu0 0.0
    %2137 = vmatprep.subr.mxu0 0.0
    %2138 = vmatpush1.msra.mxu0 0.0
    %2139 = vmatprep.subr.mxu0 0.0
    %2140 = vmatpush1.msra.mxu0 0.0
    %2141 = vmatprep.subr.mxu0 0.0
    %2142 = vmatpush1.msra.mxu0 0.0
    %2143 = vmatprep.subr.mxu0 0.0
    %2144 = vmatpush1.msra.mxu0 0.0
    %2145 = vmatprep.subr.mxu0 0.0
    %2146 = vmatpush1.msra.mxu0 0.0
    %2147 = vmatprep.subr.mxu0 0.0
    %2148 = vmatpush1.msra.mxu0 0.0
    %2149 = vmatprep.subr.mxu0 0.0
    %2150 = vmatpush1.msra.mxu0 0.0
    %2151 = vmatprep.subr.mxu0 0.0
    %2152 = vmatpush1.msra.mxu0 0.0
    %2153 = vmatprep.subr.mxu0 0.0
    %2154 = vmatpush1.msra.mxu0 0.0
    %2155 = vmatprep.subr.mxu0 0.0
    %2156 = vmatpush1.msra.mxu0 0.0
    %2157 = vmatprep.subr.mxu0 0.0
    %2158 = vmatpush1.msra.mxu0 0.0
    %2159 = vmatprep.subr.mxu0 0.0
    %2160 = vmatpush1.msra.mxu0 0.0
    %2161 = vmatprep.subr.mxu0 0.0
    %2162 = vmatpush1.msra.mxu0 0.0
    %2163 = vmatprep.subr.mxu0 0.0
    %2164 = vmatpush1.msra.mxu0 0.0
    %2165 = vmatprep.subr.mxu0 0.0
    %2166 = vmatpush1.msra.mxu0 0.0
    %2167 = vmatprep.subr.mxu0 0.0
    %2168 = vmatpush1.msra.mxu0 0.0
    %2169 = vmatprep.subr.mxu0 0.0
    %2170 = vmatpush1.msra.mxu0 0.0
    %2171 = vmatprep.subr.mxu0 0.0
    %2172 = vmatpush1.msra.mxu0 0.0
    %2173 = vmatprep.mubr.f32.mxu0 0.0
    %2174 = vmatmul.mubr.f32.gmra.mrb[0].mxu0 %v692
    %v2175 = vpop.f32.mrb[0].mxu0
    %v2176 = vadd.f32 0.0, %v2175
    %v2177 = vpop.f32.mrb[0].mxu0
    %2178 = vmatprep.mubr.f32.mxu0 0.0
    %2179 = vmatmul.mubr.f32.gmra.mrb[0].mxu0 %v694
    %v2180 = vpop.f32.mrb[0].mxu0
    %v2181 = vadd.f32 0.0, %v2180
    %v2182 = vpop.f32.mrb[0].mxu0
    %2183 = vdwg.mxu0
    %v2184 = vadd.f32 %v2107, %v2176
    %v2185 = vadd.f32 %v2108, %v2181
    %2186 = vmatprep.subr.mxu0 0.0
    %2187 = vmatpush1.msra.mxu0 %v1368
    %2188 = vmatprep.subr.mxu0 0.0
    %2189 = vmatpush1.msra.mxu0 %v1369
    %2190 = vmatprep.subr.mxu0 0.0
    %2191 = vmatpush1.msra.mxu0 %v1370
    %2192 = vmatprep.subr.mxu0 0.0
    %2193 = vmatpush1.msra.mxu0 %v1371
    %2194 = vmatprep.subr.mxu0 0.0
    %2195 = vmatpush1.msra.mxu0 0.0
    %2196 = vmatprep.subr.mxu0 0.0
    %2197 = vmatpush1.msra.mxu0 0.0
    %2198 = vmatprep.subr.mxu0 0.0
    %2199 = vmatpush1.msra.mxu0 0.0
    %2200 = vmatprep.subr.mxu0 0.0
    %2201 = vmatpush1.msra.mxu0 0.0
    %2202 = vmatprep.subr.mxu0 0.0
    %2203 = vmatpush1.msra.mxu0 0.0
    %2204 = vmatprep.subr.mxu0 0.0
    %2205 = vmatpush1.msra.mxu0 0.0
    %2206 = vmatprep.subr.mxu0 0.0
    %2207 = vmatpush1.msra.mxu0 0.0
    %2208 = vmatprep.subr.mxu0 0.0
    %2209 = vmatpush1.msra.mxu0 0.0
    %2210 = vmatprep.subr.mxu0 0.0
    %2211 = vmatpush1.msra.mxu0 0.0
    %2212 = vmatprep.subr.mxu0 0.0
    %2213 = vmatpush1.msra.mxu0 0.0
    %2214 = vmatprep.subr.mxu0 0.0
    %2215 = vmatpush1.msra.mxu0 0.0
    %2216 = vmatprep.subr.mxu0 0.0
    %2217 = vmatpush1.msra.mxu0 0.0
    %2218 = vmatprep.subr.mxu0 0.0
    %2219 = vmatpush1.msra.mxu0 0.0
    %2220 = vmatprep.subr.mxu0 0.0
    %2221 = vmatpush1.msra.mxu0 0.0
    %2222 = vmatprep.subr.mxu0 0.0
    %2223 = vmatpush1.msra.mxu0 0.0
    %2224 = vmatprep.subr.mxu0 0.0
    %2225 = vmatpush1.msra.mxu0 0.0
    %2226 = vmatprep.subr.mxu0 0.0
    %2227 = vmatpush1.msra.mxu0 0.0
    %2228 = vmatprep.subr.mxu0 0.0
    %2229 = vmatpush1.msra.mxu0 0.0
    %2230 = vmatprep.subr.mxu0 0.0
    %2231 = vmatpush1.msra.mxu0 0.0
    %2232 = vmatprep.subr.mxu0 0.0
    %2233 = vmatpush1.msra.mxu0 0.0
    %2234 = vmatprep.subr.mxu0 0.0
    %2235 = vmatpush1.msra.mxu0 0.0
    %2236 = vmatprep.subr.mxu0 0.0
    %2237 = vmatpush1.msra.mxu0 0.0
    %2238 = vmatprep.subr.mxu0 0.0
    %2239 = vmatpush1.msra.mxu0 0.0
    %2240 = vmatprep.subr.mxu0 0.0
    %2241 = vmatpush1.msra.mxu0 0.0
    %2242 = vmatprep.subr.mxu0 0.0
    %2243 = vmatpush1.msra.mxu0 0.0
    %2244 = vmatprep.subr.mxu0 0.0
    %2245 = vmatpush1.msra.mxu0 0.0
    %2246 = vmatprep.subr.mxu0 0.0
    %2247 = vmatpush1.msra.mxu0 0.0
    %2248 = vmatprep.subr.mxu0 0.0
    %2249 = vmatpush1.msra.mxu0 0.0
    %2250 = vmatprep.mubr.f32.mxu0 0.0
    %2251 = vmatmul.mubr.f32.gmra.mrb[0].mxu0 %v1172
    %v2252 = vpop.f32.mrb[0].mxu0
    %v2253 = vadd.f32 0.0, %v2252
    %v2254 = vpop.f32.mrb[0].mxu0
    %2255 = vmatprep.mubr.f32.mxu0 0.0
    %2256 = vmatmul.mubr.f32.gmra.mrb[0].mxu0 %v1174
    %v2257 = vpop.f32.mrb[0].mxu0
    %v2258 = vadd.f32 0.0, %v2257
    %v2259 = vpop.f32.mrb[0].mxu0
    %2260 = vdwg.mxu0
    %v2261 = vadd.f32 %v2184, %v2253
    %v2262 = vadd.f32 %v2185, %v2258
    %v2264 = vsel %vm219, %v2261, 0
    %v2267 = vsel %vm219, %v2262, 0
    %2269 = vmatprep.subr.mxu0 0.0
    %2270 = vmatpush1.msra.mxu0 %v1381
    %2271 = vmatprep.subr.mxu0 0.0
    %2272 = vmatpush1.msra.mxu0 %v1382
    %2273 = vmatprep.subr.mxu0 0.0
    %2274 = vmatpush1.msra.mxu0 %v1383
    %2275 = vmatprep.subr.mxu0 0.0
    %2276 = vmatpush1.msra.mxu0 %v1384
    %2277 = vmatprep.subr.mxu0 0.0
    %2278 = vmatpush1.msra.mxu0 0.0
    %2279 = vmatprep.subr.mxu0 0.0
    %2280 = vmatpush1.msra.mxu0 0.0
    %2281 = vmatprep.subr.mxu0 0.0
    %2282 = vmatpush1.msra.mxu0 0.0
    %2283 = vmatprep.subr.mxu0 0.0
    %2284 = vmatpush1.msra.mxu0 0.0
    %2285 = vmatprep.subr.mxu0 0.0
    %2286 = vmatpush1.msra.mxu0 0.0
    %2287 = vmatprep.subr.mxu0 0.0
    %2288 = vmatpush1.msra.mxu0 0.0
    %2289 = vmatprep.subr.mxu0 0.0
    %2290 = vmatpush1.msra.mxu0 0.0
    %2291 = vmatprep.subr.mxu0 0.0
    %2292 = vmatpush1.msra.mxu0 0.0
    %2293 = vmatprep.subr.mxu0 0.0
    %2294 = vmatpush1.msra.mxu0 0.0
    %2295 = vmatprep.subr.mxu0 0.0
    %2296 = vmatpush1.msra.mxu0 0.0
    %2297 = vmatprep.subr.mxu0 0.0
    %2298 = vmatpush1.msra.mxu0 0.0
    %2299 = vmatprep.subr.mxu0 0.0
    %2300 = vmatpush1.msra.mxu0 0.0
    %2301 = vmatprep.subr.mxu0 0.0
    %2302 = vmatpush1.msra.mxu0 0.0
    %2303 = vmatprep.subr.mxu0 0.0
    %2304 = vmatpush1.msra.mxu0 0.0
    %2305 = vmatprep.subr.mxu0 0.0
    %2306 = vmatpush1.msra.mxu0 0.0
    %2307 = vmatprep.subr.mxu0 0.0
    %2308 = vmatpush1.msra.mxu0 0.0
    %2309 = vmatprep.subr.mxu0 0.0
    %2310 = vmatpush1.msra.mxu0 0.0
    %2311 = vmatprep.subr.mxu0 0.0
    %2312 = vmatpush1.msra.mxu0 0.0
    %2313 = vmatprep.subr.mxu0 0.0
    %2314 = vmatpush1.msra.mxu0 0.0
    %2315 = vmatprep.subr.mxu0 0.0
    %2316 = vmatpush1.msra.mxu0 0.0
    %2317 = vmatprep.subr.mxu0 0.0
    %2318 = vmatpush1.msra.mxu0 0.0
    %2319 = vmatprep.subr.mxu0 0.0
    %2320 = vmatpush1.msra.mxu0 0.0
    %2321 = vmatprep.subr.mxu0 0.0
    %2322 = vmatpush1.msra.mxu0 0.0
    %2323 = vmatprep.subr.mxu0 0.0
    %2324 = vmatpush1.msra.mxu0 0.0
    %2325 = vmatprep.subr.mxu0 0.0
    %2326 = vmatpush1.msra.mxu0 0.0
    %2327 = vmatprep.subr.mxu0 0.0
    %2328 = vmatpush1.msra.mxu0 0.0
    %2329 = vmatprep.subr.mxu0 0.0
    %2330 = vmatpush1.msra.mxu0 0.0
    %2331 = vmatprep.subr.mxu0 0.0
    %2332 = vmatpush1.msra.mxu0 0.0
    %2333 = vmatprep.mubr.f32.mxu0 0.0
    %2334 = vmatmul.mubr.f32.gmra.mrb[0].mxu0 %v2264
    %v2335 = vpop.f32.mrb[0].mxu0
    %v2336 = vadd.f32 0.0, %v2335
    %v2337 = vpop.f32.mrb[0].mxu0
    %2338 = vmatprep.mubr.f32.mxu0 0.0
    %2339 = vmatmul.mubr.f32.gmra.mrb[0].mxu0 %v2267
    %v2340 = vpop.f32.mrb[0].mxu0
    %v2341 = vadd.f32 0.0, %v2340
    %v2342 = vpop.f32.mrb[0].mxu0
    %2343 = vdwg.mxu0
    %v2344 = vadd.f32 %v1872, %v2336
    %v2345 = vadd.f32 %v1873, %v2341
    %v2346 = vld [vmem:[#allocation14] sm:$0xff]
    %v2347 = vld [vmem:[#allocation14 + $0x8] sm:$0xff]
    %v2348 = vld [vmem:[#allocation14 + $0x10] sm:$0xff]
    %v2349 = vld [vmem:[#allocation14 + $0x18] sm:$0xff]
    %v2350 = vld [vmem:[#allocation14 + $0x20] sm:$0xff]
    %v2351 = vld [vmem:[#allocation14 + $0x28] sm:$0xff]
    %v2352 = vld [vmem:[#allocation14 + $0x30] sm:$0xff]
    %v2353 = vld [vmem:[#allocation14 + $0x38] sm:$0xff]
    %v2354 = vld [vmem:[#allocation14 + $0x40] sm:$0xff]
    %v2355 = vld [vmem:[#allocation14 + $0x48] sm:$0xff]
    %v2356 = vld [vmem:[#allocation14 + $0x50] sm:$0xff]
    %v2357 = vld [vmem:[#allocation14 + $0x58] sm:$0xff]
    %v2358 = vld [vmem:[#allocation14 + $0x60] sm:$0xff]
    %v2359 = vld [vmem:[#allocation14 + $0x68] sm:$0xff]
    %v2360 = vld [vmem:[#allocation14 + $0x70] sm:$0xff]
    %v2361 = vld [vmem:[#allocation14 + $0x78] sm:$0xff]
    %v2362 = vld [vmem:[#allocation14 + $0x80] sm:$0xff]
    %v2363 = vld [vmem:[#allocation14 + $0x88] sm:$0xff]
    %v2364 = vld [vmem:[#allocation14 + $0x90] sm:$0xff]
    %v2365 = vld [vmem:[#allocation14 + $0x98] sm:$0xff]
    %v2366 = vld [vmem:[#allocation14 + $0xa0] sm:$0xff]
    %v2367 = vld [vmem:[#allocation14 + $0xa8] sm:$0xff]
    %v2368 = vld [vmem:[#allocation14 + $0xb0] sm:$0xff]
    %v2369 = vld [vmem:[#allocation14 + $0xb8] sm:$0xff]
    %v2370 = vld [vmem:[#allocation14 + $0xc0] sm:$0xff]
    %v2371 = vld [vmem:[#allocation14 + $0xc8] sm:$0xff]
    %v2372 = vld [vmem:[#allocation14 + $0xd0] sm:$0xff]
    %v2373 = vld [vmem:[#allocation14 + $0xd8] sm:$0xff]
    %v2374 = vld [vmem:[#allocation14 + $0xe0] sm:$0xff]
    %v2375 = vld [vmem:[#allocation14 + $0xe8] sm:$0xff]
    %v2376 = vld [vmem:[#allocation14 + $0xf0] sm:$0xff]
    %v2377 = vld [vmem:[#allocation14 + $0xf8] sm:$0xff]
    %v2378 = vld [vmem:[#allocation14 + $0x100] sm:$0xff]
    %v2379 = vld [vmem:[#allocation14 + $0x108] sm:$0xff]
    %v2380 = vld [vmem:[#allocation14 + $0x110] sm:$0xff]
    %v2381 = vld [vmem:[#allocation14 + $0x118] sm:$0xff]
    %v2382 = vld [vmem:[%s13] sm:$0x7]
    %v2383 = vld [vmem:[%s14] sm:$0xff]
    %v2384 = vld [vmem:[%s14 + $0x8] sm:$0xff]
    %v2385 = vld [vmem:[%s14 + $0x10] sm:$0xff]
    %v2386 = vld [vmem:[%s14 + $0x18] sm:$0xff]
    %v2387 = vld [vmem:[%s14 + $0x20] sm:$0xff]
    %v2388 = vld [vmem:[%s14 + $0x28] sm:$0xff]
    %v2389 = vld [vmem:[%s14 + $0x30] sm:$0xff]
    %v2390 = vld [vmem:[%s14 + $0x38] sm:$0xff]
    %v2391 = vld [vmem:[%s14 + $0x40] sm:$0xff]
    %v2392 = vld [vmem:[%s14 + $0x48] sm:$0xff]
    %v2393 = vld [vmem:[%s14 + $0x50] sm:$0xff]
    %v2394 = vld [vmem:[%s14 + $0x58] sm:$0xff]
    %v2395 = vld [vmem:[%s15] sm:$0x1]
    %2396 = vmatprep.subr.mxu0 0.0
    %2397 = vmatpush1.msra.mxu0 %v2346
    %2398 = vmatprep.subr.mxu0 0.0
    %2399 = vmatpush1.msra.mxu0 %v2347
    %2400 = vmatprep.subr.mxu0 0.0
    %2401 = vmatpush1.msra.mxu0 %v2348
    %2402 = vmatprep.subr.mxu0 0.0
    %2403 = vmatpush1.msra.mxu0 %v2349
    %2404 = vmatprep.subr.mxu0 0.0
    %2405 = vmatpush1.msra.mxu0 0.0
    %2406 = vmatprep.subr.mxu0 0.0
    %2407 = vmatpush1.msra.mxu0 0.0
    %2408 = vmatprep.subr.mxu0 0.0
    %2409 = vmatpush1.msra.mxu0 0.0
    %2410 = vmatprep.subr.mxu0 0.0
    %2411 = vmatpush1.msra.mxu0 0.0
    %2412 = vmatprep.subr.mxu0 0.0
    %2413 = vmatpush1.msra.mxu0 0.0
    %2414 = vmatprep.subr.mxu0 0.0
    %2415 = vmatpush1.msra.mxu0 0.0
    %2416 = vmatprep.subr.mxu0 0.0
    %2417 = vmatpush1.msra.mxu0 0.0
    %2418 = vmatprep.subr.mxu0 0.0
    %2419 = vmatpush1.msra.mxu0 0.0
    %2420 = vmatprep.subr.mxu0 0.0
    %2421 = vmatpush1.msra.mxu0 0.0
    %2422 = vmatprep.subr.mxu0 0.0
    %2423 = vmatpush1.msra.mxu0 0.0
    %2424 = vmatprep.subr.mxu0 0.0
    %2425 = vmatpush1.msra.mxu0 0.0
    %2426 = vmatprep.subr.mxu0 0.0
    %2427 = vmatpush1.msra.mxu0 0.0
    %2428 = vmatprep.subr.mxu0 0.0
    %2429 = vmatpush1.msra.mxu0 0.0
    %2430 = vmatprep.subr.mxu0 0.0
    %2431 = vmatpush1.msra.mxu0 0.0
    %2432 = vmatprep.subr.mxu0 0.0
    %2433 = vmatpush1.msra.mxu0 0.0
    %2434 = vmatprep.subr.mxu0 0.0
    %2435 = vmatpush1.msra.mxu0 0.0
    %2436 = vmatprep.subr.mxu0 0.0
    %2437 = vmatpush1.msra.mxu0 0.0
    %2438 = vmatprep.subr.mxu0 0.0
    %2439 = vmatpush1.msra.mxu0 0.0
    %2440 = vmatprep.subr.mxu0 0.0
    %2441 = vmatpush1.msra.mxu0 0.0
    %2442 = vmatprep.subr.mxu0 0.0
    %2443 = vmatpush1.msra.mxu0 0.0
    %2444 = vmatprep.subr.mxu0 0.0
    %2445 = vmatpush1.msra.mxu0 0.0
    %2446 = vmatprep.subr.mxu0 0.0
    %2447 = vmatpush1.msra.mxu0 0.0
    %2448 = vmatprep.subr.mxu0 0.0
    %2449 = vmatpush1.msra.mxu0 0.0
    %2450 = vmatprep.subr.mxu0 0.0
    %2451 = vmatpush1.msra.mxu0 0.0
    %2452 = vmatprep.subr.mxu0 0.0
    %2453 = vmatpush1.msra.mxu0 0.0
    %2454 = vmatprep.subr.mxu0 0.0
    %2455 = vmatpush1.msra.mxu0 0.0
    %2456 = vmatprep.subr.mxu0 0.0
    %2457 = vmatpush1.msra.mxu0 0.0
    %2458 = vmatprep.subr.mxu0 0.0
    %2459 = vmatpush1.msra.mxu0 0.0
    %2460 = vmatprep.mubr.f32.mxu0 0.0
    %2461 = vmatmul.mubr.f32.gmra.mrb[0].mxu0 %v356
    %v2462 = vpop.f32.mrb[0].mxu0
    %v2463 = vadd.f32 0.0, %v2462
    %v2464 = vpop.f32.mrb[0].mxu0
    %2465 = vmatprep.mubr.f32.mxu0 0.0
    %2466 = vmatmul.mubr.f32.gmra.mrb[0].mxu0 %v358
    %v2467 = vpop.f32.mrb[0].mxu0
    %v2468 = vadd.f32 0.0, %v2467
    %v2469 = vpop.f32.mrb[0].mxu0
    %2470 = vdwg.mxu0
    %v2471 = vlaneseq
    %v2472 = vshrl.u32 %v2471, 7
    %v2473 = vsub.s32 0, %v2472
    %v2474 = vrot.slane %v2382, %v2473
    %v2475 = vadd.f32 %v2474, %v2463
    %v2476 = vadd.f32 %v2474, %v2468
    %v2478 = vsel %vm219, %v2475, 0
    %v2481 = vsel %vm219, %v2476, 0
    %2483 = vmatprep.subr.mxu0 0.0
    %2484 = vmatpush1.msra.mxu0 %v2383
    %2485 = vmatprep.subr.mxu0 0.0
    %2486 = vmatpush1.msra.mxu0 %v2384
    %2487 = vmatprep.subr.mxu0 0.0
    %2488 = vmatpush1.msra.mxu0 %v2385
    %2489 = vmatprep.subr.mxu0 0.0
    %2490 = vmatpush1.msra.mxu0 %v2386
    %2491 = vmatprep.subr.mxu0 0.0
    %2492 = vmatpush1.msra.mxu0 0.0
    %2493 = vmatprep.subr.mxu0 0.0
    %2494 = vmatpush1.msra.mxu0 0.0
    %2495 = vmatprep.subr.mxu0 0.0
    %2496 = vmatpush1.msra.mxu0 0.0
    %2497 = vmatprep.subr.mxu0 0.0
    %2498 = vmatpush1.msra.mxu0 0.0
    %2499 = vmatprep.subr.mxu0 0.0
    %2500 = vmatpush1.msra.mxu0 0.0
    %2501 = vmatprep.subr.mxu0 0.0
    %2502 = vmatpush1.msra.mxu0 0.0
    %2503 = vmatprep.subr.mxu0 0.0
    %2504 = vmatpush1.msra.mxu0 0.0
    %2505 = vmatprep.subr.mxu0 0.0
    %2506 = vmatpush1.msra.mxu0 0.0
    %2507 = vmatprep.subr.mxu0 0.0
    %2508 = vmatpush1.msra.mxu0 0.0
    %2509 = vmatprep.subr.mxu0 0.0
    %2510 = vmatpush1.msra.mxu0 0.0
    %2511 = vmatprep.subr.mxu0 0.0
    %2512 = vmatpush1.msra.mxu0 0.0
    %2513 = vmatprep.subr.mxu0 0.0
    %2514 = vmatpush1.msra.mxu0 0.0
    %2515 = vmatprep.subr.mxu0 0.0
    %2516 = vmatpush1.msra.mxu0 0.0
    %2517 = vmatprep.subr.mxu0 0.0
    %2518 = vmatpush1.msra.mxu0 0.0
    %2519 = vmatprep.subr.mxu0 0.0
    %2520 = vmatpush1.msra.mxu0 0.0
    %2521 = vmatprep.subr.mxu0 0.0
    %2522 = vmatpush1.msra.mxu0 0.0
    %2523 = vmatprep.subr.mxu0 0.0
    %2524 = vmatpush1.msra.mxu0 0.0
    %2525 = vmatprep.subr.mxu0 0.0
    %2526 = vmatpush1.msra.mxu0 0.0
    %2527 = vmatprep.subr.mxu0 0.0
    %2528 = vmatpush1.msra.mxu0 0.0
    %2529 = vmatprep.subr.mxu0 0.0
    %2530 = vmatpush1.msra.mxu0 0.0
    %2531 = vmatprep.subr.mxu0 0.0
    %2532 = vmatpush1.msra.mxu0 0.0
    %2533 = vmatprep.subr.mxu0 0.0
    %2534 = vmatpush1.msra.mxu0 0.0
    %2535 = vmatprep.subr.mxu0 0.0
    %2536 = vmatpush1.msra.mxu0 0.0
    %2537 = vmatprep.subr.mxu0 0.0
    %2538 = vmatpush1.msra.mxu0 0.0
    %2539 = vmatprep.subr.mxu0 0.0
    %2540 = vmatpush1.msra.mxu0 0.0
    %2541 = vmatprep.subr.mxu0 0.0
    %2542 = vmatpush1.msra.mxu0 0.0
    %2543 = vmatprep.subr.mxu0 0.0
    %2544 = vmatpush1.msra.mxu0 0.0
    %2545 = vmatprep.subr.mxu0 0.0
    %2546 = vmatpush1.msra.mxu0 0.0
    %2547 = vmatprep.mubr.f32.mxu0 0.0
    %2548 = vmatmul.mubr.f32.gmra.mrb[0].mxu0 %v2478
    %v2549 = vpop.f32.mrb[0].mxu0
    %v2550 = vadd.f32 0.0, %v2549
    %v2551 = vpop.f32.mrb[0].mxu0
    %2552 = vmatprep.mubr.f32.mxu0 0.0
    %2553 = vmatmul.mubr.f32.gmra.mrb[0].mxu0 %v2481
    %v2554 = vpop.f32.mrb[0].mxu0
    %v2555 = vadd.f32 0.0, %v2554
    %v2556 = vpop.f32.mrb[0].mxu0
    %2557 = vdwg.mxu0
    %v2559 = vlaneseq
    %v2560 = vshrl.u32 %v2559, 7
    %v2561 = vsub.s32 0, %v2560
    %v2562 = vrot.slane %v2395, %v2561
    %v2564 = vadd.f32 %v2562, %v2550
    %v2565 = vadd.f32 %v2562, %v2555
    %2566 = vmatprep.subr.mxu0 0.0
    %2567 = vmatpush1.msra.mxu0 %v2350
    %2568 = vmatprep.subr.mxu0 0.0
    %2569 = vmatpush1.msra.mxu0 %v2351
    %2570 = vmatprep.subr.mxu0 0.0
    %2571 = vmatpush1.msra.mxu0 %v2352
    %2572 = vmatprep.subr.mxu0 0.0
    %2573 = vmatpush1.msra.mxu0 %v2353
    %2574 = vmatprep.subr.mxu0 0.0
    %2575 = vmatpush1.msra.mxu0 0.0
    %2576 = vmatprep.subr.mxu0 0.0
    %2577 = vmatpush1.msra.mxu0 0.0
    %2578 = vmatprep.subr.mxu0 0.0
    %2579 = vmatpush1.msra.mxu0 0.0
    %2580 = vmatprep.subr.mxu0 0.0
    %2581 = vmatpush1.msra.mxu0 0.0
    %2582 = vmatprep.subr.mxu0 0.0
    %2583 = vmatpush1.msra.mxu0 0.0
    %2584 = vmatprep.subr.mxu0 0.0
    %2585 = vmatpush1.msra.mxu0 0.0
    %2586 = vmatprep.subr.mxu0 0.0
    %2587 = vmatpush1.msra.mxu0 0.0
    %2588 = vmatprep.subr.mxu0 0.0
    %2589 = vmatpush1.msra.mxu0 0.0
    %2590 = vmatprep.subr.mxu0 0.0
    %2591 = vmatpush1.msra.mxu0 0.0
    %2592 = vmatprep.subr.mxu0 0.0
    %2593 = vmatpush1.msra.mxu0 0.0
    %2594 = vmatprep.subr.mxu0 0.0
    %2595 = vmatpush1.msra.mxu0 0.0
    %2596 = vmatprep.subr.mxu0 0.0
    %2597 = vmatpush1.msra.mxu0 0.0
    %2598 = vmatprep.subr.mxu0 0.0
    %2599 = vmatpush1.msra.mxu0 0.0
    %2600 = vmatprep.subr.mxu0 0.0
    %2601 = vmatpush1.msra.mxu0 0.0
    %2602 = vmatprep.subr.mxu0 0.0
    %2603 = vmatpush1.msra.mxu0 0.0
    %2604 = vmatprep.subr.mxu0 0.0
    %2605 = vmatpush1.msra.mxu0 0.0
    %2606 = vmatprep.subr.mxu0 0.0
    %2607 = vmatpush1.msra.mxu0 0.0
    %2608 = vmatprep.subr.mxu0 0.0
    %2609 = vmatpush1.msra.mxu0 0.0
    %2610 = vmatprep.subr.mxu0 0.0
    %2611 = vmatpush1.msra.mxu0 0.0
    %2612 = vmatprep.subr.mxu0 0.0
    %2613 = vmatpush1.msra.mxu0 0.0
    %2614 = vmatprep.subr.mxu0 0.0
    %2615 = vmatpush1.msra.mxu0 0.0
    %2616 = vmatprep.subr.mxu0 0.0
    %2617 = vmatpush1.msra.mxu0 0.0
    %2618 = vmatprep.subr.mxu0 0.0
    %2619 = vmatpush1.msra.mxu0 0.0
    %2620 = vmatprep.subr.mxu0 0.0
    %2621 = vmatpush1.msra.mxu0 0.0
    %2622 = vmatprep.subr.mxu0 0.0
    %2623 = vmatpush1.msra.mxu0 0.0
    %2624 = vmatprep.subr.mxu0 0.0
    %2625 = vmatpush1.msra.mxu0 0.0
    %2626 = vmatprep.subr.mxu0 0.0
    %2627 = vmatpush1.msra.mxu0 0.0
    %2628 = vmatprep.subr.mxu0 0.0
    %2629 = vmatpush1.msra.mxu0 0.0
    %2630 = vmatprep.mubr.f32.mxu0 0.0
    %2631 = vmatmul.mubr.f32.gmra.mrb[0].mxu0 %v530
    %v2632 = vpop.f32.mrb[0].mxu0
    %v2633 = vadd.f32 0.0, %v2632
    %v2634 = vpop.f32.mrb[0].mxu0
    %2635 = vmatprep.mubr.f32.mxu0 0.0
    %2636 = vmatmul.mubr.f32.gmra.mrb[0].mxu0 %v532
    %v2637 = vpop.f32.mrb[0].mxu0
    %v2638 = vadd.f32 0.0, %v2637
    %v2639 = vpop.f32.mrb[0].mxu0
    %2640 = vdwg.mxu0
    %v2641 = vlaneseq
    %v2642 = vshrl.u32 %v2641, 7
    %v2643 = vsub.s32 1, %v2642
    %v2644 = vrot.slane %v2382, %v2643
    %v2645 = vadd.f32 %v2644, %v2633
    %v2646 = vadd.f32 %v2644, %v2638
    %2647 = vmatprep.subr.mxu0 0.0
    %2648 = vmatpush1.msra.mxu0 %v2354
    %2649 = vmatprep.subr.mxu0 0.0
    %2650 = vmatpush1.msra.mxu0 %v2355
    %2651 = vmatprep.subr.mxu0 0.0
    %2652 = vmatpush1.msra.mxu0 %v2356
    %2653 = vmatprep.subr.mxu0 0.0
    %2654 = vmatpush1.msra.mxu0 %v2357
    %2655 = vmatprep.subr.mxu0 0.0
    %2656 = vmatpush1.msra.mxu0 0.0
    %2657 = vmatprep.subr.mxu0 0.0
    %2658 = vmatpush1.msra.mxu0 0.0
    %2659 = vmatprep.subr.mxu0 0.0
    %2660 = vmatpush1.msra.mxu0 0.0
    %2661 = vmatprep.subr.mxu0 0.0
    %2662 = vmatpush1.msra.mxu0 0.0
    %2663 = vmatprep.subr.mxu0 0.0
    %2664 = vmatpush1.msra.mxu0 0.0
    %2665 = vmatprep.subr.mxu0 0.0
    %2666 = vmatpush1.msra.mxu0 0.0
    %2667 = vmatprep.subr.mxu0 0.0
    %2668 = vmatpush1.msra.mxu0 0.0
    %2669 = vmatprep.subr.mxu0 0.0
    %2670 = vmatpush1.msra.mxu0 0.0
    %2671 = vmatprep.subr.mxu0 0.0
    %2672 = vmatpush1.msra.mxu0 0.0
    %2673 = vmatprep.subr.mxu0 0.0
    %2674 = vmatpush1.msra.mxu0 0.0
    %2675 = vmatprep.subr.mxu0 0.0
    %2676 = vmatpush1.msra.mxu0 0.0
    %2677 = vmatprep.subr.mxu0 0.0
    %2678 = vmatpush1.msra.mxu0 0.0
    %2679 = vmatprep.subr.mxu0 0.0
    %2680 = vmatpush1.msra.mxu0 0.0
    %2681 = vmatprep.subr.mxu0 0.0
    %2682 = vmatpush1.msra.mxu0 0.0
    %2683 = vmatprep.subr.mxu0 0.0
    %2684 = vmatpush1.msra.mxu0 0.0
    %2685 = vmatprep.subr.mxu0 0.0
    %2686 = vmatpush1.msra.mxu0 0.0
    %2687 = vmatprep.subr.mxu0 0.0
    %2688 = vmatpush1.msra.mxu0 0.0
    %2689 = vmatprep.subr.mxu0 0.0
    %2690 = vmatpush1.msra.mxu0 0.0
    %2691 = vmatprep.subr.mxu0 0.0
    %2692 = vmatpush1.msra.mxu0 0.0
    %2693 = vmatprep.subr.mxu0 0.0
    %2694 = vmatpush1.msra.mxu0 0.0
    %2695 = vmatprep.subr.mxu0 0.0
    %2696 = vmatpush1.msra.mxu0 0.0
    %2697 = vmatprep.subr.mxu0 0.0
    %2698 = vmatpush1.msra.mxu0 0.0
    %2699 = vmatprep.subr.mxu0 0.0
    %2700 = vmatpush1.msra.mxu0 0.0
    %2701 = vmatprep.subr.mxu0 0.0
    %2702 = vmatpush1.msra.mxu0 0.0
    %2703 = vmatprep.subr.mxu0 0.0
    %2704 = vmatpush1.msra.mxu0 0.0
    %2705 = vmatprep.subr.mxu0 0.0
    %2706 = vmatpush1.msra.mxu0 0.0
    %2707 = vmatprep.subr.mxu0 0.0
    %2708 = vmatpush1.msra.mxu0 0.0
    %2709 = vmatprep.subr.mxu0 0.0
    %2710 = vmatpush1.msra.mxu0 0.0
    %2711 = vmatprep.mubr.f32.mxu0 0.0
    %2712 = vmatmul.mubr.f32.gmra.mrb[0].mxu0 %v356
    %v2713 = vpop.f32.mrb[0].mxu0
    %v2714 = vadd.f32 0.0, %v2713
    %v2715 = vpop.f32.mrb[0].mxu0
    %2716 = vmatprep.mubr.f32.mxu0 0.0
    %2717 = vmatmul.mubr.f32.gmra.mrb[0].mxu0 %v358
    %v2718 = vpop.f32.mrb[0].mxu0
    %v2719 = vadd.f32 0.0, %v2718
    %v2720 = vpop.f32.mrb[0].mxu0
    %2721 = vdwg.mxu0
    %v2722 = vadd.f32 %v2645, %v2714
    %v2723 = vadd.f32 %v2646, %v2719
    %2724 = vmatprep.subr.mxu0 0.0
    %2725 = vmatpush1.msra.mxu0 %v2358
    %2726 = vmatprep.subr.mxu0 0.0
    %2727 = vmatpush1.msra.mxu0 %v2359
    %2728 = vmatprep.subr.mxu0 0.0
    %2729 = vmatpush1.msra.mxu0 %v2360
    %2730 = vmatprep.subr.mxu0 0.0
    %2731 = vmatpush1.msra.mxu0 %v2361
    %2732 = vmatprep.subr.mxu0 0.0
    %2733 = vmatpush1.msra.mxu0 0.0
    %2734 = vmatprep.subr.mxu0 0.0
    %2735 = vmatpush1.msra.mxu0 0.0
    %2736 = vmatprep.subr.mxu0 0.0
    %2737 = vmatpush1.msra.mxu0 0.0
    %2738 = vmatprep.subr.mxu0 0.0
    %2739 = vmatpush1.msra.mxu0 0.0
    %2740 = vmatprep.subr.mxu0 0.0
    %2741 = vmatpush1.msra.mxu0 0.0
    %2742 = vmatprep.subr.mxu0 0.0
    %2743 = vmatpush1.msra.mxu0 0.0
    %2744 = vmatprep.subr.mxu0 0.0
    %2745 = vmatpush1.msra.mxu0 0.0
    %2746 = vmatprep.subr.mxu0 0.0
    %2747 = vmatpush1.msra.mxu0 0.0
    %2748 = vmatprep.subr.mxu0 0.0
    %2749 = vmatpush1.msra.mxu0 0.0
    %2750 = vmatprep.subr.mxu0 0.0
    %2751 = vmatpush1.msra.mxu0 0.0
    %2752 = vmatprep.subr.mxu0 0.0
    %2753 = vmatpush1.msra.mxu0 0.0
    %2754 = vmatprep.subr.mxu0 0.0
    %2755 = vmatpush1.msra.mxu0 0.0
    %2756 = vmatprep.subr.mxu0 0.0
    %2757 = vmatpush1.msra.mxu0 0.0
    %2758 = vmatprep.subr.mxu0 0.0
    %2759 = vmatpush1.msra.mxu0 0.0
    %2760 = vmatprep.subr.mxu0 0.0
    %2761 = vmatpush1.msra.mxu0 0.0
    %2762 = vmatprep.subr.mxu0 0.0
    %2763 = vmatpush1.msra.mxu0 0.0
    %2764 = vmatprep.subr.mxu0 0.0
    %2765 = vmatpush1.msra.mxu0 0.0
    %2766 = vmatprep.subr.mxu0 0.0
    %2767 = vmatpush1.msra.mxu0 0.0
    %2768 = vmatprep.subr.mxu0 0.0
    %2769 = vmatpush1.msra.mxu0 0.0
    %2770 = vmatprep.subr.mxu0 0.0
    %2771 = vmatpush1.msra.mxu0 0.0
    %2772 = vmatprep.subr.mxu0 0.0
    %2773 = vmatpush1.msra.mxu0 0.0
    %2774 = vmatprep.subr.mxu0 0.0
    %2775 = vmatpush1.msra.mxu0 0.0
    %2776 = vmatprep.subr.mxu0 0.0
    %2777 = vmatpush1.msra.mxu0 0.0
    %2778 = vmatprep.subr.mxu0 0.0
    %2779 = vmatpush1.msra.mxu0 0.0
    %2780 = vmatprep.subr.mxu0 0.0
    %2781 = vmatpush1.msra.mxu0 0.0
    %2782 = vmatprep.subr.mxu0 0.0
    %2783 = vmatpush1.msra.mxu0 0.0
    %2784 = vmatprep.subr.mxu0 0.0
    %2785 = vmatpush1.msra.mxu0 0.0
    %2786 = vmatprep.subr.mxu0 0.0
    %2787 = vmatpush1.msra.mxu0 0.0
    %2788 = vmatprep.mubr.f32.mxu0 0.0
    %2789 = vmatmul.mubr.f32.gmra.mrb[0].mxu0 %v692
    %v2790 = vpop.f32.mrb[0].mxu0
    %v2791 = vadd.f32 0.0, %v2790
    %v2792 = vpop.f32.mrb[0].mxu0
    %2793 = vmatprep.mubr.f32.mxu0 0.0
    %2794 = vmatmul.mubr.f32.gmra.mrb[0].mxu0 %v694
    %v2795 = vpop.f32.mrb[0].mxu0
    %v2796 = vadd.f32 0.0, %v2795
    %v2797 = vpop.f32.mrb[0].mxu0
    %2798 = vdwg.mxu0
    %v2799 = vadd.f32 %v2722, %v2791
    %v2800 = vadd.f32 %v2723, %v2796
    %v2802 = vsel %vm219, %v2799, 0
    %v2805 = vsel %vm219, %v2800, 0
    %2807 = vmatprep.subr.mxu0 0.0
    %2808 = vmatpush1.msra.mxu0 %v2387
    %2809 = vmatprep.subr.mxu0 0.0
    %2810 = vmatpush1.msra.mxu0 %v2388
    %2811 = vmatprep.subr.mxu0 0.0
    %2812 = vmatpush1.msra.mxu0 %v2389
    %2813 = vmatprep.subr.mxu0 0.0
    %2814 = vmatpush1.msra.mxu0 %v2390
    %2815 = vmatprep.subr.mxu0 0.0
    %2816 = vmatpush1.msra.mxu0 0.0
    %2817 = vmatprep.subr.mxu0 0.0
    %2818 = vmatpush1.msra.mxu0 0.0
    %2819 = vmatprep.subr.mxu0 0.0
    %2820 = vmatpush1.msra.mxu0 0.0
    %2821 = vmatprep.subr.mxu0 0.0
    %2822 = vmatpush1.msra.mxu0 0.0
    %2823 = vmatprep.subr.mxu0 0.0
    %2824 = vmatpush1.msra.mxu0 0.0
    %2825 = vmatprep.subr.mxu0 0.0
    %2826 = vmatpush1.msra.mxu0 0.0
    %2827 = vmatprep.subr.mxu0 0.0
    %2828 = vmatpush1.msra.mxu0 0.0
    %2829 = vmatprep.subr.mxu0 0.0
    %2830 = vmatpush1.msra.mxu0 0.0
    %2831 = vmatprep.subr.mxu0 0.0
    %2832 = vmatpush1.msra.mxu0 0.0
    %2833 = vmatprep.subr.mxu0 0.0
    %2834 = vmatpush1.msra.mxu0 0.0
    %2835 = vmatprep.subr.mxu0 0.0
    %2836 = vmatpush1.msra.mxu0 0.0
    %2837 = vmatprep.subr.mxu0 0.0
    %2838 = vmatpush1.msra.mxu0 0.0
    %2839 = vmatprep.subr.mxu0 0.0
    %2840 = vmatpush1.msra.mxu0 0.0
    %2841 = vmatprep.subr.mxu0 0.0
    %2842 = vmatpush1.msra.mxu0 0.0
    %2843 = vmatprep.subr.mxu0 0.0
    %2844 = vmatpush1.msra.mxu0 0.0
    %2845 = vmatprep.subr.mxu0 0.0
    %2846 = vmatpush1.msra.mxu0 0.0
    %2847 = vmatprep.subr.mxu0 0.0
    %2848 = vmatpush1.msra.mxu0 0.0
    %2849 = vmatprep.subr.mxu0 0.0
    %2850 = vmatpush1.msra.mxu0 0.0
    %2851 = vmatprep.subr.mxu0 0.0
    %2852 = vmatpush1.msra.mxu0 0.0
    %2853 = vmatprep.subr.mxu0 0.0
    %2854 = vmatpush1.msra.mxu0 0.0
    %2855 = vmatprep.subr.mxu0 0.0
    %2856 = vmatpush1.msra.mxu0 0.0
    %2857 = vmatprep.subr.mxu0 0.0
    %2858 = vmatpush1.msra.mxu0 0.0
    %2859 = vmatprep.subr.mxu0 0.0
    %2860 = vmatpush1.msra.mxu0 0.0
    %2861 = vmatprep.subr.mxu0 0.0
    %2862 = vmatpush1.msra.mxu0 0.0
    %2863 = vmatprep.subr.mxu0 0.0
    %2864 = vmatpush1.msra.mxu0 0.0
    %2865 = vmatprep.subr.mxu0 0.0
    %2866 = vmatpush1.msra.mxu0 0.0
    %2867 = vmatprep.subr.mxu0 0.0
    %2868 = vmatpush1.msra.mxu0 0.0
    %2869 = vmatprep.subr.mxu0 0.0
    %2870 = vmatpush1.msra.mxu0 0.0
    %2871 = vmatprep.mubr.f32.mxu0 0.0
    %2872 = vmatmul.mubr.f32.gmra.mrb[0].mxu0 %v2802
    %v2873 = vpop.f32.mrb[0].mxu0
    %v2874 = vadd.f32 0.0, %v2873
    %v2875 = vpop.f32.mrb[0].mxu0
    %2876 = vmatprep.mubr.f32.mxu0 0.0
    %2877 = vmatmul.mubr.f32.gmra.mrb[0].mxu0 %v2805
    %v2878 = vpop.f32.mrb[0].mxu0
    %v2879 = vadd.f32 0.0, %v2878
    %v2880 = vpop.f32.mrb[0].mxu0
    %2881 = vdwg.mxu0
    %v2882 = vadd.f32 %v2564, %v2874
    %v2883 = vadd.f32 %v2565, %v2879
    %2884 = vmatprep.subr.mxu0 0.0
    %2885 = vmatpush1.msra.mxu0 %v2362
    %2886 = vmatprep.subr.mxu0 0.0
    %2887 = vmatpush1.msra.mxu0 %v2363
    %2888 = vmatprep.subr.mxu0 0.0
    %2889 = vmatpush1.msra.mxu0 %v2364
    %2890 = vmatprep.subr.mxu0 0.0
    %2891 = vmatpush1.msra.mxu0 %v2365
    %2892 = vmatprep.subr.mxu0 0.0
    %2893 = vmatpush1.msra.mxu0 0.0
    %2894 = vmatprep.subr.mxu0 0.0
    %2895 = vmatpush1.msra.mxu0 0.0
    %2896 = vmatprep.subr.mxu0 0.0
    %2897 = vmatpush1.msra.mxu0 0.0
    %2898 = vmatprep.subr.mxu0 0.0
    %2899 = vmatpush1.msra.mxu0 0.0
    %2900 = vmatprep.subr.mxu0 0.0
    %2901 = vmatpush1.msra.mxu0 0.0
    %2902 = vmatprep.subr.mxu0 0.0
    %2903 = vmatpush1.msra.mxu0 0.0
    %2904 = vmatprep.subr.mxu0 0.0
    %2905 = vmatpush1.msra.mxu0 0.0
    %2906 = vmatprep.subr.mxu0 0.0
    %2907 = vmatpush1.msra.mxu0 0.0
    %2908 = vmatprep.subr.mxu0 0.0
    %2909 = vmatpush1.msra.mxu0 0.0
    %2910 = vmatprep.subr.mxu0 0.0
    %2911 = vmatpush1.msra.mxu0 0.0
    %2912 = vmatprep.subr.mxu0 0.0
    %2913 = vmatpush1.msra.mxu0 0.0
    %2914 = vmatprep.subr.mxu0 0.0
    %2915 = vmatpush1.msra.mxu0 0.0
    %2916 = vmatprep.subr.mxu0 0.0
    %2917 = vmatpush1.msra.mxu0 0.0
    %2918 = vmatprep.subr.mxu0 0.0
    %2919 = vmatpush1.msra.mxu0 0.0
    %2920 = vmatprep.subr.mxu0 0.0
    %2921 = vmatpush1.msra.mxu0 0.0
    %2922 = vmatprep.subr.mxu0 0.0
    %2923 = vmatpush1.msra.mxu0 0.0
    %2924 = vmatprep.subr.mxu0 0.0
    %2925 = vmatpush1.msra.mxu0 0.0
    %2926 = vmatprep.subr.mxu0 0.0
    %2927 = vmatpush1.msra.mxu0 0.0
    %2928 = vmatprep.subr.mxu0 0.0
    %2929 = vmatpush1.msra.mxu0 0.0
    %2930 = vmatprep.subr.mxu0 0.0
    %2931 = vmatpush1.msra.mxu0 0.0
    %2932 = vmatprep.subr.mxu0 0.0
    %2933 = vmatpush1.msra.mxu0 0.0
    %2934 = vmatprep.subr.mxu0 0.0
    %2935 = vmatpush1.msra.mxu0 0.0
    %2936 = vmatprep.subr.mxu0 0.0
    %2937 = vmatpush1.msra.mxu0 0.0
    %2938 = vmatprep.subr.mxu0 0.0
    %2939 = vmatpush1.msra.mxu0 0.0
    %2940 = vmatprep.subr.mxu0 0.0
    %2941 = vmatpush1.msra.mxu0 0.0
    %2942 = vmatprep.subr.mxu0 0.0
    %2943 = vmatpush1.msra.mxu0 0.0
    %2944 = vmatprep.subr.mxu0 0.0
    %2945 = vmatpush1.msra.mxu0 0.0
    %2946 = vmatprep.subr.mxu0 0.0
    %2947 = vmatpush1.msra.mxu0 0.0
    %2948 = vmatprep.mubr.f32.mxu0 0.0
    %2949 = vmatmul.mubr.f32.gmra.mrb[0].mxu0 %v856
    %v2950 = vpop.f32.mrb[0].mxu0
    %v2951 = vadd.f32 0.0, %v2950
    %v2952 = vpop.f32.mrb[0].mxu0
    %2953 = vmatprep.mubr.f32.mxu0 0.0
    %2954 = vmatmul.mubr.f32.gmra.mrb[0].mxu0 %v858
    %v2955 = vpop.f32.mrb[0].mxu0
    %v2956 = vadd.f32 0.0, %v2955
    %v2957 = vpop.f32.mrb[0].mxu0
    %2958 = vdwg.mxu0
    %v2959 = vlaneseq
    %v2960 = vshrl.u32 %v2959, 7
    %v2961 = vsub.s32 2, %v2960
    %v2962 = vrot.slane %v2382, %v2961
    %v2963 = vadd.f32 %v2962, %v2951
    %v2964 = vadd.f32 %v2962, %v2956
    %2965 = vmatprep.subr.mxu0 0.0
    %2966 = vmatpush1.msra.mxu0 %v2366
    %2967 = vmatprep.subr.mxu0 0.0
    %2968 = vmatpush1.msra.mxu0 %v2367
    %2969 = vmatprep.subr.mxu0 0.0
    %2970 = vmatpush1.msra.mxu0 %v2368
    %2971 = vmatprep.subr.mxu0 0.0
    %2972 = vmatpush1.msra.mxu0 %v2369
    %2973 = vmatprep.subr.mxu0 0.0
    %2974 = vmatpush1.msra.mxu0 0.0
    %2975 = vmatprep.subr.mxu0 0.0
    %2976 = vmatpush1.msra.mxu0 0.0
    %2977 = vmatprep.subr.mxu0 0.0
    %2978 = vmatpush1.msra.mxu0 0.0
    %2979 = vmatprep.subr.mxu0 0.0
    %2980 = vmatpush1.msra.mxu0 0.0
    %2981 = vmatprep.subr.mxu0 0.0
    %2982 = vmatpush1.msra.mxu0 0.0
    %2983 = vmatprep.subr.mxu0 0.0
    %2984 = vmatpush1.msra.mxu0 0.0
    %2985 = vmatprep.subr.mxu0 0.0
    %2986 = vmatpush1.msra.mxu0 0.0
    %2987 = vmatprep.subr.mxu0 0.0
    %2988 = vmatpush1.msra.mxu0 0.0
    %2989 = vmatprep.subr.mxu0 0.0
    %2990 = vmatpush1.msra.mxu0 0.0
    %2991 = vmatprep.subr.mxu0 0.0
    %2992 = vmatpush1.msra.mxu0 0.0
    %2993 = vmatprep.subr.mxu0 0.0
    %2994 = vmatpush1.msra.mxu0 0.0
    %2995 = vmatprep.subr.mxu0 0.0
    %2996 = vmatpush1.msra.mxu0 0.0
    %2997 = vmatprep.subr.mxu0 0.0
    %2998 = vmatpush1.msra.mxu0 0.0
    %2999 = vmatprep.subr.mxu0 0.0
    %3000 = vmatpush1.msra.mxu0 0.0
    %3001 = vmatprep.subr.mxu0 0.0
    %3002 = vmatpush1.msra.mxu0 0.0
    %3003 = vmatprep.subr.mxu0 0.0
    %3004 = vmatpush1.msra.mxu0 0.0
    %3005 = vmatprep.subr.mxu0 0.0
    %3006 = vmatpush1.msra.mxu0 0.0
    %3007 = vmatprep.subr.mxu0 0.0
    %3008 = vmatpush1.msra.mxu0 0.0
    %3009 = vmatprep.subr.mxu0 0.0
    %3010 = vmatpush1.msra.mxu0 0.0
    %3011 = vmatprep.subr.mxu0 0.0
    %3012 = vmatpush1.msra.mxu0 0.0
    %3013 = vmatprep.subr.mxu0 0.0
    %3014 = vmatpush1.msra.mxu0 0.0
    %3015 = vmatprep.subr.mxu0 0.0
    %3016 = vmatpush1.msra.mxu0 0.0
    %3017 = vmatprep.subr.mxu0 0.0
    %3018 = vmatpush1.msra.mxu0 0.0
    %3019 = vmatprep.subr.mxu0 0.0
    %3020 = vmatpush1.msra.mxu0 0.0
    %3021 = vmatprep.subr.mxu0 0.0
    %3022 = vmatpush1.msra.mxu0 0.0
    %3023 = vmatprep.subr.mxu0 0.0
    %3024 = vmatpush1.msra.mxu0 0.0
    %3025 = vmatprep.subr.mxu0 0.0
    %3026 = vmatpush1.msra.mxu0 0.0
    %3027 = vmatprep.subr.mxu0 0.0
    %3028 = vmatpush1.msra.mxu0 0.0
    %3029 = vmatprep.mubr.f32.mxu0 0.0
    %3030 = vmatmul.mubr.f32.gmra.mrb[0].mxu0 %v530
    %v3031 = vpop.f32.mrb[0].mxu0
    %v3032 = vadd.f32 0.0, %v3031
    %v3033 = vpop.f32.mrb[0].mxu0
    %3034 = vmatprep.mubr.f32.mxu0 0.0
    %3035 = vmatmul.mubr.f32.gmra.mrb[0].mxu0 %v532
    %v3036 = vpop.f32.mrb[0].mxu0
    %v3037 = vadd.f32 0.0, %v3036
    %v3038 = vpop.f32.mrb[0].mxu0
    %3039 = vdwg.mxu0
    %v3040 = vadd.f32 %v2963, %v3032
    %v3041 = vadd.f32 %v2964, %v3037
    %3042 = vmatprep.subr.mxu0 0.0
    %3043 = vmatpush1.msra.mxu0 %v2370
    %3044 = vmatprep.subr.mxu0 0.0
    %3045 = vmatpush1.msra.mxu0 %v2371
    %3046 = vmatprep.subr.mxu0 0.0
    %3047 = vmatpush1.msra.mxu0 %v2372
    %3048 = vmatprep.subr.mxu0 0.0
    %3049 = vmatpush1.msra.mxu0 %v2373
    %3050 = vmatprep.subr.mxu0 0.0
    %3051 = vmatpush1.msra.mxu0 0.0
    %3052 = vmatprep.subr.mxu0 0.0
    %3053 = vmatpush1.msra.mxu0 0.0
    %3054 = vmatprep.subr.mxu0 0.0
    %3055 = vmatpush1.msra.mxu0 0.0
    %3056 = vmatprep.subr.mxu0 0.0
    %3057 = vmatpush1.msra.mxu0 0.0
    %3058 = vmatprep.subr.mxu0 0.0
    %3059 = vmatpush1.msra.mxu0 0.0
    %3060 = vmatprep.subr.mxu0 0.0
    %3061 = vmatpush1.msra.mxu0 0.0
    %3062 = vmatprep.subr.mxu0 0.0
    %3063 = vmatpush1.msra.mxu0 0.0
    %3064 = vmatprep.subr.mxu0 0.0
    %3065 = vmatpush1.msra.mxu0 0.0
    %3066 = vmatprep.subr.mxu0 0.0
    %3067 = vmatpush1.msra.mxu0 0.0
    %3068 = vmatprep.subr.mxu0 0.0
    %3069 = vmatpush1.msra.mxu0 0.0
    %3070 = vmatprep.subr.mxu0 0.0
    %3071 = vmatpush1.msra.mxu0 0.0
    %3072 = vmatprep.subr.mxu0 0.0
    %3073 = vmatpush1.msra.mxu0 0.0
    %3074 = vmatprep.subr.mxu0 0.0
    %3075 = vmatpush1.msra.mxu0 0.0
    %3076 = vmatprep.subr.mxu0 0.0
    %3077 = vmatpush1.msra.mxu0 0.0
    %3078 = vmatprep.subr.mxu0 0.0
    %3079 = vmatpush1.msra.mxu0 0.0
    %3080 = vmatprep.subr.mxu0 0.0
    %3081 = vmatpush1.msra.mxu0 0.0
    %3082 = vmatprep.subr.mxu0 0.0
    %3083 = vmatpush1.msra.mxu0 0.0
    %3084 = vmatprep.subr.mxu0 0.0
    %3085 = vmatpush1.msra.mxu0 0.0
    %3086 = vmatprep.subr.mxu0 0.0
    %3087 = vmatpush1.msra.mxu0 0.0
    %3088 = vmatprep.subr.mxu0 0.0
    %3089 = vmatpush1.msra.mxu0 0.0
    %3090 = vmatprep.subr.mxu0 0.0
    %3091 = vmatpush1.msra.mxu0 0.0
    %3092 = vmatprep.subr.mxu0 0.0
    %3093 = vmatpush1.msra.mxu0 0.0
    %3094 = vmatprep.subr.mxu0 0.0
    %3095 = vmatpush1.msra.mxu0 0.0
    %3096 = vmatprep.subr.mxu0 0.0
    %3097 = vmatpush1.msra.mxu0 0.0
    %3098 = vmatprep.subr.mxu0 0.0
    %3099 = vmatpush1.msra.mxu0 0.0
    %3100 = vmatprep.subr.mxu0 0.0
    %3101 = vmatpush1.msra.mxu0 0.0
    %3102 = vmatprep.subr.mxu0 0.0
    %3103 = vmatpush1.msra.mxu0 0.0
    %3104 = vmatprep.subr.mxu0 0.0
    %3105 = vmatpush1.msra.mxu0 0.0
    %3106 = vmatprep.mubr.f32.mxu0 0.0
    %3107 = vmatmul.mubr.f32.gmra.mrb[0].mxu0 %v356
    %v3108 = vpop.f32.mrb[0].mxu0
    %v3109 = vadd.f32 0.0, %v3108
    %v3110 = vpop.f32.mrb[0].mxu0
    %3111 = vmatprep.mubr.f32.mxu0 0.0
    %3112 = vmatmul.mubr.f32.gmra.mrb[0].mxu0 %v358
    %v3113 = vpop.f32.mrb[0].mxu0
    %v3114 = vadd.f32 0.0, %v3113
    %v3115 = vpop.f32.mrb[0].mxu0
    %3116 = vdwg.mxu0
    %v3117 = vadd.f32 %v3040, %v3109
    %v3118 = vadd.f32 %v3041, %v3114
    %3119 = vmatprep.subr.mxu0 0.0
    %3120 = vmatpush1.msra.mxu0 %v2374
    %3121 = vmatprep.subr.mxu0 0.0
    %3122 = vmatpush1.msra.mxu0 %v2375
    %3123 = vmatprep.subr.mxu0 0.0
    %3124 = vmatpush1.msra.mxu0 %v2376
    %3125 = vmatprep.subr.mxu0 0.0
    %3126 = vmatpush1.msra.mxu0 %v2377
    %3127 = vmatprep.subr.mxu0 0.0
    %3128 = vmatpush1.msra.mxu0 0.0
    %3129 = vmatprep.subr.mxu0 0.0
    %3130 = vmatpush1.msra.mxu0 0.0
    %3131 = vmatprep.subr.mxu0 0.0
    %3132 = vmatpush1.msra.mxu0 0.0
    %3133 = vmatprep.subr.mxu0 0.0
    %3134 = vmatpush1.msra.mxu0 0.0
    %3135 = vmatprep.subr.mxu0 0.0
    %3136 = vmatpush1.msra.mxu0 0.0
    %3137 = vmatprep.subr.mxu0 0.0
    %3138 = vmatpush1.msra.mxu0 0.0
    %3139 = vmatprep.subr.mxu0 0.0
    %3140 = vmatpush1.msra.mxu0 0.0
    %3141 = vmatprep.subr.mxu0 0.0
    %3142 = vmatpush1.msra.mxu0 0.0
    %3143 = vmatprep.subr.mxu0 0.0
    %3144 = vmatpush1.msra.mxu0 0.0
    %3145 = vmatprep.subr.mxu0 0.0
    %3146 = vmatpush1.msra.mxu0 0.0
    %3147 = vmatprep.subr.mxu0 0.0
    %3148 = vmatpush1.msra.mxu0 0.0
    %3149 = vmatprep.subr.mxu0 0.0
    %3150 = vmatpush1.msra.mxu0 0.0
    %3151 = vmatprep.subr.mxu0 0.0
    %3152 = vmatpush1.msra.mxu0 0.0
    %3153 = vmatprep.subr.mxu0 0.0
    %3154 = vmatpush1.msra.mxu0 0.0
    %3155 = vmatprep.subr.mxu0 0.0
    %3156 = vmatpush1.msra.mxu0 0.0
    %3157 = vmatprep.subr.mxu0 0.0
    %3158 = vmatpush1.msra.mxu0 0.0
    %3159 = vmatprep.subr.mxu0 0.0
    %3160 = vmatpush1.msra.mxu0 0.0
    %3161 = vmatprep.subr.mxu0 0.0
    %3162 = vmatpush1.msra.mxu0 0.0
    %3163 = vmatprep.subr.mxu0 0.0
    %3164 = vmatpush1.msra.mxu0 0.0
    %3165 = vmatprep.subr.mxu0 0.0
    %3166 = vmatpush1.msra.mxu0 0.0
    %3167 = vmatprep.subr.mxu0 0.0
    %3168 = vmatpush1.msra.mxu0 0.0
    %3169 = vmatprep.subr.mxu0 0.0
    %3170 = vmatpush1.msra.mxu0 0.0
    %3171 = vmatprep.subr.mxu0 0.0
    %3172 = vmatpush1.msra.mxu0 0.0
    %3173 = vmatprep.subr.mxu0 0.0
    %3174 = vmatpush1.msra.mxu0 0.0
    %3175 = vmatprep.subr.mxu0 0.0
    %3176 = vmatpush1.msra.mxu0 0.0
    %3177 = vmatprep.subr.mxu0 0.0
    %3178 = vmatpush1.msra.mxu0 0.0
    %3179 = vmatprep.subr.mxu0 0.0
    %3180 = vmatpush1.msra.mxu0 0.0
    %3181 = vmatprep.subr.mxu0 0.0
    %3182 = vmatpush1.msra.mxu0 0.0
    %3183 = vmatprep.mubr.f32.mxu0 0.0
    %3184 = vmatmul.mubr.f32.gmra.mrb[0].mxu0 %v692
    %v3185 = vpop.f32.mrb[0].mxu0
    %v3186 = vadd.f32 0.0, %v3185
    %v3187 = vpop.f32.mrb[0].mxu0
    %3188 = vmatprep.mubr.f32.mxu0 0.0
    %3189 = vmatmul.mubr.f32.gmra.mrb[0].mxu0 %v694
    %v3190 = vpop.f32.mrb[0].mxu0
    %v3191 = vadd.f32 0.0, %v3190
    %v3192 = vpop.f32.mrb[0].mxu0
    %3193 = vdwg.mxu0
    %v3194 = vadd.f32 %v3117, %v3186
    %v3195 = vadd.f32 %v3118, %v3191
    %3196 = vmatprep.subr.mxu0 0.0
    %3197 = vmatpush1.msra.mxu0 %v2378
    %3198 = vmatprep.subr.mxu0 0.0
    %3199 = vmatpush1.msra.mxu0 %v2379
    %3200 = vmatprep.subr.mxu0 0.0
    %3201 = vmatpush1.msra.mxu0 %v2380
    %3202 = vmatprep.subr.mxu0 0.0
    %3203 = vmatpush1.msra.mxu0 %v2381
    %3204 = vmatprep.subr.mxu0 0.0
    %3205 = vmatpush1.msra.mxu0 0.0
    %3206 = vmatprep.subr.mxu0 0.0
    %3207 = vmatpush1.msra.mxu0 0.0
    %3208 = vmatprep.subr.mxu0 0.0
    %3209 = vmatpush1.msra.mxu0 0.0
    %3210 = vmatprep.subr.mxu0 0.0
    %3211 = vmatpush1.msra.mxu0 0.0
    %3212 = vmatprep.subr.mxu0 0.0
    %3213 = vmatpush1.msra.mxu0 0.0
    %3214 = vmatprep.subr.mxu0 0.0
    %3215 = vmatpush1.msra.mxu0 0.0
    %3216 = vmatprep.subr.mxu0 0.0
    %3217 = vmatpush1.msra.mxu0 0.0
    %3218 = vmatprep.subr.mxu0 0.0
    %3219 = vmatpush1.msra.mxu0 0.0
    %3220 = vmatprep.subr.mxu0 0.0
    %3221 = vmatpush1.msra.mxu0 0.0
    %3222 = vmatprep.subr.mxu0 0.0
    %3223 = vmatpush1.msra.mxu0 0.0
    %3224 = vmatprep.subr.mxu0 0.0
    %3225 = vmatpush1.msra.mxu0 0.0
    %3226 = vmatprep.subr.mxu0 0.0
    %3227 = vmatpush1.msra.mxu0 0.0
    %3228 = vmatprep.subr.mxu0 0.0
    %3229 = vmatpush1.msra.mxu0 0.0
    %3230 = vmatprep.subr.mxu0 0.0
    %3231 = vmatpush1.msra.mxu0 0.0
    %3232 = vmatprep.subr.mxu0 0.0
    %3233 = vmatpush1.msra.mxu0 0.0
    %3234 = vmatprep.subr.mxu0 0.0
    %3235 = vmatpush1.msra.mxu0 0.0
    %3236 = vmatprep.subr.mxu0 0.0
    %3237 = vmatpush1.msra.mxu0 0.0
    %3238 = vmatprep.subr.mxu0 0.0
    %3239 = vmatpush1.msra.mxu0 0.0
    %3240 = vmatprep.subr.mxu0 0.0
    %3241 = vmatpush1.msra.mxu0 0.0
    %3242 = vmatprep.subr.mxu0 0.0
    %3243 = vmatpush1.msra.mxu0 0.0
    %3244 = vmatprep.subr.mxu0 0.0
    %3245 = vmatpush1.msra.mxu0 0.0
    %3246 = vmatprep.subr.mxu0 0.0
    %3247 = vmatpush1.msra.mxu0 0.0
    %3248 = vmatprep.subr.mxu0 0.0
    %3249 = vmatpush1.msra.mxu0 0.0
    %3250 = vmatprep.subr.mxu0 0.0
    %3251 = vmatpush1.msra.mxu0 0.0
    %3252 = vmatprep.subr.mxu0 0.0
    %3253 = vmatpush1.msra.mxu0 0.0
    %3254 = vmatprep.subr.mxu0 0.0
    %3255 = vmatpush1.msra.mxu0 0.0
    %3256 = vmatprep.subr.mxu0 0.0
    %3257 = vmatpush1.msra.mxu0 0.0
    %3258 = vmatprep.subr.mxu0 0.0
    %3259 = vmatpush1.msra.mxu0 0.0
    %3260 = vmatprep.mubr.f32.mxu0 0.0
    %3261 = vmatmul.mubr.f32.gmra.mrb[0].mxu0 %v1172
    %v3262 = vpop.f32.mrb[0].mxu0
    %v3263 = vadd.f32 0.0, %v3262
    %v3264 = vpop.f32.mrb[0].mxu0
    %3265 = vmatprep.mubr.f32.mxu0 0.0
    %3266 = vmatmul.mubr.f32.gmra.mrb[0].mxu0 %v1174
    %v3267 = vpop.f32.mrb[0].mxu0
    %v3268 = vadd.f32 0.0, %v3267
    %v3269 = vpop.f32.mrb[0].mxu0
    %3270 = vdwg.mxu0
    %v3271 = vadd.f32 %v3194, %v3263
    %v3272 = vadd.f32 %v3195, %v3268
    %v3274 = vsel %vm219, %v3271, 0
    %v3277 = vsel %vm219, %v3272, 0
    %3279 = vmatprep.subr.mxu0 0.0
    %3280 = vmatpush1.msra.mxu0 %v2391
    %3281 = vmatprep.subr.mxu0 0.0
    %3282 = vmatpush1.msra.mxu0 %v2392
    %3283 = vmatprep.subr.mxu0 0.0
    %3284 = vmatpush1.msra.mxu0 %v2393
    %3285 = vmatprep.subr.mxu0 0.0
    %3286 = vmatpush1.msra.mxu0 %v2394
    %3287 = vmatprep.subr.mxu0 0.0
    %3288 = vmatpush1.msra.mxu0 0.0
    %3289 = vmatprep.subr.mxu0 0.0
    %3290 = vmatpush1.msra.mxu0 0.0
    %3291 = vmatprep.subr.mxu0 0.0
    %3292 = vmatpush1.msra.mxu0 0.0
    %3293 = vmatprep.subr.mxu0 0.0
    %3294 = vmatpush1.msra.mxu0 0.0
    %3295 = vmatprep.subr.mxu0 0.0
    %3296 = vmatpush1.msra.mxu0 0.0
    %3297 = vmatprep.subr.mxu0 0.0
    %3298 = vmatpush1.msra.mxu0 0.0
    %3299 = vmatprep.subr.mxu0 0.0
    %3300 = vmatpush1.msra.mxu0 0.0
    %3301 = vmatprep.subr.mxu0 0.0
    %3302 = vmatpush1.msra.mxu0 0.0
    %3303 = vmatprep.subr.mxu0 0.0
    %3304 = vmatpush1.msra.mxu0 0.0
    %3305 = vmatprep.subr.mxu0 0.0
    %3306 = vmatpush1.msra.mxu0 0.0
    %3307 = vmatprep.subr.mxu0 0.0
    %3308 = vmatpush1.msra.mxu0 0.0
    %3309 = vmatprep.subr.mxu0 0.0
    %3310 = vmatpush1.msra.mxu0 0.0
    %3311 = vmatprep.subr.mxu0 0.0
    %3312 = vmatpush1.msra.mxu0 0.0
    %3313 = vmatprep.subr.mxu0 0.0
    %3314 = vmatpush1.msra.mxu0 0.0
    %3315 = vmatprep.subr.mxu0 0.0
    %3316 = vmatpush1.msra.mxu0 0.0
    %3317 = vmatprep.subr.mxu0 0.0
    %3318 = vmatpush1.msra.mxu0 0.0
    %3319 = vmatprep.subr.mxu0 0.0
    %3320 = vmatpush1.msra.mxu0 0.0
    %3321 = vmatprep.subr.mxu0 0.0
    %3322 = vmatpush1.msra.mxu0 0.0
    %3323 = vmatprep.subr.mxu0 0.0
    %3324 = vmatpush1.msra.mxu0 0.0
    %3325 = vmatprep.subr.mxu0 0.0
    %3326 = vmatpush1.msra.mxu0 0.0
    %3327 = vmatprep.subr.mxu0 0.0
    %3328 = vmatpush1.msra.mxu0 0.0
    %3329 = vmatprep.subr.mxu0 0.0
    %3330 = vmatpush1.msra.mxu0 0.0
    %3331 = vmatprep.subr.mxu0 0.0
    %3332 = vmatpush1.msra.mxu0 0.0
    %3333 = vmatprep.subr.mxu0 0.0
    %3334 = vmatpush1.msra.mxu0 0.0
    %3335 = vmatprep.subr.mxu0 0.0
    %3336 = vmatpush1.msra.mxu0 0.0
    %3337 = vmatprep.subr.mxu0 0.0
    %3338 = vmatpush1.msra.mxu0 0.0
    %3339 = vmatprep.subr.mxu0 0.0
    %3340 = vmatpush1.msra.mxu0 0.0
    %3341 = vmatprep.subr.mxu0 0.0
    %3342 = vmatpush1.msra.mxu0 0.0
    %3343 = vmatprep.mubr.f32.mxu0 0.0
    %3344 = vmatmul.mubr.f32.gmra.mrb[0].mxu0 %v3274
    %v3345 = vpop.f32.mrb[0].mxu0
    %v3346 = vadd.f32 0.0, %v3345
    %v3347 = vpop.f32.mrb[0].mxu0
    %3348 = vmatprep.mubr.f32.mxu0 0.0
    %3349 = vmatmul.mubr.f32.gmra.mrb[0].mxu0 %v3277
    %v3350 = vpop.f32.mrb[0].mxu0
    %v3351 = vadd.f32 0.0, %v3350
    %v3352 = vpop.f32.mrb[0].mxu0
    %3353 = vdwg.mxu0
    %v3354 = vadd.f32 %v2882, %v3346
    %v3355 = vadd.f32 %v2883, %v3351
    %v3356 = vmul.f32 %v1334, 0.35355338
    %v3357 = vmul.f32 %v1335, 0.35355338
    %v3358 = vld [vmem:[%s1] sm:$0x1]
    %v3359 = vld [vmem:[%s1 + $0x1] sm:$0x1]
    %v3360 = vsub.f32 1.0, %v3358
    %v3361 = vsub.f32 1.0, %v3359
    %v3362 = vmul.f32 %v3360, -1e+30
    %v3363 = vmul.f32 %v3361, -1e+30
    %v3366 = vlaneseq
    %v3367 = vshrl.u32 %v3366, 7
    %v3368 = vsub.s32 0, %v3367
    %v3369 = vrot.slane %v3362, %v3368
    %v3370 = vlaneseq
    %v3371 = vshrl.u32 %v3370, 7
    %v3372 = vsub.s32 0, %v3371
    %v3373 = vrot.slane %v3363, %v3372
    %vm3376 = vcmask 64512
    %v3378 = vsel %vm3376, %v3356, 0
    %v3381 = vsel %vm3376, %v2344, 0
    %3383 = vmatprep.subr.mxu0 0.0
    %3384 = vmatpush1.xpose.msra.mxu0 %v3381
    %3385 = vmatprep.subr.mxu0 0.0
    %3386 = vmatpush1.xpose.msra.mxu0 0.0
    %3387 = vmatprep.subr.mxu0 0.0
    %3388 = vmatpush1.xpose.msra.mxu0 0.0
    %3389 = vmatprep.subr.mxu0 0.0
    %3390 = vmatpush1.xpose.msra.mxu0 0.0
    %3391 = vmatprep.subr.mxu0 0.0
    %3392 = vmatpush1.xpose.msra.mxu0 0.0
    %3393 = vmatprep.subr.mxu0 0.0
    %3394 = vmatpush1.xpose.msra.mxu0 0.0
    %3395 = vmatprep.subr.mxu0 0.0
    %3396 = vmatpush1.xpose.msra.mxu0 0.0
    %3397 = vmatprep.subr.mxu0 0.0
    %3398 = vmatpush1.xpose.msra.mxu0 0.0
    %3399 = vmatprep.subr.mxu0 0.0
    %3400 = vmatpush1.xpose.msra.mxu0 0.0
    %3401 = vmatprep.subr.mxu0 0.0
    %3402 = vmatpush1.xpose.msra.mxu0 0.0
    %3403 = vmatprep.subr.mxu0 0.0
    %3404 = vmatpush1.xpose.msra.mxu0 0.0
    %3405 = vmatprep.subr.mxu0 0.0
    %3406 = vmatpush1.xpose.msra.mxu0 0.0
    %3407 = vmatprep.subr.mxu0 0.0
    %3408 = vmatpush1.xpose.msra.mxu0 0.0
    %3409 = vmatprep.subr.mxu0 0.0
    %3410 = vmatpush1.xpose.msra.mxu0 0.0
    %3411 = vmatprep.subr.mxu0 0.0
    %3412 = vmatpush1.xpose.msra.mxu0 0.0
    %3413 = vmatprep.subr.mxu0 0.0
    %3414 = vmatpush1.xpose.msra.mxu0 0.0
    %3415 = vmatprep.subr.mxu0 0.0
    %3416 = vmatpush1.xpose.msra.mxu0 0.0
    %3417 = vmatprep.subr.mxu0 0.0
    %3418 = vmatpush1.xpose.msra.mxu0 0.0
    %3419 = vmatprep.subr.mxu0 0.0
    %3420 = vmatpush1.xpose.msra.mxu0 0.0
    %3421 = vmatprep.subr.mxu0 0.0
    %3422 = vmatpush1.xpose.msra.mxu0 0.0
    %3423 = vmatprep.subr.mxu0 0.0
    %3424 = vmatpush1.xpose.msra.mxu0 0.0
    %3425 = vmatprep.subr.mxu0 0.0
    %3426 = vmatpush1.xpose.msra.mxu0 0.0
    %3427 = vmatprep.subr.mxu0 0.0
    %3428 = vmatpush1.xpose.msra.mxu0 0.0
    %3429 = vmatprep.subr.mxu0 0.0
    %3430 = vmatpush1.xpose.msra.mxu0 0.0
    %3431 = vmatprep.subr.mxu0 0.0
    %3432 = vmatpush1.xpose.msra.mxu0 0.0
    %3433 = vmatprep.subr.mxu0 0.0
    %3434 = vmatpush1.xpose.msra.mxu0 0.0
    %3435 = vmatprep.subr.mxu0 0.0
    %3436 = vmatpush1.xpose.msra.mxu0 0.0
    %3437 = vmatprep.subr.mxu0 0.0
    %3438 = vmatpush1.xpose.msra.mxu0 0.0
    %3439 = vmatprep.subr.mxu0 0.0
    %3440 = vmatpush1.xpose.msra.mxu0 0.0
    %3441 = vmatprep.subr.mxu0 0.0
    %3442 = vmatpush1.xpose.msra.mxu0 0.0
    %3443 = vmatprep.subr.mxu0 0.0
    %3444 = vmatpush1.xpose.msra.mxu0 0.0
    %3445 = vmatprep.subr.mxu0 0.0
    %3446 = vmatpush1.xpose.msra.mxu0 0.0
    %3447 = vmatprep.mubr.f32.mxu0 0.0
    %3448 = vmatmul.mubr.f32.gmra.mrb[0].mxu0 %v3378
    %v3449 = vpop.f32.mrb[0].mxu0
    %v3450 = vadd.f32 %v3369, %v3449
    %v3451 = vpop.f32.mrb[0].mxu0
    %3452 = vdwg.mxu0
    %v3454 = vsel %vm3376, %v3357, 0
    %v3457 = vsel %vm3376, %v2345, 0
    %3459 = vmatprep.subr.mxu0 0.0
    %3460 = vmatpush1.xpose.msra.mxu0 %v3457
    %3461 = vmatprep.subr.mxu0 0.0
    %3462 = vmatpush1.xpose.msra.mxu0 0.0
    %3463 = vmatprep.subr.mxu0 0.0
    %3464 = vmatpush1.xpose.msra.mxu0 0.0
    %3465 = vmatprep.subr.mxu0 0.0
    %3466 = vmatpush1.xpose.msra.mxu0 0.0
    %3467 = vmatprep.subr.mxu0 0.0
    %3468 = vmatpush1.xpose.msra.mxu0 0.0
    %3469 = vmatprep.subr.mxu0 0.0
    %3470 = vmatpush1.xpose.msra.mxu0 0.0
    %3471 = vmatprep.subr.mxu0 0.0
    %3472 = vmatpush1.xpose.msra.mxu0 0.0
    %3473 = vmatprep.subr.mxu0 0.0
    %3474 = vmatpush1.xpose.msra.mxu0 0.0
    %3475 = vmatprep.subr.mxu0 0.0
    %3476 = vmatpush1.xpose.msra.mxu0 0.0
    %3477 = vmatprep.subr.mxu0 0.0
    %3478 = vmatpush1.xpose.msra.mxu0 0.0
    %3479 = vmatprep.subr.mxu0 0.0
    %3480 = vmatpush1.xpose.msra.mxu0 0.0
    %3481 = vmatprep.subr.mxu0 0.0
    %3482 = vmatpush1.xpose.msra.mxu0 0.0
    %3483 = vmatprep.subr.mxu0 0.0
    %3484 = vmatpush1.xpose.msra.mxu0 0.0
    %3485 = vmatprep.subr.mxu0 0.0
    %3486 = vmatpush1.xpose.msra.mxu0 0.0
    %3487 = vmatprep.subr.mxu0 0.0
    %3488 = vmatpush1.xpose.msra.mxu0 0.0
    %3489 = vmatprep.subr.mxu0 0.0
    %3490 = vmatpush1.xpose.msra.mxu0 0.0
    %3491 = vmatprep.subr.mxu0 0.0
    %3492 = vmatpush1.xpose.msra.mxu0 0.0
    %3493 = vmatprep.subr.mxu0 0.0
    %3494 = vmatpush1.xpose.msra.mxu0 0.0
    %3495 = vmatprep.subr.mxu0 0.0
    %3496 = vmatpush1.xpose.msra.mxu0 0.0
    %3497 = vmatprep.subr.mxu0 0.0
    %3498 = vmatpush1.xpose.msra.mxu0 0.0
    %3499 = vmatprep.subr.mxu0 0.0
    %3500 = vmatpush1.xpose.msra.mxu0 0.0
    %3501 = vmatprep.subr.mxu0 0.0
    %3502 = vmatpush1.xpose.msra.mxu0 0.0
    %3503 = vmatprep.subr.mxu0 0.0
    %3504 = vmatpush1.xpose.msra.mxu0 0.0
    %3505 = vmatprep.subr.mxu0 0.0
    %3506 = vmatpush1.xpose.msra.mxu0 0.0
    %3507 = vmatprep.subr.mxu0 0.0
    %3508 = vmatpush1.xpose.msra.mxu0 0.0
    %3509 = vmatprep.subr.mxu0 0.0
    %3510 = vmatpush1.xpose.msra.mxu0 0.0
    %3511 = vmatprep.subr.mxu0 0.0
    %3512 = vmatpush1.xpose.msra.mxu0 0.0
    %3513 = vmatprep.subr.mxu0 0.0
    %3514 = vmatpush1.xpose.msra.mxu0 0.0
    %3515 = vmatprep.subr.mxu0 0.0
    %3516 = vmatpush1.xpose.msra.mxu0 0.0
    %3517 = vmatprep.subr.mxu0 0.0
    %3518 = vmatpush1.xpose.msra.mxu0 0.0
    %3519 = vmatprep.subr.mxu0 0.0
    %3520 = vmatpush1.xpose.msra.mxu0 0.0
    %3521 = vmatprep.subr.mxu0 0.0
    %3522 = vmatpush1.xpose.msra.mxu0 0.0
    %3523 = vmatprep.mubr.f32.mxu0 0.0
    %3524 = vmatmul.mubr.f32.gmra.mrb[0].mxu0 %v3454
    %v3525 = vpop.f32.mrb[0].mxu0
    %v3526 = vadd.f32 %v3373, %v3525
    %v3527 = vpop.f32.mrb[0].mxu0
    %3528 = vdwg.mxu0
    %v3529 = vsel %vm3376, %v3450, -inf
    %3530 = vmax.xlane.f32.xlu0 %v3529
    %v3531 = vpop.xlane.xlu0 %3530
    %v3532 = vsel %vm3376, %v3526, -inf
    %3533 = vmax.xlane.f32.xlu0 %v3532
    %v3534 = vpop.xlane.xlu0 %3533
    %v3535 = vsub.f32 %v3450, %v3531
    %v3536 = vsub.f32 %v3526, %v3534
    %v3537 = vmul.f32 %v3535, 1.442695
    %v3538 = vpow.pop %v3537
    %v3539 = vmul.f32 %v3536, 1.442695
    %v3540 = vpow.pop %v3539
    %v3541 = vsel %vm3376, %v3538, 0.0
    %3542 = vadd.xlane.f32.xlu0 %v3541
    %v3543 = vpop.xlane.xlu0 %3542
    %v3544 = vsel %vm3376, %v3540, 0.0
    %3545 = vadd.xlane.f32.xlu0 %v3544
    %v3546 = vpop.xlane.xlu0 %3545
    %v3547 = vrcp.pop %v3543
    %v3548 = vmul.f32 %v3538, %v3547
    %v3549 = vrcp.pop %v3546
    %v3550 = vmul.f32 %v3540, %v3549
    %v3552 = vsel %vm3376, %v3548, 0
    %3554 = vmatprep.subr.mxu0 0.0
    %3555 = vmatpush1.msra.mxu0 %v3354
    %3556 = vmatprep.subr.mxu0 0.0
    %3557 = vmatpush1.msra.mxu0 0.0
    %3558 = vmatprep.subr.mxu0 0.0
    %3559 = vmatpush1.msra.mxu0 0.0
    %3560 = vmatprep.subr.mxu0 0.0
    %3561 = vmatpush1.msra.mxu0 0.0
    %3562 = vmatprep.subr.mxu0 0.0
    %3563 = vmatpush1.msra.mxu0 0.0
    %3564 = vmatprep.subr.mxu0 0.0
    %3565 = vmatpush1.msra.mxu0 0.0
    %3566 = vmatprep.subr.mxu0 0.0
    %3567 = vmatpush1.msra.mxu0 0.0
    %3568 = vmatprep.subr.mxu0 0.0
    %3569 = vmatpush1.msra.mxu0 0.0
    %3570 = vmatprep.subr.mxu0 0.0
    %3571 = vmatpush1.msra.mxu0 0.0
    %3572 = vmatprep.subr.mxu0 0.0
    %3573 = vmatpush1.msra.mxu0 0.0
    %3574 = vmatprep.subr.mxu0 0.0
    %3575 = vmatpush1.msra.mxu0 0.0
    %3576 = vmatprep.subr.mxu0 0.0
    %3577 = vmatpush1.msra.mxu0 0.0
    %3578 = vmatprep.subr.mxu0 0.0
    %3579 = vmatpush1.msra.mxu0 0.0
    %3580 = vmatprep.subr.mxu0 0.0
    %3581 = vmatpush1.msra.mxu0 0.0
    %3582 = vmatprep.subr.mxu0 0.0
    %3583 = vmatpush1.msra.mxu0 0.0
    %3584 = vmatprep.subr.mxu0 0.0
    %3585 = vmatpush1.msra.mxu0 0.0
    %3586 = vmatprep.subr.mxu0 0.0
    %3587 = vmatpush1.msra.mxu0 0.0
    %3588 = vmatprep.subr.mxu0 0.0
    %3589 = vmatpush1.msra.mxu0 0.0
    %3590 = vmatprep.subr.mxu0 0.0
    %3591 = vmatpush1.msra.mxu0 0.0
    %3592 = vmatprep.subr.mxu0 0.0
    %3593 = vmatpush1.msra.mxu0 0.0
    %3594 = vmatprep.subr.mxu0 0.0
    %3595 = vmatpush1.msra.mxu0 0.0
    %3596 = vmatprep.subr.mxu0 0.0
    %3597 = vmatpush1.msra.mxu0 0.0
    %3598 = vmatprep.subr.mxu0 0.0
    %3599 = vmatpush1.msra.mxu0 0.0
    %3600 = vmatprep.subr.mxu0 0.0
    %3601 = vmatpush1.msra.mxu0 0.0
    %3602 = vmatprep.subr.mxu0 0.0
    %3603 = vmatpush1.msra.mxu0 0.0
    %3604 = vmatprep.subr.mxu0 0.0
    %3605 = vmatpush1.msra.mxu0 0.0
    %3606 = vmatprep.subr.mxu0 0.0
    %3607 = vmatpush1.msra.mxu0 0.0
    %3608 = vmatprep.subr.mxu0 0.0
    %3609 = vmatpush1.msra.mxu0 0.0
    %3610 = vmatprep.subr.mxu0 0.0
    %3611 = vmatpush1.msra.mxu0 0.0
    %3612 = vmatprep.subr.mxu0 0.0
    %3613 = vmatpush1.msra.mxu0 0.0
    %3614 = vmatprep.subr.mxu0 0.0
    %3615 = vmatpush1.msra.mxu0 0.0
    %3616 = vmatprep.subr.mxu0 0.0
    %3617 = vmatpush1.msra.mxu0 0.0
    %3618 = vmatprep.mubr.f32.mxu0 0.0
    %3619 = vmatmul.mubr.f32.gmra.mrb[0].mxu0 %v3552
    %v3620 = vpop.f32.mrb[0].mxu0
    %v3621 = vadd.f32 0.0, %v3620
    %v3622 = vpop.f32.mrb[0].mxu0
    %3623 = vdwg.mxu0
    %v3625 = vsel %vm3376, %v3550, 0
    %3627 = vmatprep.subr.mxu0 0.0
    %3628 = vmatpush1.msra.mxu0 %v3355
    %3629 = vmatprep.subr.mxu0 0.0
    %3630 = vmatpush1.msra.mxu0 0.0
    %3631 = vmatprep.subr.mxu0 0.0
    %3632 = vmatpush1.msra.mxu0 0.0
    %3633 = vmatprep.subr.mxu0 0.0
    %3634 = vmatpush1.msra.mxu0 0.0
    %3635 = vmatprep.subr.mxu0 0.0
    %3636 = vmatpush1.msra.mxu0 0.0
    %3637 = vmatprep.subr.mxu0 0.0
    %3638 = vmatpush1.msra.mxu0 0.0
    %3639 = vmatprep.subr.mxu0 0.0
    %3640 = vmatpush1.msra.mxu0 0.0
    %3641 = vmatprep.subr.mxu0 0.0
    %3642 = vmatpush1.msra.mxu0 0.0
    %3643 = vmatprep.subr.mxu0 0.0
    %3644 = vmatpush1.msra.mxu0 0.0
    %3645 = vmatprep.subr.mxu0 0.0
    %3646 = vmatpush1.msra.mxu0 0.0
    %3647 = vmatprep.subr.mxu0 0.0
    %3648 = vmatpush1.msra.mxu0 0.0
    %3649 = vmatprep.subr.mxu0 0.0
    %3650 = vmatpush1.msra.mxu0 0.0
    %3651 = vmatprep.subr.mxu0 0.0
    %3652 = vmatpush1.msra.mxu0 0.0
    %3653 = vmatprep.subr.mxu0 0.0
    %3654 = vmatpush1.msra.mxu0 0.0
    %3655 = vmatprep.subr.mxu0 0.0
    %3656 = vmatpush1.msra.mxu0 0.0
    %3657 = vmatprep.subr.mxu0 0.0
    %3658 = vmatpush1.msra.mxu0 0.0
    %3659 = vmatprep.subr.mxu0 0.0
    %3660 = vmatpush1.msra.mxu0 0.0
    %3661 = vmatprep.subr.mxu0 0.0
    %3662 = vmatpush1.msra.mxu0 0.0
    %3663 = vmatprep.subr.mxu0 0.0
    %3664 = vmatpush1.msra.mxu0 0.0
    %3665 = vmatprep.subr.mxu0 0.0
    %3666 = vmatpush1.msra.mxu0 0.0
    %3667 = vmatprep.subr.mxu0 0.0
    %3668 = vmatpush1.msra.mxu0 0.0
    %3669 = vmatprep.subr.mxu0 0.0
    %3670 = vmatpush1.msra.mxu0 0.0
    %3671 = vmatprep.subr.mxu0 0.0
    %3672 = vmatpush1.msra.mxu0 0.0
    %3673 = vmatprep.subr.mxu0 0.0
    %3674 = vmatpush1.msra.mxu0 0.0
    %3675 = vmatprep.subr.mxu0 0.0
    %3676 = vmatpush1.msra.mxu0 0.0
    %3677 = vmatprep.subr.mxu0 0.0
    %3678 = vmatpush1.msra.mxu0 0.0
    %3679 = vmatprep.subr.mxu0 0.0
    %3680 = vmatpush1.msra.mxu0 0.0
    %3681 = vmatprep.subr.mxu0 0.0
    %3682 = vmatpush1.msra.mxu0 0.0
    %3683 = vmatprep.subr.mxu0 0.0
    %3684 = vmatpush1.msra.mxu0 0.0
    %3685 = vmatprep.subr.mxu0 0.0
    %3686 = vmatpush1.msra.mxu0 0.0
    %3687 = vmatprep.subr.mxu0 0.0
    %3688 = vmatpush1.msra.mxu0 0.0
    %3689 = vmatprep.subr.mxu0 0.0
    %3690 = vmatpush1.msra.mxu0 0.0
    %3691 = vmatprep.mubr.f32.mxu0 0.0
    %3692 = vmatmul.mubr.f32.gmra.mrb[0].mxu0 %v3625
    %v3693 = vpop.f32.mrb[0].mxu0
    %v3694 = vadd.f32 0.0, %v3693
    %v3695 = vpop.f32.mrb[0].mxu0
    %3696 = vdwg.mxu0
    %3697 = vrot.lane.b32.xlu0 %v3356, 120
    %v3698 = vpop.permute.xlu0 %3697
    %3699 = vrot.lane.b32.xlu0 %v2344, 120
    %v3700 = vpop.permute.xlu0 %3699
    %v3701 = vsel %vm3376, %v3698, 0
    %v3703 = vsel %vm3376, %v3700, 0
    %3705 = vmatprep.subr.mxu0 0.0
    %3706 = vmatpush1.xpose.msra.mxu0 %v3703
    %3707 = vmatprep.subr.mxu0 0.0
    %3708 = vmatpush1.xpose.msra.mxu0 0.0
    %3709 = vmatprep.subr.mxu0 0.0
    %3710 = vmatpush1.xpose.msra.mxu0 0.0
    %3711 = vmatprep.subr.mxu0 0.0
    %3712 = vmatpush1.xpose.msra.mxu0 0.0
    %3713 = vmatprep.subr.mxu0 0.0
    %3714 = vmatpush1.xpose.msra.mxu0 0.0
    %3715 = vmatprep.subr.mxu0 0.0
    %3716 = vmatpush1.xpose.msra.mxu0 0.0
    %3717 = vmatprep.subr.mxu0 0.0
    %3718 = vmatpush1.xpose.msra.mxu0 0.0
    %3719 = vmatprep.subr.mxu0 0.0
    %3720 = vmatpush1.xpose.msra.mxu0 0.0
    %3721 = vmatprep.subr.mxu0 0.0
    %3722 = vmatpush1.xpose.msra.mxu0 0.0
    %3723 = vmatprep.subr.mxu0 0.0
    %3724 = vmatpush1.xpose.msra.mxu0 0.0
    %3725 = vmatprep.subr.mxu0 0.0
    %3726 = vmatpush1.xpose.msra.mxu0 0.0
    %3727 = vmatprep.subr.mxu0 0.0
    %3728 = vmatpush1.xpose.msra.mxu0 0.0
    %3729 = vmatprep.subr.mxu0 0.0
    %3730 = vmatpush1.xpose.msra.mxu0 0.0
    %3731 = vmatprep.subr.mxu0 0.0
    %3732 = vmatpush1.xpose.msra.mxu0 0.0
    %3733 = vmatprep.subr.mxu0 0.0
    %3734 = vmatpush1.xpose.msra.mxu0 0.0
    %3735 = vmatprep.subr.mxu0 0.0
    %3736 = vmatpush1.xpose.msra.mxu0 0.0
    %3737 = vmatprep.subr.mxu0 0.0
    %3738 = vmatpush1.xpose.msra.mxu0 0.0
    %3739 = vmatprep.subr.mxu0 0.0
    %3740 = vmatpush1.xpose.msra.mxu0 0.0
    %3741 = vmatprep.subr.mxu0 0.0
    %3742 = vmatpush1.xpose.msra.mxu0 0.0
    %3743 = vmatprep.subr.mxu0 0.0
    %3744 = vmatpush1.xpose.msra.mxu0 0.0
    %3745 = vmatprep.subr.mxu0 0.0
    %3746 = vmatpush1.xpose.msra.mxu0 0.0
    %3747 = vmatprep.subr.mxu0 0.0
    %3748 = vmatpush1.xpose.msra.mxu0 0.0
    %3749 = vmatprep.subr.mxu0 0.0
    %3750 = vmatpush1.xpose.msra.mxu0 0.0
    %3751 = vmatprep.subr.mxu0 0.0
    %3752 = vmatpush1.xpose.msra.mxu0 0.0
    %3753 = vmatprep.subr.mxu0 0.0
    %3754 = vmatpush1.xpose.msra.mxu0 0.0
    %3755 = vmatprep.subr.mxu0 0.0
    %3756 = vmatpush1.xpose.msra.mxu0 0.0
    %3757 = vmatprep.subr.mxu0 0.0
    %3758 = vmatpush1.xpose.msra.mxu0 0.0
    %3759 = vmatprep.subr.mxu0 0.0
    %3760 = vmatpush1.xpose.msra.mxu0 0.0
    %3761 = vmatprep.subr.mxu0 0.0
    %3762 = vmatpush1.xpose.msra.mxu0 0.0
    %3763 = vmatprep.subr.mxu0 0.0
    %3764 = vmatpush1.xpose.msra.mxu0 0.0
    %3765 = vmatprep.subr.mxu0 0.0
    %3766 = vmatpush1.xpose.msra.mxu0 0.0
    %3767 = vmatprep.subr.mxu0 0.0
    %3768 = vmatpush1.xpose.msra.mxu0 0.0
    %3769 = vmatprep.mubr.f32.mxu0 0.0
    %3770 = vmatmul.mubr.f32.gmra.mrb[0].mxu0 %v3701
    %v3771 = vpop.f32.mrb[0].mxu0
    %v3772 = vadd.f32 %v3369, %v3771
    %v3773 = vpop.f32.mrb[0].mxu0
    %3774 = vdwg.mxu0
    %3775 = vrot.lane.b32.xlu0 %v3357, 120
    %v3776 = vpop.permute.xlu0 %3775
    %3777 = vrot.lane.b32.xlu0 %v2345, 120
    %v3778 = vpop.permute.xlu0 %3777
    %v3779 = vsel %vm3376, %v3776, 0
    %v3781 = vsel %vm3376, %v3778, 0
    %3783 = vmatprep.subr.mxu0 0.0
    %3784 = vmatpush1.xpose.msra.mxu0 %v3781
    %3785 = vmatprep.subr.mxu0 0.0
    %3786 = vmatpush1.xpose.msra.mxu0 0.0
    %3787 = vmatprep.subr.mxu0 0.0
    %3788 = vmatpush1.xpose.msra.mxu0 0.0
    %3789 = vmatprep.subr.mxu0 0.0
    %3790 = vmatpush1.xpose.msra.mxu0 0.0
    %3791 = vmatprep.subr.mxu0 0.0
    %3792 = vmatpush1.xpose.msra.mxu0 0.0
    %3793 = vmatprep.subr.mxu0 0.0
    %3794 = vmatpush1.xpose.msra.mxu0 0.0
    %3795 = vmatprep.subr.mxu0 0.0
    %3796 = vmatpush1.xpose.msra.mxu0 0.0
    %3797 = vmatprep.subr.mxu0 0.0
    %3798 = vmatpush1.xpose.msra.mxu0 0.0
    %3799 = vmatprep.subr.mxu0 0.0
    %3800 = vmatpush1.xpose.msra.mxu0 0.0
    %3801 = vmatprep.subr.mxu0 0.0
    %3802 = vmatpush1.xpose.msra.mxu0 0.0
    %3803 = vmatprep.subr.mxu0 0.0
    %3804 = vmatpush1.xpose.msra.mxu0 0.0
    %3805 = vmatprep.subr.mxu0 0.0
    %3806 = vmatpush1.xpose.msra.mxu0 0.0
    %3807 = vmatprep.subr.mxu0 0.0
    %3808 = vmatpush1.xpose.msra.mxu0 0.0
    %3809 = vmatprep.subr.mxu0 0.0
    %3810 = vmatpush1.xpose.msra.mxu0 0.0
    %3811 = vmatprep.subr.mxu0 0.0
    %3812 = vmatpush1.xpose.msra.mxu0 0.0
    %3813 = vmatprep.subr.mxu0 0.0
    %3814 = vmatpush1.xpose.msra.mxu0 0.0
    %3815 = vmatprep.subr.mxu0 0.0
    %3816 = vmatpush1.xpose.msra.mxu0 0.0
    %3817 = vmatprep.subr.mxu0 0.0
    %3818 = vmatpush1.xpose.msra.mxu0 0.0
    %3819 = vmatprep.subr.mxu0 0.0
    %3820 = vmatpush1.xpose.msra.mxu0 0.0
    %3821 = vmatprep.subr.mxu0 0.0
    %3822 = vmatpush1.xpose.msra.mxu0 0.0
    %3823 = vmatprep.subr.mxu0 0.0
    %3824 = vmatpush1.xpose.msra.mxu0 0.0
    %3825 = vmatprep.subr.mxu0 0.0
    %3826 = vmatpush1.xpose.msra.mxu0 0.0
    %3827 = vmatprep.subr.mxu0 0.0
    %3828 = vmatpush1.xpose.msra.mxu0 0.0
    %3829 = vmatprep.subr.mxu0 0.0
    %3830 = vmatpush1.xpose.msra.mxu0 0.0
    %3831 = vmatprep.subr.mxu0 0.0
    %3832 = vmatpush1.xpose.msra.mxu0 0.0
    %3833 = vmatprep.subr.mxu0 0.0
    %3834 = vmatpush1.xpose.msra.mxu0 0.0
    %3835 = vmatprep.subr.mxu0 0.0
    %3836 = vmatpush1.xpose.msra.mxu0 0.0
    %3837 = vmatprep.subr.mxu0 0.0
    %3838 = vmatpush1.xpose.msra.mxu0 0.0
    %3839 = vmatprep.subr.mxu0 0.0
    %3840 = vmatpush1.xpose.msra.mxu0 0.0
    %3841 = vmatprep.subr.mxu0 0.0
    %3842 = vmatpush1.xpose.msra.mxu0 0.0
    %3843 = vmatprep.subr.mxu0 0.0
    %3844 = vmatpush1.xpose.msra.mxu0 0.0
    %3845 = vmatprep.subr.mxu0 0.0
    %3846 = vmatpush1.xpose.msra.mxu0 0.0
    %3847 = vmatprep.mubr.f32.mxu0 0.0
    %3848 = vmatmul.mubr.f32.gmra.mrb[0].mxu0 %v3779
    %v3849 = vpop.f32.mrb[0].mxu0
    %v3850 = vadd.f32 %v3373, %v3849
    %v3851 = vpop.f32.mrb[0].mxu0
    %3852 = vdwg.mxu0
    %v3853 = vsel %vm3376, %v3772, -inf
    %3854 = vmax.xlane.f32.xlu0 %v3853
    %v3855 = vpop.xlane.xlu0 %3854
    %v3856 = vsel %vm3376, %v3850, -inf
    %3857 = vmax.xlane.f32.xlu0 %v3856
    %v3858 = vpop.xlane.xlu0 %3857
    %v3859 = vsub.f32 %v3772, %v3855
    %v3860 = vsub.f32 %v3850, %v3858
    %v3861 = vmul.f32 %v3859, 1.442695
    %v3862 = vpow.pop %v3861
    %v3863 = vmul.f32 %v3860, 1.442695
    %v3864 = vpow.pop %v3863
    %v3865 = vsel %vm3376, %v3862, 0.0
    %3866 = vadd.xlane.f32.xlu0 %v3865
    %v3867 = vpop.xlane.xlu0 %3866
    %v3868 = vsel %vm3376, %v3864, 0.0
    %3869 = vadd.xlane.f32.xlu0 %v3868
    %v3870 = vpop.xlane.xlu0 %3869
    %v3871 = vrcp.pop %v3867
    %v3872 = vmul.f32 %v3862, %v3871
    %v3873 = vrcp.pop %v3870
    %v3874 = vmul.f32 %v3864, %v3873
    %3876 = vrot.lane.b32.xlu0 %v3354, 120
    %v3877 = vpop.permute.xlu0 %3876
    %v3880 = vsel %vm3376, %v3872, 0
    %3882 = vmatprep.subr.mxu0 0.0
    %3883 = vmatpush1.msra.mxu0 %v3877
    %3884 = vmatprep.subr.mxu0 0.0
    %3885 = vmatpush1.msra.mxu0 0.0
    %3886 = vmatprep.subr.mxu0 0.0
    %3887 = vmatpush1.msra.mxu0 0.0
    %3888 = vmatprep.subr.mxu0 0.0
    %3889 = vmatpush1.msra.mxu0 0.0
    %3890 = vmatprep.subr.mxu0 0.0
    %3891 = vmatpush1.msra.mxu0 0.0
    %3892 = vmatprep.subr.mxu0 0.0
    %3893 = vmatpush1.msra.mxu0 0.0
    %3894 = vmatprep.subr.mxu0 0.0
    %3895 = vmatpush1.msra.mxu0 0.0
    %3896 = vmatprep.subr.mxu0 0.0
    %3897 = vmatpush1.msra.mxu0 0.0
    %3898 = vmatprep.subr.mxu0 0.0
    %3899 = vmatpush1.msra.mxu0 0.0
    %3900 = vmatprep.subr.mxu0 0.0
    %3901 = vmatpush1.msra.mxu0 0.0
    %3902 = vmatprep.subr.mxu0 0.0
    %3903 = vmatpush1.msra.mxu0 0.0
    %3904 = vmatprep.subr.mxu0 0.0
    %3905 = vmatpush1.msra.mxu0 0.0
    %3906 = vmatprep.subr.mxu0 0.0
    %3907 = vmatpush1.msra.mxu0 0.0
    %3908 = vmatprep.subr.mxu0 0.0
    %3909 = vmatpush1.msra.mxu0 0.0
    %3910 = vmatprep.subr.mxu0 0.0
    %3911 = vmatpush1.msra.mxu0 0.0
    %3912 = vmatprep.subr.mxu0 0.0
    %3913 = vmatpush1.msra.mxu0 0.0
    %3914 = vmatprep.subr.mxu0 0.0
    %3915 = vmatpush1.msra.mxu0 0.0
    %3916 = vmatprep.subr.mxu0 0.0
    %3917 = vmatpush1.msra.mxu0 0.0
    %3918 = vmatprep.subr.mxu0 0.0
    %3919 = vmatpush1.msra.mxu0 0.0
    %3920 = vmatprep.subr.mxu0 0.0
    %3921 = vmatpush1.msra.mxu0 0.0
    %3922 = vmatprep.subr.mxu0 0.0
    %3923 = vmatpush1.msra.mxu0 0.0
    %3924 = vmatprep.subr.mxu0 0.0
    %3925 = vmatpush1.msra.mxu0 0.0
    %3926 = vmatprep.subr.mxu0 0.0
    %3927 = vmatpush1.msra.mxu0 0.0
    %3928 = vmatprep.subr.mxu0 0.0
    %3929 = vmatpush1.msra.mxu0 0.0
    %3930 = vmatprep.subr.mxu0 0.0
    %3931 = vmatpush1.msra.mxu0 0.0
    %3932 = vmatprep.subr.mxu0 0.0
    %3933 = vmatpush1.msra.mxu0 0.0
    %3934 = vmatprep.subr.mxu0 0.0
    %3935 = vmatpush1.msra.mxu0 0.0
    %3936 = vmatprep.subr.mxu0 0.0
    %3937 = vmatpush1.msra.mxu0 0.0
    %3938 = vmatprep.subr.mxu0 0.0
    %3939 = vmatpush1.msra.mxu0 0.0
    %3940 = vmatprep.subr.mxu0 0.0
    %3941 = vmatpush1.msra.mxu0 0.0
    %3942 = vmatprep.subr.mxu0 0.0
    %3943 = vmatpush1.msra.mxu0 0.0
    %3944 = vmatprep.subr.mxu0 0.0
    %3945 = vmatpush1.msra.mxu0 0.0
    %3946 = vmatprep.mubr.f32.mxu0 0.0
    %3947 = vmatmul.mubr.f32.gmra.mrb[0].mxu0 %v3880
    %v3948 = vpop.f32.mrb[0].mxu0
    %v3949 = vadd.f32 0.0, %v3948
    %v3950 = vpop.f32.mrb[0].mxu0
    %3951 = vdwg.mxu0
    %3953 = vrot.lane.b32.xlu0 %v3355, 120
    %v3954 = vpop.permute.xlu0 %3953
    %v3957 = vsel %vm3376, %v3874, 0
    %3959 = vmatprep.subr.mxu0 0.0
    %3960 = vmatpush1.msra.mxu0 %v3954
    %3961 = vmatprep.subr.mxu0 0.0
    %3962 = vmatpush1.msra.mxu0 0.0
    %3963 = vmatprep.subr.mxu0 0.0
    %3964 = vmatpush1.msra.mxu0 0.0
    %3965 = vmatprep.subr.mxu0 0.0
    %3966 = vmatpush1.msra.mxu0 0.0
    %3967 = vmatprep.subr.mxu0 0.0
    %3968 = vmatpush1.msra.mxu0 0.0
    %3969 = vmatprep.subr.mxu0 0.0
    %3970 = vmatpush1.msra.mxu0 0.0
    %3971 = vmatprep.subr.mxu0 0.0
    %3972 = vmatpush1.msra.mxu0 0.0
    %3973 = vmatprep.subr.mxu0 0.0
    %3974 = vmatpush1.msra.mxu0 0.0
    %3975 = vmatprep.subr.mxu0 0.0
    %3976 = vmatpush1.msra.mxu0 0.0
    %3977 = vmatprep.subr.mxu0 0.0
    %3978 = vmatpush1.msra.mxu0 0.0
    %3979 = vmatprep.subr.mxu0 0.0
    %3980 = vmatpush1.msra.mxu0 0.0
    %3981 = vmatprep.subr.mxu0 0.0
    %3982 = vmatpush1.msra.mxu0 0.0
    %3983 = vmatprep.subr.mxu0 0.0
    %3984 = vmatpush1.msra.mxu0 0.0
    %3985 = vmatprep.subr.mxu0 0.0
    %3986 = vmatpush1.msra.mxu0 0.0
    %3987 = vmatprep.subr.mxu0 0.0
    %3988 = vmatpush1.msra.mxu0 0.0
    %3989 = vmatprep.subr.mxu0 0.0
    %3990 = vmatpush1.msra.mxu0 0.0
    %3991 = vmatprep.subr.mxu0 0.0
    %3992 = vmatpush1.msra.mxu0 0.0
    %3993 = vmatprep.subr.mxu0 0.0
    %3994 = vmatpush1.msra.mxu0 0.0
    %3995 = vmatprep.subr.mxu0 0.0
    %3996 = vmatpush1.msra.mxu0 0.0
    %3997 = vmatprep.subr.mxu0 0.0
    %3998 = vmatpush1.msra.mxu0 0.0
    %3999 = vmatprep.subr.mxu0 0.0
    %4000 = vmatpush1.msra.mxu0 0.0
    %4001 = vmatprep.subr.mxu0 0.0
    %4002 = vmatpush1.msra.mxu0 0.0
    %4003 = vmatprep.subr.mxu0 0.0
    %4004 = vmatpush1.msra.mxu0 0.0
    %4005 = vmatprep.subr.mxu0 0.0
    %4006 = vmatpush1.msra.mxu0 0.0
    %4007 = vmatprep.subr.mxu0 0.0
    %4008 = vmatpush1.msra.mxu0 0.0
    %4009 = vmatprep.subr.mxu0 0.0
    %4010 = vmatpush1.msra.mxu0 0.0
    %4011 = vmatprep.subr.mxu0 0.0
    %4012 = vmatpush1.msra.mxu0 0.0
    %4013 = vmatprep.subr.mxu0 0.0
    %4014 = vmatpush1.msra.mxu0 0.0
    %4015 = vmatprep.subr.mxu0 0.0
    %4016 = vmatpush1.msra.mxu0 0.0
    %4017 = vmatprep.subr.mxu0 0.0
    %4018 = vmatpush1.msra.mxu0 0.0
    %4019 = vmatprep.subr.mxu0 0.0
    %4020 = vmatpush1.msra.mxu0 0.0
    %4021 = vmatprep.subr.mxu0 0.0
    %4022 = vmatpush1.msra.mxu0 0.0
    %4023 = vmatprep.mubr.f32.mxu0 0.0
    %4024 = vmatmul.mubr.f32.gmra.mrb[0].mxu0 %v3957
    %v4025 = vpop.f32.mrb[0].mxu0
    %v4026 = vadd.f32 0.0, %v4025
    %v4027 = vpop.f32.mrb[0].mxu0
    %4028 = vdwg.mxu0
    %4029 = vrot.lane.b32.xlu0 %v3356, 112
    %v4030 = vpop.permute.xlu0 %4029
    %4031 = vrot.lane.b32.xlu0 %v2344, 112
    %v4032 = vpop.permute.xlu0 %4031
    %v4033 = vsel %vm3376, %v4030, 0
    %v4035 = vsel %vm3376, %v4032, 0
    %4037 = vmatprep.subr.mxu0 0.0
    %4038 = vmatpush1.xpose.msra.mxu0 %v4035
    %4039 = vmatprep.subr.mxu0 0.0
    %4040 = vmatpush1.xpose.msra.mxu0 0.0
    %4041 = vmatprep.subr.mxu0 0.0
    %4042 = vmatpush1.xpose.msra.mxu0 0.0
    %4043 = vmatprep.subr.mxu0 0.0
    %4044 = vmatpush1.xpose.msra.mxu0 0.0
    %4045 = vmatprep.subr.mxu0 0.0
    %4046 = vmatpush1.xpose.msra.mxu0 0.0
    %4047 = vmatprep.subr.mxu0 0.0
    %4048 = vmatpush1.xpose.msra.mxu0 0.0
    %4049 = vmatprep.subr.mxu0 0.0
    %4050 = vmatpush1.xpose.msra.mxu0 0.0
    %4051 = vmatprep.subr.mxu0 0.0
    %4052 = vmatpush1.xpose.msra.mxu0 0.0
    %4053 = vmatprep.subr.mxu0 0.0
    %4054 = vmatpush1.xpose.msra.mxu0 0.0
    %4055 = vmatprep.subr.mxu0 0.0
    %4056 = vmatpush1.xpose.msra.mxu0 0.0
    %4057 = vmatprep.subr.mxu0 0.0
    %4058 = vmatpush1.xpose.msra.mxu0 0.0
    %4059 = vmatprep.subr.mxu0 0.0
    %4060 = vmatpush1.xpose.msra.mxu0 0.0
    %4061 = vmatprep.subr.mxu0 0.0
    %4062 = vmatpush1.xpose.msra.mxu0 0.0
    %4063 = vmatprep.subr.mxu0 0.0
    %4064 = vmatpush1.xpose.msra.mxu0 0.0
    %4065 = vmatprep.subr.mxu0 0.0
    %4066 = vmatpush1.xpose.msra.mxu0 0.0
    %4067 = vmatprep.subr.mxu0 0.0
    %4068 = vmatpush1.xpose.msra.mxu0 0.0
    %4069 = vmatprep.subr.mxu0 0.0
    %4070 = vmatpush1.xpose.msra.mxu0 0.0
    %4071 = vmatprep.subr.mxu0 0.0
    %4072 = vmatpush1.xpose.msra.mxu0 0.0
    %4073 = vmatprep.subr.mxu0 0.0
    %4074 = vmatpush1.xpose.msra.mxu0 0.0
    %4075 = vmatprep.subr.mxu0 0.0
    %4076 = vmatpush1.xpose.msra.mxu0 0.0
    %4077 = vmatprep.subr.mxu0 0.0
    %4078 = vmatpush1.xpose.msra.mxu0 0.0
    %4079 = vmatprep.subr.mxu0 0.0
    %4080 = vmatpush1.xpose.msra.mxu0 0.0
    %4081 = vmatprep.subr.mxu0 0.0
    %4082 = vmatpush1.xpose.msra.mxu0 0.0
    %4083 = vmatprep.subr.mxu0 0.0
    %4084 = vmatpush1.xpose.msra.mxu0 0.0
    %4085 = vmatprep.subr.mxu0 0.0
    %4086 = vmatpush1.xpose.msra.mxu0 0.0
    %4087 = vmatprep.subr.mxu0 0.0
    %4088 = vmatpush1.xpose.msra.mxu0 0.0
    %4089 = vmatprep.subr.mxu0 0.0
    %4090 = vmatpush1.xpose.msra.mxu0 0.0
    %4091 = vmatprep.subr.mxu0 0.0
    %4092 = vmatpush1.xpose.msra.mxu0 0.0
    %4093 = vmatprep.subr.mxu0 0.0
    %4094 = vmatpush1.xpose.msra.mxu0 0.0
    %4095 = vmatprep.subr.mxu0 0.0
    %4096 = vmatpush1.xpose.msra.mxu0 0.0
    %4097 = vmatprep.subr.mxu0 0.0
    %4098 = vmatpush1.xpose.msra.mxu0 0.0
    %4099 = vmatprep.subr.mxu0 0.0
    %4100 = vmatpush1.xpose.msra.mxu0 0.0
    %4101 = vmatprep.mubr.f32.mxu0 0.0
    %4102 = vmatmul.mubr.f32.gmra.mrb[0].mxu0 %v4033
    %v4103 = vpop.f32.mrb[0].mxu0
    %v4104 = vadd.f32 %v3369, %v4103
    %v4105 = vpop.f32.mrb[0].mxu0
    %4106 = vdwg.mxu0
    %4107 = vrot.lane.b32.xlu0 %v3357, 112
    %v4108 = vpop.permute.xlu0 %4107
    %4109 = vrot.lane.b32.xlu0 %v2345, 112
    %v4110 = vpop.permute.xlu0 %4109
    %v4111 = vsel %vm3376, %v4108, 0
    %v4113 = vsel %vm3376, %v4110, 0
    %4115 = vmatprep.subr.mxu0 0.0
    %4116 = vmatpush1.xpose.msra.mxu0 %v4113
    %4117 = vmatprep.subr.mxu0 0.0
    %4118 = vmatpush1.xpose.msra.mxu0 0.0
    %4119 = vmatprep.subr.mxu0 0.0
    %4120 = vmatpush1.xpose.msra.mxu0 0.0
    %4121 = vmatprep.subr.mxu0 0.0
    %4122 = vmatpush1.xpose.msra.mxu0 0.0
    %4123 = vmatprep.subr.mxu0 0.0
    %4124 = vmatpush1.xpose.msra.mxu0 0.0
    %4125 = vmatprep.subr.mxu0 0.0
    %4126 = vmatpush1.xpose.msra.mxu0 0.0
    %4127 = vmatprep.subr.mxu0 0.0
    %4128 = vmatpush1.xpose.msra.mxu0 0.0
    %4129 = vmatprep.subr.mxu0 0.0
    %4130 = vmatpush1.xpose.msra.mxu0 0.0
    %4131 = vmatprep.subr.mxu0 0.0
    %4132 = vmatpush1.xpose.msra.mxu0 0.0
    %4133 = vmatprep.subr.mxu0 0.0
    %4134 = vmatpush1.xpose.msra.mxu0 0.0
    %4135 = vmatprep.subr.mxu0 0.0
    %4136 = vmatpush1.xpose.msra.mxu0 0.0
    %4137 = vmatprep.subr.mxu0 0.0
    %4138 = vmatpush1.xpose.msra.mxu0 0.0
    %4139 = vmatprep.subr.mxu0 0.0
    %4140 = vmatpush1.xpose.msra.mxu0 0.0
    %4141 = vmatprep.subr.mxu0 0.0
    %4142 = vmatpush1.xpose.msra.mxu0 0.0
    %4143 = vmatprep.subr.mxu0 0.0
    %4144 = vmatpush1.xpose.msra.mxu0 0.0
    %4145 = vmatprep.subr.mxu0 0.0
    %4146 = vmatpush1.xpose.msra.mxu0 0.0
    %4147 = vmatprep.subr.mxu0 0.0
    %4148 = vmatpush1.xpose.msra.mxu0 0.0
    %4149 = vmatprep.subr.mxu0 0.0
    %4150 = vmatpush1.xpose.msra.mxu0 0.0
    %4151 = vmatprep.subr.mxu0 0.0
    %4152 = vmatpush1.xpose.msra.mxu0 0.0
    %4153 = vmatprep.subr.mxu0 0.0
    %4154 = vmatpush1.xpose.msra.mxu0 0.0
    %4155 = vmatprep.subr.mxu0 0.0
    %4156 = vmatpush1.xpose.msra.mxu0 0.0
    %4157 = vmatprep.subr.mxu0 0.0
    %4158 = vmatpush1.xpose.msra.mxu0 0.0
    %4159 = vmatprep.subr.mxu0 0.0
    %4160 = vmatpush1.xpose.msra.mxu0 0.0
    %4161 = vmatprep.subr.mxu0 0.0
    %4162 = vmatpush1.xpose.msra.mxu0 0.0
    %4163 = vmatprep.subr.mxu0 0.0
    %4164 = vmatpush1.xpose.msra.mxu0 0.0
    %4165 = vmatprep.subr.mxu0 0.0
    %4166 = vmatpush1.xpose.msra.mxu0 0.0
    %4167 = vmatprep.subr.mxu0 0.0
    %4168 = vmatpush1.xpose.msra.mxu0 0.0
    %4169 = vmatprep.subr.mxu0 0.0
    %4170 = vmatpush1.xpose.msra.mxu0 0.0
    %4171 = vmatprep.subr.mxu0 0.0
    %4172 = vmatpush1.xpose.msra.mxu0 0.0
    %4173 = vmatprep.subr.mxu0 0.0
    %4174 = vmatpush1.xpose.msra.mxu0 0.0
    %4175 = vmatprep.subr.mxu0 0.0
    %4176 = vmatpush1.xpose.msra.mxu0 0.0
    %4177 = vmatprep.subr.mxu0 0.0
    %4178 = vmatpush1.xpose.msra.mxu0 0.0
    %4179 = vmatprep.mubr.f32.mxu0 0.0
    %4180 = vmatmul.mubr.f32.gmra.mrb[0].mxu0 %v4111
    %v4181 = vpop.f32.mrb[0].mxu0
    %v4182 = vadd.f32 %v3373, %v4181
    %v4183 = vpop.f32.mrb[0].mxu0
    %4184 = vdwg.mxu0
    %v4185 = vsel %vm3376, %v4104, -inf
    %4186 = vmax.xlane.f32.xlu0 %v4185
    %v4187 = vpop.xlane.xlu0 %4186
    %v4188 = vsel %vm3376, %v4182, -inf
    %4189 = vmax.xlane.f32.xlu0 %v4188
    %v4190 = vpop.xlane.xlu0 %4189
    %v4191 = vsub.f32 %v4104, %v4187
    %v4192 = vsub.f32 %v4182, %v4190
    %v4193 = vmul.f32 %v4191, 1.442695
    %v4194 = vpow.pop %v4193
    %v4195 = vmul.f32 %v4192, 1.442695
    %v4196 = vpow.pop %v4195
    %v4197 = vsel %vm3376, %v4194, 0.0
    %4198 = vadd.xlane.f32.xlu0 %v4197
    %v4199 = vpop.xlane.xlu0 %4198
    %v4200 = vsel %vm3376, %v4196, 0.0
    %4201 = vadd.xlane.f32.xlu0 %v4200
    %v4202 = vpop.xlane.xlu0 %4201
    %v4203 = vrcp.pop %v4199
    %v4204 = vmul.f32 %v4194, %v4203
    %v4205 = vrcp.pop %v4202
    %v4206 = vmul.f32 %v4196, %v4205
    %4207 = vrot.lane.b32.xlu0 %v3354, 112
    %v4208 = vpop.permute.xlu0 %4207
    %v4211 = vsel %vm3376, %v4204, 0
    %4213 = vmatprep.subr.mxu0 0.0
    %4214 = vmatpush1.msra.mxu0 %v4208
    %4215 = vmatprep.subr.mxu0 0.0
    %4216 = vmatpush1.msra.mxu0 0.0
    %4217 = vmatprep.subr.mxu0 0.0
    %4218 = vmatpush1.msra.mxu0 0.0
    %4219 = vmatprep.subr.mxu0 0.0
    %4220 = vmatpush1.msra.mxu0 0.0
    %4221 = vmatprep.subr.mxu0 0.0
    %4222 = vmatpush1.msra.mxu0 0.0
    %4223 = vmatprep.subr.mxu0 0.0
    %4224 = vmatpush1.msra.mxu0 0.0
    %4225 = vmatprep.subr.mxu0 0.0
    %4226 = vmatpush1.msra.mxu0 0.0
    %4227 = vmatprep.subr.mxu0 0.0
    %4228 = vmatpush1.msra.mxu0 0.0
    %4229 = vmatprep.subr.mxu0 0.0
    %4230 = vmatpush1.msra.mxu0 0.0
    %4231 = vmatprep.subr.mxu0 0.0
    %4232 = vmatpush1.msra.mxu0 0.0
    %4233 = vmatprep.subr.mxu0 0.0
    %4234 = vmatpush1.msra.mxu0 0.0
    %4235 = vmatprep.subr.mxu0 0.0
    %4236 = vmatpush1.msra.mxu0 0.0
    %4237 = vmatprep.subr.mxu0 0.0
    %4238 = vmatpush1.msra.mxu0 0.0
    %4239 = vmatprep.subr.mxu0 0.0
    %4240 = vmatpush1.msra.mxu0 0.0
    %4241 = vmatprep.subr.mxu0 0.0
    %4242 = vmatpush1.msra.mxu0 0.0
    %4243 = vmatprep.subr.mxu0 0.0
    %4244 = vmatpush1.msra.mxu0 0.0
    %4245 = vmatprep.subr.mxu0 0.0
    %4246 = vmatpush1.msra.mxu0 0.0
    %4247 = vmatprep.subr.mxu0 0.0
    %4248 = vmatpush1.msra.mxu0 0.0
    %4249 = vmatprep.subr.mxu0 0.0
    %4250 = vmatpush1.msra.mxu0 0.0
    %4251 = vmatprep.subr.mxu0 0.0
    %4252 = vmatpush1.msra.mxu0 0.0
    %4253 = vmatprep.subr.mxu0 0.0
    %4254 = vmatpush1.msra.mxu0 0.0
    %4255 = vmatprep.subr.mxu0 0.0
    %4256 = vmatpush1.msra.mxu0 0.0
    %4257 = vmatprep.subr.mxu0 0.0
    %4258 = vmatpush1.msra.mxu0 0.0
    %4259 = vmatprep.subr.mxu0 0.0
    %4260 = vmatpush1.msra.mxu0 0.0
    %4261 = vmatprep.subr.mxu0 0.0
    %4262 = vmatpush1.msra.mxu0 0.0
    %4263 = vmatprep.subr.mxu0 0.0
    %4264 = vmatpush1.msra.mxu0 0.0
    %4265 = vmatprep.subr.mxu0 0.0
    %4266 = vmatpush1.msra.mxu0 0.0
    %4267 = vmatprep.subr.mxu0 0.0
    %4268 = vmatpush1.msra.mxu0 0.0
    %4269 = vmatprep.subr.mxu0 0.0
    %4270 = vmatpush1.msra.mxu0 0.0
    %4271 = vmatprep.subr.mxu0 0.0
    %4272 = vmatpush1.msra.mxu0 0.0
    %4273 = vmatprep.subr.mxu0 0.0
    %4274 = vmatpush1.msra.mxu0 0.0
    %4275 = vmatprep.subr.mxu0 0.0
    %4276 = vmatpush1.msra.mxu0 0.0
    %4277 = vmatprep.mubr.f32.mxu0 0.0
    %4278 = vmatmul.mubr.f32.gmra.mrb[0].mxu0 %v4211
    %v4279 = vpop.f32.mrb[0].mxu0
    %v4280 = vadd.f32 0.0, %v4279
    %v4281 = vpop.f32.mrb[0].mxu0
    %4282 = vdwg.mxu0
    %4283 = vrot.lane.b32.xlu0 %v3355, 112
    %v4284 = vpop.permute.xlu0 %4283
    %v4287 = vsel %vm3376, %v4206, 0
    %4289 = vmatprep.subr.mxu0 0.0
    %4290 = vmatpush1.msra.mxu0 %v4284
    %4291 = vmatprep.subr.mxu0 0.0
    %4292 = vmatpush1.msra.mxu0 0.0
    %4293 = vmatprep.subr.mxu0 0.0
    %4294 = vmatpush1.msra.mxu0 0.0
    %4295 = vmatprep.subr.mxu0 0.0
    %4296 = vmatpush1.msra.mxu0 0.0
    %4297 = vmatprep.subr.mxu0 0.0
    %4298 = vmatpush1.msra.mxu0 0.0
    %4299 = vmatprep.subr.mxu0 0.0
    %4300 = vmatpush1.msra.mxu0 0.0
    %4301 = vmatprep.subr.mxu0 0.0
    %4302 = vmatpush1.msra.mxu0 0.0
    %4303 = vmatprep.subr.mxu0 0.0
    %4304 = vmatpush1.msra.mxu0 0.0
    %4305 = vmatprep.subr.mxu0 0.0
    %4306 = vmatpush1.msra.mxu0 0.0
    %4307 = vmatprep.subr.mxu0 0.0
    %4308 = vmatpush1.msra.mxu0 0.0
    %4309 = vmatprep.subr.mxu0 0.0
    %4310 = vmatpush1.msra.mxu0 0.0
    %4311 = vmatprep.subr.mxu0 0.0
    %4312 = vmatpush1.msra.mxu0 0.0
    %4313 = vmatprep.subr.mxu0 0.0
    %4314 = vmatpush1.msra.mxu0 0.0
    %4315 = vmatprep.subr.mxu0 0.0
    %4316 = vmatpush1.msra.mxu0 0.0
    %4317 = vmatprep.subr.mxu0 0.0
    %4318 = vmatpush1.msra.mxu0 0.0
    %4319 = vmatprep.subr.mxu0 0.0
    %4320 = vmatpush1.msra.mxu0 0.0
    %4321 = vmatprep.subr.mxu0 0.0
    %4322 = vmatpush1.msra.mxu0 0.0
    %4323 = vmatprep.subr.mxu0 0.0
    %4324 = vmatpush1.msra.mxu0 0.0
    %4325 = vmatprep.subr.mxu0 0.0
    %4326 = vmatpush1.msra.mxu0 0.0
    %4327 = vmatprep.subr.mxu0 0.0
    %4328 = vmatpush1.msra.mxu0 0.0
    %4329 = vmatprep.subr.mxu0 0.0
    %4330 = vmatpush1.msra.mxu0 0.0
    %4331 = vmatprep.subr.mxu0 0.0
    %4332 = vmatpush1.msra.mxu0 0.0
    %4333 = vmatprep.subr.mxu0 0.0
    %4334 = vmatpush1.msra.mxu0 0.0
    %4335 = vmatprep.subr.mxu0 0.0
    %4336 = vmatpush1.msra.mxu0 0.0
    %4337 = vmatprep.subr.mxu0 0.0
    %4338 = vmatpush1.msra.mxu0 0.0
    %4339 = vmatprep.subr.mxu0 0.0
    %4340 = vmatpush1.msra.mxu0 0.0
    %4341 = vmatprep.subr.mxu0 0.0
    %4342 = vmatpush1.msra.mxu0 0.0
    %4343 = vmatprep.subr.mxu0 0.0
    %4344 = vmatpush1.msra.mxu0 0.0
    %4345 = vmatprep.subr.mxu0 0.0
    %4346 = vmatpush1.msra.mxu0 0.0
    %4347 = vmatprep.subr.mxu0 0.0
    %4348 = vmatpush1.msra.mxu0 0.0
    %4349 = vmatprep.subr.mxu0 0.0
    %4350 = vmatpush1.msra.mxu0 0.0
    %4351 = vmatprep.subr.mxu0 0.0
    %4352 = vmatpush1.msra.mxu0 0.0
    %4353 = vmatprep.mubr.f32.mxu0 0.0
    %4354 = vmatmul.mubr.f32.gmra.mrb[0].mxu0 %v4287
    %v4355 = vpop.f32.mrb[0].mxu0
    %v4356 = vadd.f32 0.0, %v4355
    %v4357 = vpop.f32.mrb[0].mxu0
    %4358 = vdwg.mxu0
    %4359 = vrot.lane.b32.xlu0 %v3356, 104
    %v4360 = vpop.permute.xlu0 %4359
    %4361 = vrot.lane.b32.xlu0 %v2344, 104
    %v4362 = vpop.permute.xlu0 %4361
    %v4363 = vsel %vm3376, %v4360, 0
    %v4365 = vsel %vm3376, %v4362, 0
    %4367 = vmatprep.subr.mxu0 0.0
    %4368 = vmatpush1.xpose.msra.mxu0 %v4365
    %4369 = vmatprep.subr.mxu0 0.0
    %4370 = vmatpush1.xpose.msra.mxu0 0.0
    %4371 = vmatprep.subr.mxu0 0.0
    %4372 = vmatpush1.xpose.msra.mxu0 0.0
    %4373 = vmatprep.subr.mxu0 0.0
    %4374 = vmatpush1.xpose.msra.mxu0 0.0
    %4375 = vmatprep.subr.mxu0 0.0
    %4376 = vmatpush1.xpose.msra.mxu0 0.0
    %4377 = vmatprep.subr.mxu0 0.0
    %4378 = vmatpush1.xpose.msra.mxu0 0.0
    %4379 = vmatprep.subr.mxu0 0.0
    %4380 = vmatpush1.xpose.msra.mxu0 0.0
    %4381 = vmatprep.subr.mxu0 0.0
    %4382 = vmatpush1.xpose.msra.mxu0 0.0
    %4383 = vmatprep.subr.mxu0 0.0
    %4384 = vmatpush1.xpose.msra.mxu0 0.0
    %4385 = vmatprep.subr.mxu0 0.0
    %4386 = vmatpush1.xpose.msra.mxu0 0.0
    %4387 = vmatprep.subr.mxu0 0.0
    %4388 = vmatpush1.xpose.msra.mxu0 0.0
    %4389 = vmatprep.subr.mxu0 0.0
    %4390 = vmatpush1.xpose.msra.mxu0 0.0
    %4391 = vmatprep.subr.mxu0 0.0
    %4392 = vmatpush1.xpose.msra.mxu0 0.0
    %4393 = vmatprep.subr.mxu0 0.0
    %4394 = vmatpush1.xpose.msra.mxu0 0.0
    %4395 = vmatprep.subr.mxu0 0.0
    %4396 = vmatpush1.xpose.msra.mxu0 0.0
    %4397 = vmatprep.subr.mxu0 0.0
    %4398 = vmatpush1.xpose.msra.mxu0 0.0
    %4399 = vmatprep.subr.mxu0 0.0
    %4400 = vmatpush1.xpose.msra.mxu0 0.0
    %4401 = vmatprep.subr.mxu0 0.0
    %4402 = vmatpush1.xpose.msra.mxu0 0.0
    %4403 = vmatprep.subr.mxu0 0.0
    %4404 = vmatpush1.xpose.msra.mxu0 0.0
    %4405 = vmatprep.subr.mxu0 0.0
    %4406 = vmatpush1.xpose.msra.mxu0 0.0
    %4407 = vmatprep.subr.mxu0 0.0
    %4408 = vmatpush1.xpose.msra.mxu0 0.0
    %4409 = vmatprep.subr.mxu0 0.0
    %4410 = vmatpush1.xpose.msra.mxu0 0.0
    %4411 = vmatprep.subr.mxu0 0.0
    %4412 = vmatpush1.xpose.msra.mxu0 0.0
    %4413 = vmatprep.subr.mxu0 0.0
    %4414 = vmatpush1.xpose.msra.mxu0 0.0
    %4415 = vmatprep.subr.mxu0 0.0
    %4416 = vmatpush1.xpose.msra.mxu0 0.0
    %4417 = vmatprep.subr.mxu0 0.0
    %4418 = vmatpush1.xpose.msra.mxu0 0.0
    %4419 = vmatprep.subr.mxu0 0.0
    %4420 = vmatpush1.xpose.msra.mxu0 0.0
    %4421 = vmatprep.subr.mxu0 0.0
    %4422 = vmatpush1.xpose.msra.mxu0 0.0
    %4423 = vmatprep.subr.mxu0 0.0
    %4424 = vmatpush1.xpose.msra.mxu0 0.0
    %4425 = vmatprep.subr.mxu0 0.0
    %4426 = vmatpush1.xpose.msra.mxu0 0.0
    %4427 = vmatprep.subr.mxu0 0.0
    %4428 = vmatpush1.xpose.msra.mxu0 0.0
    %4429 = vmatprep.subr.mxu0 0.0
    %4430 = vmatpush1.xpose.msra.mxu0 0.0
    %4431 = vmatprep.mubr.f32.mxu0 0.0
    %4432 = vmatmul.mubr.f32.gmra.mrb[0].mxu0 %v4363
    %v4433 = vpop.f32.mrb[0].mxu0
    %v4434 = vadd.f32 %v3369, %v4433
    %v4435 = vpop.f32.mrb[0].mxu0
    %4436 = vdwg.mxu0
    %4437 = vrot.lane.b32.xlu0 %v3357, 104
    %v4438 = vpop.permute.xlu0 %4437
    %4439 = vrot.lane.b32.xlu0 %v2345, 104
    %v4440 = vpop.permute.xlu0 %4439
    %v4441 = vsel %vm3376, %v4438, 0
    %v4443 = vsel %vm3376, %v4440, 0
    %4445 = vmatprep.subr.mxu0 0.0
    %4446 = vmatpush1.xpose.msra.mxu0 %v4443
    %4447 = vmatprep.subr.mxu0 0.0
    %4448 = vmatpush1.xpose.msra.mxu0 0.0
    %4449 = vmatprep.subr.mxu0 0.0
    %4450 = vmatpush1.xpose.msra.mxu0 0.0
    %4451 = vmatprep.subr.mxu0 0.0
    %4452 = vmatpush1.xpose.msra.mxu0 0.0
    %4453 = vmatprep.subr.mxu0 0.0
    %4454 = vmatpush1.xpose.msra.mxu0 0.0
    %4455 = vmatprep.subr.mxu0 0.0
    %4456 = vmatpush1.xpose.msra.mxu0 0.0
    %4457 = vmatprep.subr.mxu0 0.0
    %4458 = vmatpush1.xpose.msra.mxu0 0.0
    %4459 = vmatprep.subr.mxu0 0.0
    %4460 = vmatpush1.xpose.msra.mxu0 0.0
    %4461 = vmatprep.subr.mxu0 0.0
    %4462 = vmatpush1.xpose.msra.mxu0 0.0
    %4463 = vmatprep.subr.mxu0 0.0
    %4464 = vmatpush1.xpose.msra.mxu0 0.0
    %4465 = vmatprep.subr.mxu0 0.0
    %4466 = vmatpush1.xpose.msra.mxu0 0.0
    %4467 = vmatprep.subr.mxu0 0.0
    %4468 = vmatpush1.xpose.msra.mxu0 0.0
    %4469 = vmatprep.subr.mxu0 0.0
    %4470 = vmatpush1.xpose.msra.mxu0 0.0
    %4471 = vmatprep.subr.mxu0 0.0
    %4472 = vmatpush1.xpose.msra.mxu0 0.0
    %4473 = vmatprep.subr.mxu0 0.0
    %4474 = vmatpush1.xpose.msra.mxu0 0.0
    %4475 = vmatprep.subr.mxu0 0.0
    %4476 = vmatpush1.xpose.msra.mxu0 0.0
    %4477 = vmatprep.subr.mxu0 0.0
    %4478 = vmatpush1.xpose.msra.mxu0 0.0
    %4479 = vmatprep.subr.mxu0 0.0
    %4480 = vmatpush1.xpose.msra.mxu0 0.0
    %4481 = vmatprep.subr.mxu0 0.0
    %4482 = vmatpush1.xpose.msra.mxu0 0.0
    %4483 = vmatprep.subr.mxu0 0.0
    %4484 = vmatpush1.xpose.msra.mxu0 0.0
    %4485 = vmatprep.subr.mxu0 0.0
    %4486 = vmatpush1.xpose.msra.mxu0 0.0
    %4487 = vmatprep.subr.mxu0 0.0
    %4488 = vmatpush1.xpose.msra.mxu0 0.0
    %4489 = vmatprep.subr.mxu0 0.0
    %4490 = vmatpush1.xpose.msra.mxu0 0.0
    %4491 = vmatprep.subr.mxu0 0.0
    %4492 = vmatpush1.xpose.msra.mxu0 0.0
    %4493 = vmatprep.subr.mxu0 0.0
    %4494 = vmatpush1.xpose.msra.mxu0 0.0
    %4495 = vmatprep.subr.mxu0 0.0
    %4496 = vmatpush1.xpose.msra.mxu0 0.0
    %4497 = vmatprep.subr.mxu0 0.0
    %4498 = vmatpush1.xpose.msra.mxu0 0.0
    %4499 = vmatprep.subr.mxu0 0.0
    %4500 = vmatpush1.xpose.msra.mxu0 0.0
    %4501 = vmatprep.subr.mxu0 0.0
    %4502 = vmatpush1.xpose.msra.mxu0 0.0
    %4503 = vmatprep.subr.mxu0 0.0
    %4504 = vmatpush1.xpose.msra.mxu0 0.0
    %4505 = vmatprep.subr.mxu0 0.0
    %4506 = vmatpush1.xpose.msra.mxu0 0.0
    %4507 = vmatprep.subr.mxu0 0.0
    %4508 = vmatpush1.xpose.msra.mxu0 0.0
    %4509 = vmatprep.mubr.f32.mxu0 0.0
    %4510 = vmatmul.mubr.f32.gmra.mrb[0].mxu0 %v4441
    %v4511 = vpop.f32.mrb[0].mxu0
    %v4512 = vadd.f32 %v3373, %v4511
    %v4513 = vpop.f32.mrb[0].mxu0
    %4514 = vdwg.mxu0
    %v4515 = vsel %vm3376, %v4434, -inf
    %4516 = vmax.xlane.f32.xlu0 %v4515
    %v4517 = vpop.xlane.xlu0 %4516
    %v4518 = vsel %vm3376, %v4512, -inf
    %4519 = vmax.xlane.f32.xlu0 %v4518
    %v4520 = vpop.xlane.xlu0 %4519
    %v4521 = vsub.f32 %v4434, %v4517
    %v4522 = vsub.f32 %v4512, %v4520
    %v4523 = vmul.f32 %v4521, 1.442695
    %v4524 = vpow.pop %v4523
    %v4525 = vmul.f32 %v4522, 1.442695
    %v4526 = vpow.pop %v4525
    %v4527 = vsel %vm3376, %v4524, 0.0
    %4528 = vadd.xlane.f32.xlu0 %v4527
    %v4529 = vpop.xlane.xlu0 %4528
    %v4530 = vsel %vm3376, %v4526, 0.0
    %4531 = vadd.xlane.f32.xlu0 %v4530
    %v4532 = vpop.xlane.xlu0 %4531
    %v4533 = vrcp.pop %v4529
    %v4534 = vmul.f32 %v4524, %v4533
    %v4535 = vrcp.pop %v4532
    %v4536 = vmul.f32 %v4526, %v4535
    %4537 = vrot.lane.b32.xlu0 %v3354, 104
    %v4538 = vpop.permute.xlu0 %4537
    %v4541 = vsel %vm3376, %v4534, 0
    %4543 = vmatprep.subr.mxu0 0.0
    %4544 = vmatpush1.msra.mxu0 %v4538
    %4545 = vmatprep.subr.mxu0 0.0
    %4546 = vmatpush1.msra.mxu0 0.0
    %4547 = vmatprep.subr.mxu0 0.0
    %4548 = vmatpush1.msra.mxu0 0.0
    %4549 = vmatprep.subr.mxu0 0.0
    %4550 = vmatpush1.msra.mxu0 0.0
    %4551 = vmatprep.subr.mxu0 0.0
    %4552 = vmatpush1.msra.mxu0 0.0
    %4553 = vmatprep.subr.mxu0 0.0
    %4554 = vmatpush1.msra.mxu0 0.0
    %4555 = vmatprep.subr.mxu0 0.0
    %4556 = vmatpush1.msra.mxu0 0.0
    %4557 = vmatprep.subr.mxu0 0.0
    %4558 = vmatpush1.msra.mxu0 0.0
    %4559 = vmatprep.subr.mxu0 0.0
    %4560 = vmatpush1.msra.mxu0 0.0
    %4561 = vmatprep.subr.mxu0 0.0
    %4562 = vmatpush1.msra.mxu0 0.0
    %4563 = vmatprep.subr.mxu0 0.0
    %4564 = vmatpush1.msra.mxu0 0.0
    %4565 = vmatprep.subr.mxu0 0.0
    %4566 = vmatpush1.msra.mxu0 0.0
    %4567 = vmatprep.subr.mxu0 0.0
    %4568 = vmatpush1.msra.mxu0 0.0
    %4569 = vmatprep.subr.mxu0 0.0
    %4570 = vmatpush1.msra.mxu0 0.0
    %4571 = vmatprep.subr.mxu0 0.0
    %4572 = vmatpush1.msra.mxu0 0.0
    %4573 = vmatprep.subr.mxu0 0.0
    %4574 = vmatpush1.msra.mxu0 0.0
    %4575 = vmatprep.subr.mxu0 0.0
    %4576 = vmatpush1.msra.mxu0 0.0
    %4577 = vmatprep.subr.mxu0 0.0
    %4578 = vmatpush1.msra.mxu0 0.0
    %4579 = vmatprep.subr.mxu0 0.0
    %4580 = vmatpush1.msra.mxu0 0.0
    %4581 = vmatprep.subr.mxu0 0.0
    %4582 = vmatpush1.msra.mxu0 0.0
    %4583 = vmatprep.subr.mxu0 0.0
    %4584 = vmatpush1.msra.mxu0 0.0
    %4585 = vmatprep.subr.mxu0 0.0
    %4586 = vmatpush1.msra.mxu0 0.0
    %4587 = vmatprep.subr.mxu0 0.0
    %4588 = vmatpush1.msra.mxu0 0.0
    %4589 = vmatprep.subr.mxu0 0.0
    %4590 = vmatpush1.msra.mxu0 0.0
    %4591 = vmatprep.subr.mxu0 0.0
    %4592 = vmatpush1.msra.mxu0 0.0
    %4593 = vmatprep.subr.mxu0 0.0
    %4594 = vmatpush1.msra.mxu0 0.0
    %4595 = vmatprep.subr.mxu0 0.0
    %4596 = vmatpush1.msra.mxu0 0.0
    %4597 = vmatprep.subr.mxu0 0.0
    %4598 = vmatpush1.msra.mxu0 0.0
    %4599 = vmatprep.subr.mxu0 0.0
    %4600 = vmatpush1.msra.mxu0 0.0
    %4601 = vmatprep.subr.mxu0 0.0
    %4602 = vmatpush1.msra.mxu0 0.0
    %4603 = vmatprep.subr.mxu0 0.0
    %4604 = vmatpush1.msra.mxu0 0.0
    %4605 = vmatprep.subr.mxu0 0.0
    %4606 = vmatpush1.msra.mxu0 0.0
    %4607 = vmatprep.mubr.f32.mxu0 0.0
    %4608 = vmatmul.mubr.f32.gmra.mrb[0].mxu0 %v4541
    %v4609 = vpop.f32.mrb[0].mxu0
    %v4610 = vadd.f32 0.0, %v4609
    %v4611 = vpop.f32.mrb[0].mxu0
    %4612 = vdwg.mxu0
    %4613 = vrot.lane.b32.xlu0 %v3355, 104
    %v4614 = vpop.permute.xlu0 %4613
    %v4617 = vsel %vm3376, %v4536, 0
    %4619 = vmatprep.subr.mxu0 0.0
    %4620 = vmatpush1.msra.mxu0 %v4614
    %4621 = vmatprep.subr.mxu0 0.0
    %4622 = vmatpush1.msra.mxu0 0.0
    %4623 = vmatprep.subr.mxu0 0.0
    %4624 = vmatpush1.msra.mxu0 0.0
    %4625 = vmatprep.subr.mxu0 0.0
    %4626 = vmatpush1.msra.mxu0 0.0
    %4627 = vmatprep.subr.mxu0 0.0
    %4628 = vmatpush1.msra.mxu0 0.0
    %4629 = vmatprep.subr.mxu0 0.0
    %4630 = vmatpush1.msra.mxu0 0.0
    %4631 = vmatprep.subr.mxu0 0.0
    %4632 = vmatpush1.msra.mxu0 0.0
    %4633 = vmatprep.subr.mxu0 0.0
    %4634 = vmatpush1.msra.mxu0 0.0
    %4635 = vmatprep.subr.mxu0 0.0
    %4636 = vmatpush1.msra.mxu0 0.0
    %4637 = vmatprep.subr.mxu0 0.0
    %4638 = vmatpush1.msra.mxu0 0.0
    %4639 = vmatprep.subr.mxu0 0.0
    %4640 = vmatpush1.msra.mxu0 0.0
    %4641 = vmatprep.subr.mxu0 0.0
    %4642 = vmatpush1.msra.mxu0 0.0
    %4643 = vmatprep.subr.mxu0 0.0
    %4644 = vmatpush1.msra.mxu0 0.0
    %4645 = vmatprep.subr.mxu0 0.0
    %4646 = vmatpush1.msra.mxu0 0.0
    %4647 = vmatprep.subr.mxu0 0.0
    %4648 = vmatpush1.msra.mxu0 0.0
    %4649 = vmatprep.subr.mxu0 0.0
    %4650 = vmatpush1.msra.mxu0 0.0
    %4651 = vmatprep.subr.mxu0 0.0
    %4652 = vmatpush1.msra.mxu0 0.0
    %4653 = vmatprep.subr.mxu0 0.0
    %4654 = vmatpush1.msra.mxu0 0.0
    %4655 = vmatprep.subr.mxu0 0.0
    %4656 = vmatpush1.msra.mxu0 0.0
    %4657 = vmatprep.subr.mxu0 0.0
    %4658 = vmatpush1.msra.mxu0 0.0
    %4659 = vmatprep.subr.mxu0 0.0
    %4660 = vmatpush1.msra.mxu0 0.0
    %4661 = vmatprep.subr.mxu0 0.0
    %4662 = vmatpush1.msra.mxu0 0.0
    %4663 = vmatprep.subr.mxu0 0.0
    %4664 = vmatpush1.msra.mxu0 0.0
    %4665 = vmatprep.subr.mxu0 0.0
    %4666 = vmatpush1.msra.mxu0 0.0
    %4667 = vmatprep.subr.mxu0 0.0
    %4668 = vmatpush1.msra.mxu0 0.0
    %4669 = vmatprep.subr.mxu0 0.0
    %4670 = vmatpush1.msra.mxu0 0.0
    %4671 = vmatprep.subr.mxu0 0.0
    %4672 = vmatpush1.msra.mxu0 0.0
    %4673 = vmatprep.subr.mxu0 0.0
    %4674 = vmatpush1.msra.mxu0 0.0
    %4675 = vmatprep.subr.mxu0 0.0
    %4676 = vmatpush1.msra.mxu0 0.0
    %4677 = vmatprep.subr.mxu0 0.0
    %4678 = vmatpush1.msra.mxu0 0.0
    %4679 = vmatprep.subr.mxu0 0.0
    %4680 = vmatpush1.msra.mxu0 0.0
    %4681 = vmatprep.subr.mxu0 0.0
    %4682 = vmatpush1.msra.mxu0 0.0
    %4683 = vmatprep.mubr.f32.mxu0 0.0
    %4684 = vmatmul.mubr.f32.gmra.mrb[0].mxu0 %v4617
    %v4685 = vpop.f32.mrb[0].mxu0
    %v4686 = vadd.f32 0.0, %v4685
    %v4687 = vpop.f32.mrb[0].mxu0
    %4688 = vdwg.mxu0
    %4691 = vrot.lane.b32.xlu0 %v3949, 8
    %v4692 = vpop.permute.xlu0 %4691
    %4693 = vrot.lane.b32.xlu0 %v4026, 8
    %v4694 = vpop.permute.xlu0 %4693
    %4699 = vrot.lane.b32.xlu0 %v4280, 16
    %v4700 = vpop.permute.xlu0 %4699
    %4701 = vrot.lane.b32.xlu0 %v4356, 16
    %v4702 = vpop.permute.xlu0 %4701
    %4707 = vrot.lane.b32.xlu0 %v4610, 24
    %v4708 = vpop.permute.xlu0 %4707
    %4709 = vrot.lane.b32.xlu0 %v4686, 24
    %v4710 = vpop.permute.xlu0 %4709
    %v4713 = vsel %vm3376, %v3621, %v4692
    %v4714 = vsel %vm3376, %v3694, %v4694
    %vm4715 = vcmask 130048
    %v4716 = vsel %vm4715, %v4713, %v4700
    %v4717 = vsel %vm4715, %v4714, %v4702
    %vm4718 = vcmask 195584
    %v4719 = vsel %vm4718, %v4716, %v4708
    %v4720 = vsel %vm4718, %v4717, %v4710
    %v4721 = vadd.f32 %v215, %v4719
    %v4722 = vadd.f32 %v216, %v4720
    %v4723 = vld [vmem:[#allocation16] sm:$0x1]
    %v4724 = vld [vmem:[#allocation17] sm:$0x1]
    %v4725 = vsel %vm219, %v4721, 0.0
    %4726 = vadd.xlane.f32.xlu0 %v4725
    %v4727 = vpop.xlane.xlu0 %4726
    %v4728 = vsel %vm219, %v4722, 0.0
    %4729 = vadd.xlane.f32.xlu0 %v4728
    %v4730 = vpop.xlane.xlu0 %4729
    %v4731 = vmul.f32 %v4727, %v226
    %v4732 = vmul.f32 %v4730, %v226
    %v4733 = vsub.f32 %v4721, %v4731
    %v4734 = vsub.f32 %v4722, %v4732
    %v4735 = vmul.f32 %v4733, %v4733
    %v4736 = vmul.f32 %v4734, %v4734
    %v4737 = vsel %vm219, %v4735, 0.0
    %4738 = vadd.xlane.f32.xlu0 %v4737
    %v4739 = vpop.xlane.xlu0 %4738
    %v4740 = vsel %vm219, %v4736, 0.0
    %4741 = vadd.xlane.f32.xlu0 %v4740
    %v4742 = vpop.xlane.xlu0 %4741
    %v4743 = vmul.f32 %v4739, %v226
    %v4744 = vmul.f32 %v4742, %v226
    %v4745 = vadd.f32 %v4743, 1e-06
    %v4746 = vadd.f32 %v4744, 1e-06
    %v4747 = vrsqrt.pop %v4745
    %v4748 = vrsqrt.pop %v4746
    %v4749 = vmul.f32 %v4733, %v4747
    %v4750 = vmul.f32 %v4734, %v4748
    %v4752 = vlaneseq
    %v4753 = vshrl.u32 %v4752, 7
    %v4754 = vsub.s32 0, %v4753
    %v4755 = vrot.slane %v4723, %v4754
    %v4757 = vmul.f32 %v4749, %v4755
    %v4758 = vmul.f32 %v4750, %v4755
    %v4760 = vlaneseq
    %v4761 = vshrl.u32 %v4760, 7
    %v4762 = vsub.s32 0, %v4761
    %v4763 = vrot.slane %v4724, %v4762
    %v4765 = vadd.f32 %v4757, %v4763
    %v4766 = vadd.f32 %v4758, %v4763
    %v4767 = vld [vmem:[%s18] sm:$0xff]
    %v4768 = vld [vmem:[%s18 + $0x8] sm:$0xff]
    %v4769 = vld [vmem:[%s18 + $0x10] sm:$0xff]
    %v4770 = vld [vmem:[%s18 + $0x18] sm:$0xff]
    %v4771 = vld [vmem:[#allocation19] sm:$0x1]
    %v4773 = vlaneseq
    %v4774 = vshrl.u32 %v4773, 7
    %v4775 = vsub.s32 0, %v4774
    %v4776 = vrot.slane %v4771, %v4775
    %v4779 = vsel %vm219, %v4765, 0
    %v4782 = vsel %vm219, %v4766, 0
    %4784 = vmatprep.subr.mxu0 0.0
    %4785 = vmatpush1.msra.mxu0 %v4767
    %4786 = vmatprep.subr.mxu0 0.0
    %4787 = vmatpush1.msra.mxu0 %v4768
    %4788 = vmatprep.subr.mxu0 0.0
    %4789 = vmatpush1.msra.mxu0 %v4769
    %4790 = vmatprep.subr.mxu0 0.0
    %4791 = vmatpush1.msra.mxu0 %v4770
    %4792 = vmatprep.subr.mxu0 0.0
    %4793 = vmatpush1.msra.mxu0 0.0
    %4794 = vmatprep.subr.mxu0 0.0
    %4795 = vmatpush1.msra.mxu0 0.0
    %4796 = vmatprep.subr.mxu0 0.0
    %4797 = vmatpush1.msra.mxu0 0.0
    %4798 = vmatprep.subr.mxu0 0.0
    %4799 = vmatpush1.msra.mxu0 0.0
    %4800 = vmatprep.subr.mxu0 0.0
    %4801 = vmatpush1.msra.mxu0 0.0
    %4802 = vmatprep.subr.mxu0 0.0
    %4803 = vmatpush1.msra.mxu0 0.0
    %4804 = vmatprep.subr.mxu0 0.0
    %4805 = vmatpush1.msra.mxu0 0.0
    %4806 = vmatprep.subr.mxu0 0.0
    %4807 = vmatpush1.msra.mxu0 0.0
    %4808 = vmatprep.subr.mxu0 0.0
    %4809 = vmatpush1.msra.mxu0 0.0
    %4810 = vmatprep.subr.mxu0 0.0
    %4811 = vmatpush1.msra.mxu0 0.0
    %4812 = vmatprep.subr.mxu0 0.0
    %4813 = vmatpush1.msra.mxu0 0.0
    %4814 = vmatprep.subr.mxu0 0.0
    %4815 = vmatpush1.msra.mxu0 0.0
    %4816 = vmatprep.subr.mxu0 0.0
    %4817 = vmatpush1.msra.mxu0 0.0
    %4818 = vmatprep.subr.mxu0 0.0
    %4819 = vmatpush1.msra.mxu0 0.0
    %4820 = vmatprep.subr.mxu0 0.0
    %4821 = vmatpush1.msra.mxu0 0.0
    %4822 = vmatprep.subr.mxu0 0.0
    %4823 = vmatpush1.msra.mxu0 0.0
    %4824 = vmatprep.subr.mxu0 0.0
    %4825 = vmatpush1.msra.mxu0 0.0
    %4826 = vmatprep.subr.mxu0 0.0
    %4827 = vmatpush1.msra.mxu0 0.0
    %4828 = vmatprep.subr.mxu0 0.0
    %4829 = vmatpush1.msra.mxu0 0.0
    %4830 = vmatprep.subr.mxu0 0.0
    %4831 = vmatpush1.msra.mxu0 0.0
    %4832 = vmatprep.subr.mxu0 0.0
    %4833 = vmatpush1.msra.mxu0 0.0
    %4834 = vmatprep.subr.mxu0 0.0
    %4835 = vmatpush1.msra.mxu0 0.0
    %4836 = vmatprep.subr.mxu0 0.0
    %4837 = vmatpush1.msra.mxu0 0.0
    %4838 = vmatprep.subr.mxu0 0.0
    %4839 = vmatpush1.msra.mxu0 0.0
    %4840 = vmatprep.subr.mxu0 0.0
    %4841 = vmatpush1.msra.mxu0 0.0
    %4842 = vmatprep.subr.mxu0 0.0
    %4843 = vmatpush1.msra.mxu0 0.0
    %4844 = vmatprep.subr.mxu0 0.0
    %4845 = vmatpush1.msra.mxu0 0.0
    %4846 = vmatprep.subr.mxu0 0.0
    %4847 = vmatpush1.msra.mxu0 0.0
    %4848 = vmatprep.mubr.f32.mxu0 0.0
    %4849 = vmatmul.mubr.f32.gmra.mrb[0].mxu0 %v4779
    %v4850 = vpop.f32.mrb[0].mxu0
    %v4851 = vadd.f32 %v4776, %v4850
    %v4852 = vpop.f32.mrb[0].mxu0
    %4853 = vmatprep.mubr.f32.mxu0 0.0
    %4854 = vmatmul.mubr.f32.gmra.mrb[0].mxu0 %v4782
    %v4855 = vpop.f32.mrb[0].mxu0
    %v4856 = vadd.f32 %v4776, %v4855
    %v4857 = vpop.f32.mrb[0].mxu0
    %4858 = vdwg.mxu0
    %v4859 = vmul.f32 %v4851, 0.5
    %v4860 = vmul.f32 %v4856, 0.5
    %v4861 = vmul.f32 %v4851, 0.044715
    %v4862 = vmul.f32 %v4856, 0.044715
    %v4863 = vmul.f32 %v4861, %v4851
    %v4864 = vmul.f32 %v4862, %v4856
    %v4865 = vmul.f32 %v4863, %v4851
    %v4866 = vmul.f32 %v4864, %v4856
    %v4867 = vadd.f32 %v4851, %v4865
    %v4868 = vadd.f32 %v4856, %v4866
    %v4869 = vmul.f32 %v4867, 0.7978846
    %v4870 = vmul.f32 %v4868, 0.7978846
    %v4871 = vtanh.pop %v4869
    %v4872 = vtanh.pop %v4870
    %v4873 = vadd.f32 %v4871, 1.0
    %v4874 = vadd.f32 %v4872, 1.0
    %v4875 = vmul.f32 %v4859, %v4873
    %v4876 = vmul.f32 %v4860, %v4874
    %v4877 = vld [vmem:[%s20] sm:$0xff]
    %v4878 = vld [vmem:[%s20 + $0x8] sm:$0xff]
    %v4879 = vld [vmem:[%s20 + $0x10] sm:$0xff]
    %v4880 = vld [vmem:[%s20 + $0x18] sm:$0xff]
    %v4881 = vld [vmem:[#allocation20] sm:$0x1]
    %v4883 = vlaneseq
    %v4884 = vshrl.u32 %v4883, 7
    %v4885 = vsub.s32 0, %v4884
    %v4886 = vrot.slane %v4881, %v4885
    %v4889 = vsel %vm219, %v4875, 0
    %v4892 = vsel %vm219, %v4876, 0
    %4894 = vmatprep.subr.mxu0 0.0
    %4895 = vmatpush1.msra.mxu0 %v4877
    %4896 = vmatprep.subr.mxu0 0.0
    %4897 = vmatpush1.msra.mxu0 %v4878
    %4898 = vmatprep.subr.mxu0 0.0
    %4899 = vmatpush1.msra.mxu0 %v4879
    %4900 = vmatprep.subr.mxu0 0.0
    %4901 = vmatpush1.msra.mxu0 %v4880
    %4902 = vmatprep.subr.mxu0 0.0
    %4903 = vmatpush1.msra.mxu0 0.0
    %4904 = vmatprep.subr.mxu0 0.0
    %4905 = vmatpush1.msra.mxu0 0.0
    %4906 = vmatprep.subr.mxu0 0.0
    %4907 = vmatpush1.msra.mxu0 0.0
    %4908 = vmatprep.subr.mxu0 0.0
    %4909 = vmatpush1.msra.mxu0 0.0
    %4910 = vmatprep.subr.mxu0 0.0
    %4911 = vmatpush1.msra.mxu0 0.0
    %4912 = vmatprep.subr.mxu0 0.0
    %4913 = vmatpush1.msra.mxu0 0.0
    %4914 = vmatprep.subr.mxu0 0.0
    %4915 = vmatpush1.msra.mxu0 0.0
    %4916 = vmatprep.subr.mxu0 0.0
    %4917 = vmatpush1.msra.mxu0 0.0
    %4918 = vmatprep.subr.mxu0 0.0
    %4919 = vmatpush1.msra.mxu0 0.0
    %4920 = vmatprep.subr.mxu0 0.0
    %4921 = vmatpush1.msra.mxu0 0.0
    %4922 = vmatprep.subr.mxu0 0.0
    %4923 = vmatpush1.msra.mxu0 0.0
    %4924 = vmatprep.subr.mxu0 0.0
    %4925 = vmatpush1.msra.mxu0 0.0
    %4926 = vmatprep.subr.mxu0 0.0
    %4927 = vmatpush1.msra.mxu0 0.0
    %4928 = vmatprep.subr.mxu0 0.0
    %4929 = vmatpush1.msra.mxu0 0.0
    %4930 = vmatprep.subr.mxu0 0.0
    %4931 = vmatpush1.msra.mxu0 0.0
    %4932 = vmatprep.subr.mxu0 0.0
    %4933 = vmatpush1.msra.mxu0 0.0
    %4934 = vmatprep.subr.mxu0 0.0
    %4935 = vmatpush1.msra.mxu0 0.0
    %4936 = vmatprep.subr.mxu0 0.0
    %4937 = vmatpush1.msra.mxu0 0.0
    %4938 = vmatprep.subr.mxu0 0.0
    %4939 = vmatpush1.msra.mxu0 0.0
    %4940 = vmatprep.subr.mxu0 0.0
    %4941 = vmatpush1.msra.mxu0 0.0
    %4942 = vmatprep.subr.mxu0 0.0
    %4943 = vmatpush1.msra.mxu0 0.0
    %4944 = vmatprep.subr.mxu0 0.0
    %4945 = vmatpush1.msra.mxu0 0.0
    %4946 = vmatprep.subr.mxu0 0.0
    %4947 = vmatpush1.msra.mxu0 0.0
    %4948 = vmatprep.subr.mxu0 0.0
    %4949 = vmatpush1.msra.mxu0 0.0
    %4950 = vmatprep.subr.mxu0 0.0
    %4951 = vmatpush1.msra.mxu0 0.0
    %4952 = vmatprep.subr.mxu0 0.0
    %4953 = vmatpush1.msra.mxu0 0.0
    %4954 = vmatprep.subr.mxu0 0.0
    %4955 = vmatpush1.msra.mxu0 0.0
    %4956 = vmatprep.subr.mxu0 0.0
    %4957 = vmatpush1.msra.mxu0 0.0
    %4958 = vmatprep.mubr.f32.mxu0 0.0
    %4959 = vmatmul.mubr.f32.gmra.mrb[0].mxu0 %v4889
    %v4960 = vpop.f32.mrb[0].mxu0
    %v4961 = vadd.f32 %v4886, %v4960
    %v4962 = vpop.f32.mrb[0].mxu0
    %4963 = vmatprep.mubr.f32.mxu0 0.0
    %4964 = vmatmul.mubr.f32.gmra.mrb[0].mxu0 %v4892
    %v4965 = vpop.f32.mrb[0].mxu0
    %v4966 = vadd.f32 %v4886, %v4965
    %v4967 = vpop.f32.mrb[0].mxu0
    %4968 = vdwg.mxu0
    %v4969 = vadd.f32 %v4961, %v4721
    %v4970 = vadd.f32 %v4966, %v4722
    %4971 = vst.msk [vmem:[#allocation22] sm:$0xff] %vm219, %v4969
    %4972 = vst.msk [vmem:[#allocation22 + $0x8] sm:$0xff] %vm219, %v4970
    // Predicated region
    $region138: #{multi_conv_attention_forward.1} parent=1 // pred_check
      _
    $region139: #{multi_conv_attention_forward.1} parent=1 // pred_check_branch
      %4974 = sbr.rel (0) target = $region141
    $region140: #{multi_conv_attention_forward.1} parent=1 // pred_region
      %s4976 = ssub.s32 256, 256
      %4977 = vsyncadd [#allocation4], %s4976
      %s4978 = sshll.u32 [#allocation22], 4
      %s4979 = int_to_ptr.vmem [resolvable:$true] %s4978
      %4984 = dma.vmem_to_hbm [thread:$0]  %s4979, 256, %s22, [#allocation4], 128, 128, 8
    $region141: #{multi_conv_attention_forward.1} parent=1 // pred_fallthru
      _
    // Predicated region
    $region142: #{multi_conv_attention_forward.1} parent=1 // pred_check
      _
    $region143: #{multi_conv_attention_forward.1} parent=1 // pred_check_branch
      %4986 = sbr.rel (0) target = $region145
    $region144: #{multi_conv_attention_forward.1} parent=1 // pred_region
      %4987 = dma.done [#allocation4], 256
    $region145: #{multi_conv_attention_forward.1} parent=1 // pred_fallthru
      _
    %4988 = vsyncpa [#allocation3], 1
    %4989 = vsyncpa [#allocation6], 1
    %4990 = vsyncpa [#allocation9], 1
    %4991 = vsyncpa [#allocation12], 1
    %4992 = vsyncpa [#allocation15], 1
    %4993 = vsyncpa [#allocation18], 1
    %4994 = vsyncpa [#allocation21], 1
    %4995 = vsyncpa [#allocation4], 1

</llo_original>
